<compile_context>
chip_gen: v7x
topology: tpu7x:2x2x1
jax: 0.10.0
libtpu: 0.0.40
codegen_flags: <defaults>
</compile_context>

<pallas_src>
import jax
import jax.numpy as jnp
from jax.experimental import pallas as pl
from jax.experimental.pallas import tpu as pltpu


# PyTorch LSTM gate order along the 4H axis is [i, f, g, o]; the kernel packs
# gates as [i, f, o, g] so one sigmoid covers the first 3*Hp lanes.
_GATE_PERM = (0, 1, 3, 2)


def _make_bilstm_kernel(fuse):
    """Builds the fused bidirectional-LSTM kernel.

    fuse=True : one block-diagonal (2Hp, 8Hp) recurrent weight -> a single
                K=256 MXU pass per step (v6e / v7x, 2x256x256 MXU).
    fuse=False: two separate (Hp, 4Hp) recurrent weights -> two independent
                K=128 dots per step (v5e, 4x128x128 MXUs / unknown chips).
    """

    def body(x_ref, wihc_ref, whh_refs, b_ref, out_ref, xp_ref):
        TB, H8 = xp_ref.shape
        H4 = H8 // 2
        Hp = H4 // 4
        B = out_ref.shape[0]            # sublane-padded batch (multiple of 8)
        T = TB // B

        # One wide MXU pass: input projection + combined bias for both
        # directions, stored once into the flat (T*B, 8*Hp) f32 scratch.
        xp_ref[...] = jnp.dot(x_ref[...], wihc_ref[...],
                              preferred_element_type=jnp.float32) + b_ref[...]

        def row_fwd(t):                  # forward walks t = 0 .. T-1
            r = t * B
            if not isinstance(r, int):
                r = pl.multiple_of(r, B)
            return xp_ref[pl.ds(r, B), :H4]

        def row_bwd(t):                  # backward walks t = T-1 .. 0
            r = (T - 1 - t) * B
            if not isinstance(r, int):
                r = pl.multiple_of(r, B)
            return xp_ref[pl.ds(r, B), H4:]

        def gate_update(gates, c):
            # Lane order [i, f, o, g]: one sigmoid over 3*Hp contiguous lanes,
            # one tanh over Hp -> 3 EUP pushes per direction-step.
            sig = jax.nn.sigmoid(gates[:, :3 * Hp])
            g_g = jnp.tanh(gates[:, 3 * Hp:])
            i_g = sig[:, :Hp]
            f_g = sig[:, Hp:2 * Hp]
            o_g = sig[:, 2 * Hp:3 * Hp]
            c_new = f_g * c + i_g * g_g
            h_new = o_g * jnp.tanh(c_new)
            return h_new, c_new

        # Peel t = 0: h = c = 0 -> the recurrent contribution is zero and the
        # gates come straight from the input projection.
        zc = jnp.zeros((B, Hp), jnp.float32)
        h_f, c_f = gate_update(row_fwd(0), zc)
        h_b, c_b = gate_update(row_bwd(0), zc)

        if fuse:
            whh = whh_refs[0][...]       # (2*Hp, 8*Hp) block-diagonal, bf16

            def step(t, carry):
                h_f, c_f, h_b, c_b = carry
                lhs = jnp.concatenate([h_f, h_b], axis=1).astype(jnp.bfloat16)
                rg = jnp.dot(lhs, whh, preferred_element_type=jnp.float32)
                h_f, c_f = gate_update(row_fwd(t) + rg[:, :H4], c_f)
                h_b, c_b = gate_update(row_bwd(t) + rg[:, H4:], c_b)
                return h_f, c_f, h_b, c_b
        else:
            whh_f = whh_refs[0][...]     # (Hp, 4*Hp) bf16
            whh_b = whh_refs[1][...]

            def step(t, carry):
                h_f, c_f, h_b, c_b = carry
                # Two independent recurrent dots; they can pipeline against
                # each other / land on different 128x128 MXUs.
                rg_f = jnp.dot(h_f.astype(jnp.bfloat16), whh_f,
                               preferred_element_type=jnp.float32)
                rg_b = jnp.dot(h_b.astype(jnp.bfloat16), whh_b,
                               preferred_element_type=jnp.float32)
                h_f, c_f = gate_update(row_fwd(t) + rg_f, c_f)
                h_b, c_b = gate_update(row_bwd(t) + rg_b, c_b)
                return h_f, c_f, h_b, c_b

        # Fully unrolled short time loop (T is small) so the LLO scheduler can
        # overlap MXU issue / pop / EUP work across steps.
        h_f, c_f, h_b, c_b = jax.lax.fori_loop(
            1, T, step, (h_f, c_f, h_b, c_b), unroll=True)

        # Dense (B, 2*Hp) output: fwd in lanes [0, Hp), bwd in [Hp, 2*Hp);
        # both are whole-vreg unmasked stores.
        out_ref[:, :Hp] = h_f.astype(out_ref.dtype)
        out_ref[:, Hp:] = h_b.astype(out_ref.dtype)

    if fuse:
        def kernel(x_ref, wihc_ref, whhc_ref, b_ref, out_ref, xp_ref):
            body(x_ref, wihc_ref, (whhc_ref,), b_ref, out_ref, xp_ref)
    else:
        def kernel(x_ref, wihc_ref, whhf_ref, whhb_ref, b_ref, out_ref, xp_ref):
            body(x_ref, wihc_ref, (whhf_ref, whhb_ref), b_ref, out_ref, xp_ref)
    return kernel


def _pack_gate_cols(w_t, H, Hp):
    """(K, 4H) in PyTorch [i,f,g,o] order -> (K, 4Hp) in [i,f,o,g] lane order.

    Gate slot g occupies lanes [g*Hp, g*Hp+H); pad lanes are exactly zero
    (required so pad lanes of h/c stay zero through the recurrence)."""
    K = w_t.shape[0]
    out = jnp.zeros((K, 4 * Hp), w_t.dtype)
    for dst, src in enumerate(_GATE_PERM):
        out = out.at[:, dst * Hp:dst * Hp + H].set(w_t[:, src * H:(src + 1) * H])
    return out


def _pack_gate_vec(bv, H, Hp):
    """(4H,) in PyTorch gate order -> (4Hp,) in [i,f,o,g] order, zero pad lanes."""
    out = jnp.zeros((4 * Hp,), bv.dtype)
    for dst, src in enumerate(_GATE_PERM):
        out = out.at[dst * Hp:dst * Hp + H].set(bv[src * H:(src + 1) * H])
    return out


def _detect_fused_recurrent():
    # K=256 block-diagonal recurrent dot only pays off on 256-wide MXUs
    # (v6e / v7x); v5e and older/unknown chips keep two K=128 dots.
    try:
        kind = jax.devices()[0].device_kind.lower()
    except Exception:
        return False
    return any(tag in kind for tag in ("v6", "v7", "tpu7"))


_FUSE_RECURRENT = _detect_fused_recurrent()


@jax.jit
def feature_extractor(x, w_ih, w_hh, b):
    """x: (B, T, E); w_ih: (2, 4H, E); w_hh: (2, 4H, H); b: (2, 4H) = b_ih + b_hh.

    Returns feat: (B, 2H) == torch.cat((hn[0], hn[1]), dim=1).
    """
    B, T, E = x.shape
    H = w_hh.shape[-1]
    Hp = ((H + 127) // 128) * 128       # lane-aligned per-gate width
    Bp = ((B + 7) // 8) * 8             # sublane-aligned batch

    # Time-major, batch zero-padded to a full sublane group, flattened, bf16.
    x_t = jnp.transpose(x, (1, 0, 2)).astype(jnp.float32)        # (T, B, E)
    x_t = jnp.pad(x_t, ((0, 0), (0, Bp - B), (0, 0)))            # (T, Bp, E)
    x2d = x_t.reshape(T * Bp, E).astype(jnp.bfloat16)

    # Input->gate weights, both directions side by side: (E, 8*Hp) bf16.
    wih_f = _pack_gate_cols(w_ih[0].T.astype(jnp.float32), H, Hp)
    wih_b = _pack_gate_cols(w_ih[1].T.astype(jnp.float32), H, Hp)
    wih_cat = jnp.concatenate([wih_f, wih_b], axis=1).astype(jnp.bfloat16)

    # Hidden->gate weights, lane-aligned columns + zero row padding.
    def pad_whh(w):                                              # (4H, H) -> (Hp, 4Hp)
        w_t = _pack_gate_cols(w.T.astype(jnp.float32), H, Hp)    # (H, 4Hp)
        return jnp.zeros((Hp, 4 * Hp), jnp.float32).at[:H].set(w_t)

    whh_f = pad_whh(w_hh[0])
    whh_b = pad_whh(w_hh[1])

    # Combined bias (b_ih + b_hh), zero in pad lanes: (1, 8*Hp) f32.
    b_cat = jnp.concatenate([_pack_gate_vec(b[0].astype(jnp.float32), H, Hp),
                             _pack_gate_vec(b[1].astype(jnp.float32), H, Hp)])[None, :]

    kernel = _make_bilstm_kernel(_FUSE_RECURRENT)

    in_specs = [
        pl.BlockSpec((T * Bp, E), lambda i: (0, 0)),
        pl.BlockSpec((E, 8 * Hp), lambda i: (0, 0)),
    ]
    if _FUSE_RECURRENT:
        # Block-diagonal (2*Hp, 8*Hp): rows [0,Hp) -> fwd gate lanes, rows
        # [Hp,2Hp) -> bwd gate lanes; one K=256 MXU pass per recurrent step.
        whh_cat = jnp.zeros((2 * Hp, 8 * Hp), jnp.float32)
        whh_cat = whh_cat.at[:Hp, :4 * Hp].set(whh_f)
        whh_cat = whh_cat.at[Hp:, 4 * Hp:].set(whh_b)
        whh_args = (whh_cat.astype(jnp.bfloat16),)
        in_specs.append(pl.BlockSpec((2 * Hp, 8 * Hp), lambda i: (0, 0)))
    else:
        whh_args = (whh_f.astype(jnp.bfloat16), whh_b.astype(jnp.bfloat16))
        in_specs.append(pl.BlockSpec((Hp, 4 * Hp), lambda i: (0, 0)))
        in_specs.append(pl.BlockSpec((Hp, 4 * Hp), lambda i: (0, 0)))
    in_specs.append(pl.BlockSpec((1, 8 * Hp), lambda i: (0, 0)))

    hn = pl.pallas_call(
        kernel,
        out_shape=jax.ShapeDtypeStruct((Bp, 2 * Hp), jnp.float32),
        grid=(1,),
        in_specs=in_specs,
        out_specs=pl.BlockSpec((Bp, 2 * Hp), lambda i: (0, 0)),
        scratch_shapes=[pltpu.VMEM((T * Bp, 8 * Hp), jnp.float32)],
        compiler_params=pltpu.CompilerParams(
            dimension_semantics=("arbitrary",)),
    )(x2d, wih_cat, *whh_args, b_cat)

    # Strip batch / lane padding; torch.cat((hn[0], hn[1]), dim=1).
    return jnp.concatenate([hn[:B, :H], hn[:B, Hp:Hp + H]], axis=1)   # (B, 2H)


def _lstm_reference(x, w_ih, w_hh, b):
    """Pure-JAX f32 reference matching nn.LSTM(bidirectional=True) semantics."""
    B, T, E = x.shape
    H = w_hh.shape[-1]
    x_tbe = jnp.transpose(x, (1, 0, 2))

    def run_dir(x_seq, wih, whh, bb):
        def step(carry, xt):
            h, c = carry
            gates = xt @ wih.T + h @ whh.T + bb
            i = jax.nn.sigmoid(gates[:, 0:H])
            f = jax.nn.sigmoid(gates[:, H:2 * H])
            g = jnp.tanh(gates[:, 2 * H:3 * H])
            o = jax.nn.sigmoid(gates[:, 3 * H:4 * H])
            c = f * c + i * g
            h = o * jnp.tanh(c)
            return (h, c), None
        init = (jnp.zeros((B, H), jnp.float32), jnp.zeros((B, H), jnp.float32))
        (h, _), _ = jax.lax.scan(step, init, x_seq)
        return h

    h_fwd = run_dir(x_tbe, w_ih[0], w_hh[0], b[0])
    h_bwd = run_dir(x_tbe[::-1], w_ih[1], w_hh[1], b[1])
    return jnp.concatenate([h_fwd, h_bwd], axis=1)


if __name__ == "__main__":
    # Small shapes consistent with the module: batch=2, seq=8, embed=32, hidden=32.
    B, T, E, H = 2, 8, 32, 32

    key = jax.random.PRNGKey(0)
    kx, kwih, kwhh, kbih, kbhh = jax.random.split(key, 5)

    # Deterministic init mimicking PyTorch LSTM: U(-1/sqrt(H), 1/sqrt(H)).
    k = 1.0 / jnp.sqrt(jnp.float32(H))
    x = jax.random.normal(kx, (B, T, E), dtype=jnp.float32)
    w_ih = jax.random.uniform(kwih, (2, 4 * H, E), minval=-k, maxval=k,
                              dtype=jnp.float32)
    w_hh = jax.random.uniform(kwhh, (2, 4 * H, H), minval=-k, maxval=k,
                              dtype=jnp.float32)
    b_ih = jax.random.uniform(kbih, (2, 4 * H), minval=-k, maxval=k,
                              dtype=jnp.float32)
    b_hh = jax.random.uniform(kbhh, (2, 4 * H), minval=-k, maxval=k,
                              dtype=jnp.float32)
    b = b_ih + b_hh  # PyTorch adds both biases; combine once.

    feat = jax.block_until_ready(feature_extractor(x, w_ih, w_hh, b))
    feat_ref = jax.block_until_ready(_lstm_reference(x, w_ih, w_hh, b))

    assert feat.shape == (B, 2 * H), feat.shape
    max_err = float(jnp.max(jnp.abs(feat - feat_ref)))
    # Kernel uses bf16 matmuls with f32 accumulation; reference is pure f32.
    assert max_err < 2e-2, max_err

    print("KERNEL_OK")
</pallas_src>

<mosaic_0001>
module attributes {stable_mosaic.version = 11 : i64} {
  func.func @kernel(%arg0: i32, %arg1: memref<64x32xbf16, #tpu.memory_space<vmem>>, %arg2: memref<32x1024xbf16, #tpu.memory_space<vmem>>, %arg3: memref<128x512xbf16, #tpu.memory_space<vmem>>, %arg4: memref<128x512xbf16, #tpu.memory_space<vmem>>, %arg5: memref<1x1024xf32, #tpu.memory_space<vmem>>, %arg6: memref<8x256xf32, #tpu.memory_space<vmem>>, %arg7: memref<64x1024xf32, #tpu.memory_space<vmem>>) attributes {dimension_semantics = [#tpu.dimension_semantics<arbitrary>], iteration_bounds = array<i64: 1>, scalar_prefetch = 0 : i64, scratch_operands = 1 : i64, tpu.core_type = #tpu.core_type<tc>, window_params = [{pipeline_mode = #tpu.pipeline_mode<synchronous>, transform_indices = @transform_0, window_bounds = array<i64: 64, 32>}, {pipeline_mode = #tpu.pipeline_mode<synchronous>, transform_indices = @transform_1, window_bounds = array<i64: 32, 1024>}, {pipeline_mode = #tpu.pipeline_mode<synchronous>, transform_indices = @transform_2, window_bounds = array<i64: 128, 512>}, {pipeline_mode = #tpu.pipeline_mode<synchronous>, transform_indices = @transform_3, window_bounds = array<i64: 128, 512>}, {pipeline_mode = #tpu.pipeline_mode<synchronous>, transform_indices = @transform_4, window_bounds = array<i64: 1, 1024>}, {pipeline_mode = #tpu.pipeline_mode<synchronous>, transform_indices = @transform_5, window_bounds = array<i64: 8, 256>}]} {
    %c0 = arith.constant 0 : index
    %c0_0 = arith.constant 0 : index
    %0 = vector.load %arg1[%c0, %c0_0] : memref<64x32xbf16, #tpu.memory_space<vmem>>, vector<64x32xbf16>
    %c0_1 = arith.constant 0 : index
    %c0_2 = arith.constant 0 : index
    %1 = vector.load %arg2[%c0_1, %c0_2] : memref<32x1024xbf16, #tpu.memory_space<vmem>>, vector<32x1024xbf16>
    %cst = arith.constant dense<0.000000e+00> : vector<64x1024xf32>
    %2 = tpu.matmul %0, %1, %cst {dimension_numbers = #tpu.dot_dimension_numbers<[1], [0], [0], [1], [0, 0, 1, 1], [], []>} : vector<64x32xbf16>, vector<32x1024xbf16>, vector<64x1024xf32> -> vector<64x1024xf32>
    %c0_3 = arith.constant 0 : index
    %c0_4 = arith.constant 0 : index
    %3 = vector.load %arg5[%c0_3, %c0_4] : memref<1x1024xf32, #tpu.memory_space<vmem>>, vector<1x1024xf32>
    %4 = vector.broadcast %3 : vector<1x1024xf32> to vector<64x1024xf32>
    %5 = arith.addf %2, %4 : vector<64x1024xf32>
    %c0_5 = arith.constant 0 : index
    %c0_6 = arith.constant 0 : index
    %6 = vector.load %arg7[%c0_5, %c0_6] : memref<64x1024xf32, #tpu.memory_space<vmem>>, vector<64x1024xf32>
    tpu.vector_store %arg7[%c0_5, %c0_6], %5 {strides = array<i32>} : memref<64x1024xf32, #tpu.memory_space<vmem>>, vector<64x1024xf32>,
    %cst_7 = arith.constant 0.000000e+00 : f32
    %7 = vector.broadcast %cst_7 : f32 to vector<8x128xf32>
    %c0_8 = arith.constant 0 : index
    %c0_9 = arith.constant 0 : index
    %8 = vector.load %arg7[%c0_8, %c0_9] : memref<64x1024xf32, #tpu.memory_space<vmem>>, vector<8x512xf32>
    %9 = vector.extract_strided_slice %8 {offsets = [0, 0], sizes = [8, 384], strides = [1, 1]} : vector<8x512xf32> to vector<8x384xf32>
    %10 = arith.negf %9 : vector<8x384xf32>
    %11 = math.exp %10 : vector<8x384xf32>
    %cst_10 = arith.constant 1.000000e+00 : f32
    %12 = vector.broadcast %cst_10 : f32 to vector<8x384xf32>
    %13 = arith.addf %12, %11 : vector<8x384xf32>
    %14 = arith.divf %12, %13 : vector<8x384xf32>
    %15 = vector.extract_strided_slice %8 {offsets = [0, 384], sizes = [8, 128], strides = [1, 1]} : vector<8x512xf32> to vector<8x128xf32>
    %16 = math.tanh %15 : vector<8x128xf32>
    %17 = vector.extract_strided_slice %14 {offsets = [0, 0], sizes = [8, 128], strides = [1, 1]} : vector<8x384xf32> to vector<8x128xf32>
    %18 = vector.extract_strided_slice %14 {offsets = [0, 128], sizes = [8, 128], strides = [1, 1]} : vector<8x384xf32> to vector<8x128xf32>
    %19 = vector.extract_strided_slice %14 {offsets = [0, 256], sizes = [8, 128], strides = [1, 1]} : vector<8x384xf32> to vector<8x128xf32>
    %20 = arith.mulf %18, %7 : vector<8x128xf32>
    %21 = arith.mulf %17, %16 : vector<8x128xf32>
    %22 = arith.addf %20, %21 : vector<8x128xf32>
    %23 = math.tanh %22 : vector<8x128xf32>
    %24 = arith.mulf %19, %23 : vector<8x128xf32>
    %c56 = arith.constant 56 : index
    %c512 = arith.constant 512 : index
    %25 = vector.load %arg7[%c56, %c512] : memref<64x1024xf32, #tpu.memory_space<vmem>>, vector<8x512xf32>
    %26 = vector.extract_strided_slice %25 {offsets = [0, 0], sizes = [8, 384], strides = [1, 1]} : vector<8x512xf32> to vector<8x384xf32>
    %27 = arith.negf %26 : vector<8x384xf32>
    %28 = math.exp %27 : vector<8x384xf32>
    %cst_11 = arith.constant 1.000000e+00 : f32
    %29 = vector.broadcast %cst_11 : f32 to vector<8x384xf32>
    %30 = arith.addf %29, %28 : vector<8x384xf32>
    %31 = arith.divf %29, %30 : vector<8x384xf32>
    %32 = vector.extract_strided_slice %25 {offsets = [0, 384], sizes = [8, 128], strides = [1, 1]} : vector<8x512xf32> to vector<8x128xf32>
    %33 = math.tanh %32 : vector<8x128xf32>
    %34 = vector.extract_strided_slice %31 {offsets = [0, 0], sizes = [8, 128], strides = [1, 1]} : vector<8x384xf32> to vector<8x128xf32>
    %35 = vector.extract_strided_slice %31 {offsets = [0, 128], sizes = [8, 128], strides = [1, 1]} : vector<8x384xf32> to vector<8x128xf32>
    %36 = vector.extract_strided_slice %31 {offsets = [0, 256], sizes = [8, 128], strides = [1, 1]} : vector<8x384xf32> to vector<8x128xf32>
    %37 = arith.mulf %35, %7 : vector<8x128xf32>
    %38 = arith.mulf %34, %33 : vector<8x128xf32>
    %39 = arith.addf %37, %38 : vector<8x128xf32>
    %40 = math.tanh %39 : vector<8x128xf32>
    %41 = arith.mulf %36, %40 : vector<8x128xf32>
    %c0_12 = arith.constant 0 : index
    %c0_13 = arith.constant 0 : index
    %42 = vector.load %arg3[%c0_12, %c0_13] : memref<128x512xbf16, #tpu.memory_space<vmem>>, vector<128x512xbf16>
    %c0_14 = arith.constant 0 : index
    %c0_15 = arith.constant 0 : index
    %43 = vector.load %arg4[%c0_14, %c0_15] : memref<128x512xbf16, #tpu.memory_space<vmem>>, vector<128x512xbf16>
    %c1_i32 = arith.constant 1 : i32
    %44 = arith.truncf %24 : vector<8x128xf32> to vector<8x128xbf16>
    %cst_16 = arith.constant dense<0.000000e+00> : vector<8x512xf32>
    %45 = tpu.matmul %44, %42, %cst_16 {dimension_numbers = #tpu.dot_dimension_numbers<[1], [0], [0], [1], [0, 0, 1, 1], [], []>} : vector<8x128xbf16>, vector<128x512xbf16>, vector<8x512xf32> -> vector<8x512xf32>
    %46 = arith.truncf %41 : vector<8x128xf32> to vector<8x128xbf16>
    %cst_17 = arith.constant dense<0.000000e+00> : vector<8x512xf32>
    %47 = tpu.matmul %46, %43, %cst_17 {dimension_numbers = #tpu.dot_dimension_numbers<[1], [0], [0], [1], [0, 0, 1, 1], [], []>} : vector<8x128xbf16>, vector<128x512xbf16>, vector<8x512xf32> -> vector<8x512xf32>
    %c8_i32 = arith.constant 8 : i32
    %48 = arith.muli %c1_i32, %c8_i32 : i32
    %49 = tpu.assume_multiple %48, 8 : i32
    %50 = arith.index_cast %49 : i32 to index
    %c0_18 = arith.constant 0 : index
    %51 = vector.load %arg7[%50, %c0_18] : memref<64x1024xf32, #tpu.memory_space<vmem>>, vector<8x512xf32>
    %52 = arith.addf %51, %45 : vector<8x512xf32>
    %53 = vector.extract_strided_slice %52 {offsets = [0, 0], sizes = [8, 384], strides = [1, 1]} : vector<8x512xf32> to vector<8x384xf32>
    %54 = arith.negf %53 : vector<8x384xf32>
    %55 = math.exp %54 : vector<8x384xf32>
    %cst_19 = arith.constant 1.000000e+00 : f32
    %56 = vector.broadcast %cst_19 : f32 to vector<8x384xf32>
    %57 = arith.addf %56, %55 : vector<8x384xf32>
    %58 = arith.divf %56, %57 : vector<8x384xf32>
    %59 = vector.extract_strided_slice %52 {offsets = [0, 384], sizes = [8, 128], strides = [1, 1]} : vector<8x512xf32> to vector<8x128xf32>
    %60 = math.tanh %59 : vector<8x128xf32>
    %61 = vector.extract_strided_slice %58 {offsets = [0, 0], sizes = [8, 128], strides = [1, 1]} : vector<8x384xf32> to vector<8x128xf32>
    %62 = vector.extract_strided_slice %58 {offsets = [0, 128], sizes = [8, 128], strides = [1, 1]} : vector<8x384xf32> to vector<8x128xf32>
    %63 = vector.extract_strided_slice %58 {offsets = [0, 256], sizes = [8, 128], strides = [1, 1]} : vector<8x384xf32> to vector<8x128xf32>
    %64 = arith.mulf %62, %22 : vector<8x128xf32>
    %65 = arith.mulf %61, %60 : vector<8x128xf32>
    %66 = arith.addf %64, %65 : vector<8x128xf32>
    %67 = math.tanh %66 : vector<8x128xf32>
    %68 = arith.mulf %63, %67 : vector<8x128xf32>
    %c7_i32 = arith.constant 7 : i32
    %69 = arith.subi %c7_i32, %c1_i32 : i32
    %c8_i32_20 = arith.constant 8 : i32
    %70 = arith.muli %69, %c8_i32_20 : i32
    %71 = tpu.assume_multiple %70, 8 : i32
    %72 = arith.index_cast %71 : i32 to index
    %c512_21 = arith.constant 512 : index
    %73 = vector.load %arg7[%72, %c512_21] : memref<64x1024xf32, #tpu.memory_space<vmem>>, vector<8x512xf32>
    %74 = arith.addf %73, %47 : vector<8x512xf32>
    %75 = vector.extract_strided_slice %74 {offsets = [0, 0], sizes = [8, 384], strides = [1, 1]} : vector<8x512xf32> to vector<8x384xf32>
    %76 = arith.negf %75 : vector<8x384xf32>
    %77 = math.exp %76 : vector<8x384xf32>
    %cst_22 = arith.constant 1.000000e+00 : f32
    %78 = vector.broadcast %cst_22 : f32 to vector<8x384xf32>
    %79 = arith.addf %78, %77 : vector<8x384xf32>
    %80 = arith.divf %78, %79 : vector<8x384xf32>
    %81 = vector.extract_strided_slice %74 {offsets = [0, 384], sizes = [8, 128], strides = [1, 1]} : vector<8x512xf32> to vector<8x128xf32>
    %82 = math.tanh %81 : vector<8x128xf32>
    %83 = vector.extract_strided_slice %80 {offsets = [0, 0], sizes = [8, 128], strides = [1, 1]} : vector<8x384xf32> to vector<8x128xf32>
    %84 = vector.extract_strided_slice %80 {offsets = [0, 128], sizes = [8, 128], strides = [1, 1]} : vector<8x384xf32> to vector<8x128xf32>
    %85 = vector.extract_strided_slice %80 {offsets = [0, 256], sizes = [8, 128], strides = [1, 1]} : vector<8x384xf32> to vector<8x128xf32>
    %86 = arith.mulf %84, %39 : vector<8x128xf32>
    %87 = arith.mulf %83, %82 : vector<8x128xf32>
    %88 = arith.addf %86, %87 : vector<8x128xf32>
    %89 = math.tanh %88 : vector<8x128xf32>
    %90 = arith.mulf %85, %89 : vector<8x128xf32>
    %c2_i32 = arith.constant 2 : i32
    %91 = arith.truncf %68 : vector<8x128xf32> to vector<8x128xbf16>
    %cst_23 = arith.constant dense<0.000000e+00> : vector<8x512xf32>
    %92 = tpu.matmul %91, %42, %cst_23 {dimension_numbers = #tpu.dot_dimension_numbers<[1], [0], [0], [1], [0, 0, 1, 1], [], []>} : vector<8x128xbf16>, vector<128x512xbf16>, vector<8x512xf32> -> vector<8x512xf32>
    %93 = arith.truncf %90 : vector<8x128xf32> to vector<8x128xbf16>
    %cst_24 = arith.constant dense<0.000000e+00> : vector<8x512xf32>
    %94 = tpu.matmul %93, %43, %cst_24 {dimension_numbers = #tpu.dot_dimension_numbers<[1], [0], [0], [1], [0, 0, 1, 1], [], []>} : vector<8x128xbf16>, vector<128x512xbf16>, vector<8x512xf32> -> vector<8x512xf32>
    %c8_i32_25 = arith.constant 8 : i32
    %95 = arith.muli %c2_i32, %c8_i32_25 : i32
    %96 = tpu.assume_multiple %95, 8 : i32
    %97 = arith.index_cast %96 : i32 to index
    %c0_26 = arith.constant 0 : index
    %98 = vector.load %arg7[%97, %c0_26] : memref<64x1024xf32, #tpu.memory_space<vmem>>, vector<8x512xf32>
    %99 = arith.addf %98, %92 : vector<8x512xf32>
    %100 = vector.extract_strided_slice %99 {offsets = [0, 0], sizes = [8, 384], strides = [1, 1]} : vector<8x512xf32> to vector<8x384xf32>
    %101 = arith.negf %100 : vector<8x384xf32>
    %102 = math.exp %101 : vector<8x384xf32>
    %cst_27 = arith.constant 1.000000e+00 : f32
    %103 = vector.broadcast %cst_27 : f32 to vector<8x384xf32>
    %104 = arith.addf %103, %102 : vector<8x384xf32>
    %105 = arith.divf %103, %104 : vector<8x384xf32>
    %106 = vector.extract_strided_slice %99 {offsets = [0, 384], sizes = [8, 128], strides = [1, 1]} : vector<8x512xf32> to vector<8x128xf32>
    %107 = math.tanh %106 : vector<8x128xf32>
    %108 = vector.extract_strided_slice %105 {offsets = [0, 0], sizes = [8, 128], strides = [1, 1]} : vector<8x384xf32> to vector<8x128xf32>
    %109 = vector.extract_strided_slice %105 {offsets = [0, 128], sizes = [8, 128], strides = [1, 1]} : vector<8x384xf32> to vector<8x128xf32>
    %110 = vector.extract_strided_slice %105 {offsets = [0, 256], sizes = [8, 128], strides = [1, 1]} : vector<8x384xf32> to vector<8x128xf32>
    %111 = arith.mulf %109, %66 : vector<8x128xf32>
    %112 = arith.mulf %108, %107 : vector<8x128xf32>
    %113 = arith.addf %111, %112 : vector<8x128xf32>
    %114 = math.tanh %113 : vector<8x128xf32>
    %115 = arith.mulf %110, %114 : vector<8x128xf32>
    %c7_i32_28 = arith.constant 7 : i32
    %116 = arith.subi %c7_i32_28, %c2_i32 : i32
    %c8_i32_29 = arith.constant 8 : i32
    %117 = arith.muli %116, %c8_i32_29 : i32
    %118 = tpu.assume_multiple %117, 8 : i32
    %119 = arith.index_cast %118 : i32 to index
    %c512_30 = arith.constant 512 : index
    %120 = vector.load %arg7[%119, %c512_30] : memref<64x1024xf32, #tpu.memory_space<vmem>>, vector<8x512xf32>
    %121 = arith.addf %120, %94 : vector<8x512xf32>
    %122 = vector.extract_strided_slice %121 {offsets = [0, 0], sizes = [8, 384], strides = [1, 1]} : vector<8x512xf32> to vector<8x384xf32>
    %123 = arith.negf %122 : vector<8x384xf32>
    %124 = math.exp %123 : vector<8x384xf32>
    %cst_31 = arith.constant 1.000000e+00 : f32
    %125 = vector.broadcast %cst_31 : f32 to vector<8x384xf32>
    %126 = arith.addf %125, %124 : vector<8x384xf32>
    %127 = arith.divf %125, %126 : vector<8x384xf32>
    %128 = vector.extract_strided_slice %121 {offsets = [0, 384], sizes = [8, 128], strides = [1, 1]} : vector<8x512xf32> to vector<8x128xf32>
    %129 = math.tanh %128 : vector<8x128xf32>
    %130 = vector.extract_strided_slice %127 {offsets = [0, 0], sizes = [8, 128], strides = [1, 1]} : vector<8x384xf32> to vector<8x128xf32>
    %131 = vector.extract_strided_slice %127 {offsets = [0, 128], sizes = [8, 128], strides = [1, 1]} : vector<8x384xf32> to vector<8x128xf32>
    %132 = vector.extract_strided_slice %127 {offsets = [0, 256], sizes = [8, 128], strides = [1, 1]} : vector<8x384xf32> to vector<8x128xf32>
    %133 = arith.mulf %131, %88 : vector<8x128xf32>
    %134 = arith.mulf %130, %129 : vector<8x128xf32>
    %135 = arith.addf %133, %134 : vector<8x128xf32>
    %136 = math.tanh %135 : vector<8x128xf32>
    %137 = arith.mulf %132, %136 : vector<8x128xf32>
    %c3_i32 = arith.constant 3 : i32
    %138 = arith.truncf %115 : vector<8x128xf32> to vector<8x128xbf16>
    %cst_32 = arith.constant dense<0.000000e+00> : vector<8x512xf32>
    %139 = tpu.matmul %138, %42, %cst_32 {dimension_numbers = #tpu.dot_dimension_numbers<[1], [0], [0], [1], [0, 0, 1, 1], [], []>} : vector<8x128xbf16>, vector<128x512xbf16>, vector<8x512xf32> -> vector<8x512xf32>
    %140 = arith.truncf %137 : vector<8x128xf32> to vector<8x128xbf16>
    %cst_33 = arith.constant dense<0.000000e+00> : vector<8x512xf32>
    %141 = tpu.matmul %140, %43, %cst_33 {dimension_numbers = #tpu.dot_dimension_numbers<[1], [0], [0], [1], [0, 0, 1, 1], [], []>} : vector<8x128xbf16>, vector<128x512xbf16>, vector<8x512xf32> -> vector<8x512xf32>
    %c8_i32_34 = arith.constant 8 : i32
    %142 = arith.muli %c3_i32, %c8_i32_34 : i32
    %143 = tpu.assume_multiple %142, 8 : i32
    %144 = arith.index_cast %143 : i32 to index
    %c0_35 = arith.constant 0 : index
    %145 = vector.load %arg7[%144, %c0_35] : memref<64x1024xf32, #tpu.memory_space<vmem>>, vector<8x512xf32>
    %146 = arith.addf %145, %139 : vector<8x512xf32>
    %147 = vector.extract_strided_slice %146 {offsets = [0, 0], sizes = [8, 384], strides = [1, 1]} : vector<8x512xf32> to vector<8x384xf32>
    %148 = arith.negf %147 : vector<8x384xf32>
    %149 = math.exp %148 : vector<8x384xf32>
    %cst_36 = arith.constant 1.000000e+00 : f32
    %150 = vector.broadcast %cst_36 : f32 to vector<8x384xf32>
    %151 = arith.addf %150, %149 : vector<8x384xf32>
    %152 = arith.divf %150, %151 : vector<8x384xf32>
    %153 = vector.extract_strided_slice %146 {offsets = [0, 384], sizes = [8, 128], strides = [1, 1]} : vector<8x512xf32> to vector<8x128xf32>
    %154 = math.tanh %153 : vector<8x128xf32>
    %155 = vector.extract_strided_slice %152 {offsets = [0, 0], sizes = [8, 128], strides = [1, 1]} : vector<8x384xf32> to vector<8x128xf32>
    %156 = vector.extract_strided_slice %152 {offsets = [0, 128], sizes = [8, 128], strides = [1, 1]} : vector<8x384xf32> to vector<8x128xf32>
    %157 = vector.extract_strided_slice %152 {offsets = [0, 256], sizes = [8, 128], strides = [1, 1]} : vector<8x384xf32> to vector<8x128xf32>
    %158 = arith.mulf %156, %113 : vector<8x128xf32>
    %159 = arith.mulf %155, %154 : vector<8x128xf32>
    %160 = arith.addf %158, %159 : vector<8x128xf32>
    %161 = math.tanh %160 : vector<8x128xf32>
    %162 = arith.mulf %157, %161 : vector<8x128xf32>
    %c7_i32_37 = arith.constant 7 : i32
    %163 = arith.subi %c7_i32_37, %c3_i32 : i32
    %c8_i32_38 = arith.constant 8 : i32
    %164 = arith.muli %163, %c8_i32_38 : i32
    %165 = tpu.assume_multiple %164, 8 : i32
    %166 = arith.index_cast %165 : i32 to index
    %c512_39 = arith.constant 512 : index
    %167 = vector.load %arg7[%166, %c512_39] : memref<64x1024xf32, #tpu.memory_space<vmem>>, vector<8x512xf32>
    %168 = arith.addf %167, %141 : vector<8x512xf32>
    %169 = vector.extract_strided_slice %168 {offsets = [0, 0], sizes = [8, 384], strides = [1, 1]} : vector<8x512xf32> to vector<8x384xf32>
    %170 = arith.negf %169 : vector<8x384xf32>
    %171 = math.exp %170 : vector<8x384xf32>
    %cst_40 = arith.constant 1.000000e+00 : f32
    %172 = vector.broadcast %cst_40 : f32 to vector<8x384xf32>
    %173 = arith.addf %172, %171 : vector<8x384xf32>
    %174 = arith.divf %172, %173 : vector<8x384xf32>
    %175 = vector.extract_strided_slice %168 {offsets = [0, 384], sizes = [8, 128], strides = [1, 1]} : vector<8x512xf32> to vector<8x128xf32>
    %176 = math.tanh %175 : vector<8x128xf32>
    %177 = vector.extract_strided_slice %174 {offsets = [0, 0], sizes = [8, 128], strides = [1, 1]} : vector<8x384xf32> to vector<8x128xf32>
    %178 = vector.extract_strided_slice %174 {offsets = [0, 128], sizes = [8, 128], strides = [1, 1]} : vector<8x384xf32> to vector<8x128xf32>
    %179 = vector.extract_strided_slice %174 {offsets = [0, 256], sizes = [8, 128], strides = [1, 1]} : vector<8x384xf32> to vector<8x128xf32>
    %180 = arith.mulf %178, %135 : vector<8x128xf32>
    %181 = arith.mulf %177, %176 : vector<8x128xf32>
    %182 = arith.addf %180, %181 : vector<8x128xf32>
    %183 = math.tanh %182 : vector<8x128xf32>
    %184 = arith.mulf %179, %183 : vector<8x128xf32>
    %c4_i32 = arith.constant 4 : i32
    %185 = arith.truncf %162 : vector<8x128xf32> to vector<8x128xbf16>
    %cst_41 = arith.constant dense<0.000000e+00> : vector<8x512xf32>
    %186 = tpu.matmul %185, %42, %cst_41 {dimension_numbers = #tpu.dot_dimension_numbers<[1], [0], [0], [1], [0, 0, 1, 1], [], []>} : vector<8x128xbf16>, vector<128x512xbf16>, vector<8x512xf32> -> vector<8x512xf32>
    %187 = arith.truncf %184 : vector<8x128xf32> to vector<8x128xbf16>
    %cst_42 = arith.constant dense<0.000000e+00> : vector<8x512xf32>
    %188 = tpu.matmul %187, %43, %cst_42 {dimension_numbers = #tpu.dot_dimension_numbers<[1], [0], [0], [1], [0, 0, 1, 1], [], []>} : vector<8x128xbf16>, vector<128x512xbf16>, vector<8x512xf32> -> vector<8x512xf32>
    %c8_i32_43 = arith.constant 8 : i32
    %189 = arith.muli %c4_i32, %c8_i32_43 : i32
    %190 = tpu.assume_multiple %189, 8 : i32
    %191 = arith.index_cast %190 : i32 to index
    %c0_44 = arith.constant 0 : index
    %192 = vector.load %arg7[%191, %c0_44] : memref<64x1024xf32, #tpu.memory_space<vmem>>, vector<8x512xf32>
    %193 = arith.addf %192, %186 : vector<8x512xf32>
    %194 = vector.extract_strided_slice %193 {offsets = [0, 0], sizes = [8, 384], strides = [1, 1]} : vector<8x512xf32> to vector<8x384xf32>
    %195 = arith.negf %194 : vector<8x384xf32>
    %196 = math.exp %195 : vector<8x384xf32>
    %cst_45 = arith.constant 1.000000e+00 : f32
    %197 = vector.broadcast %cst_45 : f32 to vector<8x384xf32>
    %198 = arith.addf %197, %196 : vector<8x384xf32>
    %199 = arith.divf %197, %198 : vector<8x384xf32>
    %200 = vector.extract_strided_slice %193 {offsets = [0, 384], sizes = [8, 128], strides = [1, 1]} : vector<8x512xf32> to vector<8x128xf32>
    %201 = math.tanh %200 : vector<8x128xf32>
    %202 = vector.extract_strided_slice %199 {offsets = [0, 0], sizes = [8, 128], strides = [1, 1]} : vector<8x384xf32> to vector<8x128xf32>
    %203 = vector.extract_strided_slice %199 {offsets = [0, 128], sizes = [8, 128], strides = [1, 1]} : vector<8x384xf32> to vector<8x128xf32>
    %204 = vector.extract_strided_slice %199 {offsets = [0, 256], sizes = [8, 128], strides = [1, 1]} : vector<8x384xf32> to vector<8x128xf32>
    %205 = arith.mulf %203, %160 : vector<8x128xf32>
    %206 = arith.mulf %202, %201 : vector<8x128xf32>
    %207 = arith.addf %205, %206 : vector<8x128xf32>
    %208 = math.tanh %207 : vector<8x128xf32>
    %209 = arith.mulf %204, %208 : vector<8x128xf32>
    %c7_i32_46 = arith.constant 7 : i32
    %210 = arith.subi %c7_i32_46, %c4_i32 : i32
    %c8_i32_47 = arith.constant 8 : i32
    %211 = arith.muli %210, %c8_i32_47 : i32
    %212 = tpu.assume_multiple %211, 8 : i32
    %213 = arith.index_cast %212 : i32 to index
    %c512_48 = arith.constant 512 : index
    %214 = vector.load %arg7[%213, %c512_48] : memref<64x1024xf32, #tpu.memory_space<vmem>>, vector<8x512xf32>
    %215 = arith.addf %214, %188 : vector<8x512xf32>
    %216 = vector.extract_strided_slice %215 {offsets = [0, 0], sizes = [8, 384], strides = [1, 1]} : vector<8x512xf32> to vector<8x384xf32>
    %217 = arith.negf %216 : vector<8x384xf32>
    %218 = math.exp %217 : vector<8x384xf32>
    %cst_49 = arith.constant 1.000000e+00 : f32
    %219 = vector.broadcast %cst_49 : f32 to vector<8x384xf32>
    %220 = arith.addf %219, %218 : vector<8x384xf32>
    %221 = arith.divf %219, %220 : vector<8x384xf32>
    %222 = vector.extract_strided_slice %215 {offsets = [0, 384], sizes = [8, 128], strides = [1, 1]} : vector<8x512xf32> to vector<8x128xf32>
    %223 = math.tanh %222 : vector<8x128xf32>
    %224 = vector.extract_strided_slice %221 {offsets = [0, 0], sizes = [8, 128], strides = [1, 1]} : vector<8x384xf32> to vector<8x128xf32>
    %225 = vector.extract_strided_slice %221 {offsets = [0, 128], sizes = [8, 128], strides = [1, 1]} : vector<8x384xf32> to vector<8x128xf32>
    %226 = vector.extract_strided_slice %221 {offsets = [0, 256], sizes = [8, 128], strides = [1, 1]} : vector<8x384xf32> to vector<8x128xf32>
    %227 = arith.mulf %225, %182 : vector<8x128xf32>
    %228 = arith.mulf %224, %223 : vector<8x128xf32>
    %229 = arith.addf %227, %228 : vector<8x128xf32>
    %230 = math.tanh %229 : vector<8x128xf32>
    %231 = arith.mulf %226, %230 : vector<8x128xf32>
    %c5_i32 = arith.constant 5 : i32
    %232 = arith.truncf %209 : vector<8x128xf32> to vector<8x128xbf16>
    %cst_50 = arith.constant dense<0.000000e+00> : vector<8x512xf32>
    %233 = tpu.matmul %232, %42, %cst_50 {dimension_numbers = #tpu.dot_dimension_numbers<[1], [0], [0], [1], [0, 0, 1, 1], [], []>} : vector<8x128xbf16>, vector<128x512xbf16>, vector<8x512xf32> -> vector<8x512xf32>
    %234 = arith.truncf %231 : vector<8x128xf32> to vector<8x128xbf16>
    %cst_51 = arith.constant dense<0.000000e+00> : vector<8x512xf32>
    %235 = tpu.matmul %234, %43, %cst_51 {dimension_numbers = #tpu.dot_dimension_numbers<[1], [0], [0], [1], [0, 0, 1, 1], [], []>} : vector<8x128xbf16>, vector<128x512xbf16>, vector<8x512xf32> -> vector<8x512xf32>
    %c8_i32_52 = arith.constant 8 : i32
    %236 = arith.muli %c5_i32, %c8_i32_52 : i32
    %237 = tpu.assume_multiple %236, 8 : i32
    %238 = arith.index_cast %237 : i32 to index
    %c0_53 = arith.constant 0 : index
    %239 = vector.load %arg7[%238, %c0_53] : memref<64x1024xf32, #tpu.memory_space<vmem>>, vector<8x512xf32>
    %240 = arith.addf %239, %233 : vector<8x512xf32>
    %241 = vector.extract_strided_slice %240 {offsets = [0, 0], sizes = [8, 384], strides = [1, 1]} : vector<8x512xf32> to vector<8x384xf32>
    %242 = arith.negf %241 : vector<8x384xf32>
    %243 = math.exp %242 : vector<8x384xf32>
    %cst_54 = arith.constant 1.000000e+00 : f32
    %244 = vector.broadcast %cst_54 : f32 to vector<8x384xf32>
    %245 = arith.addf %244, %243 : vector<8x384xf32>
    %246 = arith.divf %244, %245 : vector<8x384xf32>
    %247 = vector.extract_strided_slice %240 {offsets = [0, 384], sizes = [8, 128], strides = [1, 1]} : vector<8x512xf32> to vector<8x128xf32>
    %248 = math.tanh %247 : vector<8x128xf32>
    %249 = vector.extract_strided_slice %246 {offsets = [0, 0], sizes = [8, 128], strides = [1, 1]} : vector<8x384xf32> to vector<8x128xf32>
    %250 = vector.extract_strided_slice %246 {offsets = [0, 128], sizes = [8, 128], strides = [1, 1]} : vector<8x384xf32> to vector<8x128xf32>
    %251 = vector.extract_strided_slice %246 {offsets = [0, 256], sizes = [8, 128], strides = [1, 1]} : vector<8x384xf32> to vector<8x128xf32>
    %252 = arith.mulf %250, %207 : vector<8x128xf32>
    %253 = arith.mulf %249, %248 : vector<8x128xf32>
    %254 = arith.addf %252, %253 : vector<8x128xf32>
    %255 = math.tanh %254 : vector<8x128xf32>
    %256 = arith.mulf %251, %255 : vector<8x128xf32>
    %c7_i32_55 = arith.constant 7 : i32
    %257 = arith.subi %c7_i32_55, %c5_i32 : i32
    %c8_i32_56 = arith.constant 8 : i32
    %258 = arith.muli %257, %c8_i32_56 : i32
    %259 = tpu.assume_multiple %258, 8 : i32
    %260 = arith.index_cast %259 : i32 to index
    %c512_57 = arith.constant 512 : index
    %261 = vector.load %arg7[%260, %c512_57] : memref<64x1024xf32, #tpu.memory_space<vmem>>, vector<8x512xf32>
    %262 = arith.addf %261, %235 : vector<8x512xf32>
    %263 = vector.extract_strided_slice %262 {offsets = [0, 0], sizes = [8, 384], strides = [1, 1]} : vector<8x512xf32> to vector<8x384xf32>
    %264 = arith.negf %263 : vector<8x384xf32>
    %265 = math.exp %264 : vector<8x384xf32>
    %cst_58 = arith.constant 1.000000e+00 : f32
    %266 = vector.broadcast %cst_58 : f32 to vector<8x384xf32>
    %267 = arith.addf %266, %265 : vector<8x384xf32>
    %268 = arith.divf %266, %267 : vector<8x384xf32>
    %269 = vector.extract_strided_slice %262 {offsets = [0, 384], sizes = [8, 128], strides = [1, 1]} : vector<8x512xf32> to vector<8x128xf32>
    %270 = math.tanh %269 : vector<8x128xf32>
    %271 = vector.extract_strided_slice %268 {offsets = [0, 0], sizes = [8, 128], strides = [1, 1]} : vector<8x384xf32> to vector<8x128xf32>
    %272 = vector.extract_strided_slice %268 {offsets = [0, 128], sizes = [8, 128], strides = [1, 1]} : vector<8x384xf32> to vector<8x128xf32>
    %273 = vector.extract_strided_slice %268 {offsets = [0, 256], sizes = [8, 128], strides = [1, 1]} : vector<8x384xf32> to vector<8x128xf32>
    %274 = arith.mulf %272, %229 : vector<8x128xf32>
    %275 = arith.mulf %271, %270 : vector<8x128xf32>
    %276 = arith.addf %274, %275 : vector<8x128xf32>
    %277 = math.tanh %276 : vector<8x128xf32>
    %278 = arith.mulf %273, %277 : vector<8x128xf32>
    %c6_i32 = arith.constant 6 : i32
    %279 = arith.truncf %256 : vector<8x128xf32> to vector<8x128xbf16>
    %cst_59 = arith.constant dense<0.000000e+00> : vector<8x512xf32>
    %280 = tpu.matmul %279, %42, %cst_59 {dimension_numbers = #tpu.dot_dimension_numbers<[1], [0], [0], [1], [0, 0, 1, 1], [], []>} : vector<8x128xbf16>, vector<128x512xbf16>, vector<8x512xf32> -> vector<8x512xf32>
    %281 = arith.truncf %278 : vector<8x128xf32> to vector<8x128xbf16>
    %cst_60 = arith.constant dense<0.000000e+00> : vector<8x512xf32>
    %282 = tpu.matmul %281, %43, %cst_60 {dimension_numbers = #tpu.dot_dimension_numbers<[1], [0], [0], [1], [0, 0, 1, 1], [], []>} : vector<8x128xbf16>, vector<128x512xbf16>, vector<8x512xf32> -> vector<8x512xf32>
    %c8_i32_61 = arith.constant 8 : i32
    %283 = arith.muli %c6_i32, %c8_i32_61 : i32
    %284 = tpu.assume_multiple %283, 8 : i32
    %285 = arith.index_cast %284 : i32 to index
    %c0_62 = arith.constant 0 : index
    %286 = vector.load %arg7[%285, %c0_62] : memref<64x1024xf32, #tpu.memory_space<vmem>>, vector<8x512xf32>
    %287 = arith.addf %286, %280 : vector<8x512xf32>
    %288 = vector.extract_strided_slice %287 {offsets = [0, 0], sizes = [8, 384], strides = [1, 1]} : vector<8x512xf32> to vector<8x384xf32>
    %289 = arith.negf %288 : vector<8x384xf32>
    %290 = math.exp %289 : vector<8x384xf32>
    %cst_63 = arith.constant 1.000000e+00 : f32
    %291 = vector.broadcast %cst_63 : f32 to vector<8x384xf32>
    %292 = arith.addf %291, %290 : vector<8x384xf32>
    %293 = arith.divf %291, %292 : vector<8x384xf32>
    %294 = vector.extract_strided_slice %287 {offsets = [0, 384], sizes = [8, 128], strides = [1, 1]} : vector<8x512xf32> to vector<8x128xf32>
    %295 = math.tanh %294 : vector<8x128xf32>
    %296 = vector.extract_strided_slice %293 {offsets = [0, 0], sizes = [8, 128], strides = [1, 1]} : vector<8x384xf32> to vector<8x128xf32>
    %297 = vector.extract_strided_slice %293 {offsets = [0, 128], sizes = [8, 128], strides = [1, 1]} : vector<8x384xf32> to vector<8x128xf32>
    %298 = vector.extract_strided_slice %293 {offsets = [0, 256], sizes = [8, 128], strides = [1, 1]} : vector<8x384xf32> to vector<8x128xf32>
    %299 = arith.mulf %297, %254 : vector<8x128xf32>
    %300 = arith.mulf %296, %295 : vector<8x128xf32>
    %301 = arith.addf %299, %300 : vector<8x128xf32>
    %302 = math.tanh %301 : vector<8x128xf32>
    %303 = arith.mulf %298, %302 : vector<8x128xf32>
    %c7_i32_64 = arith.constant 7 : i32
    %304 = arith.subi %c7_i32_64, %c6_i32 : i32
    %c8_i32_65 = arith.constant 8 : i32
    %305 = arith.muli %304, %c8_i32_65 : i32
    %306 = tpu.assume_multiple %305, 8 : i32
    %307 = arith.index_cast %306 : i32 to index
    %c512_66 = arith.constant 512 : index
    %308 = vector.load %arg7[%307, %c512_66] : memref<64x1024xf32, #tpu.memory_space<vmem>>, vector<8x512xf32>
    %309 = arith.addf %308, %282 : vector<8x512xf32>
    %310 = vector.extract_strided_slice %309 {offsets = [0, 0], sizes = [8, 384], strides = [1, 1]} : vector<8x512xf32> to vector<8x384xf32>
    %311 = arith.negf %310 : vector<8x384xf32>
    %312 = math.exp %311 : vector<8x384xf32>
    %cst_67 = arith.constant 1.000000e+00 : f32
    %313 = vector.broadcast %cst_67 : f32 to vector<8x384xf32>
    %314 = arith.addf %313, %312 : vector<8x384xf32>
    %315 = arith.divf %313, %314 : vector<8x384xf32>
    %316 = vector.extract_strided_slice %309 {offsets = [0, 384], sizes = [8, 128], strides = [1, 1]} : vector<8x512xf32> to vector<8x128xf32>
    %317 = math.tanh %316 : vector<8x128xf32>
    %318 = vector.extract_strided_slice %315 {offsets = [0, 0], sizes = [8, 128], strides = [1, 1]} : vector<8x384xf32> to vector<8x128xf32>
    %319 = vector.extract_strided_slice %315 {offsets = [0, 128], sizes = [8, 128], strides = [1, 1]} : vector<8x384xf32> to vector<8x128xf32>
    %320 = vector.extract_strided_slice %315 {offsets = [0, 256], sizes = [8, 128], strides = [1, 1]} : vector<8x384xf32> to vector<8x128xf32>
    %321 = arith.mulf %319, %276 : vector<8x128xf32>
    %322 = arith.mulf %318, %317 : vector<8x128xf32>
    %323 = arith.addf %321, %322 : vector<8x128xf32>
    %324 = math.tanh %323 : vector<8x128xf32>
    %325 = arith.mulf %320, %324 : vector<8x128xf32>
    %c7_i32_68 = arith.constant 7 : i32
    %326 = arith.truncf %303 : vector<8x128xf32> to vector<8x128xbf16>
    %cst_69 = arith.constant dense<0.000000e+00> : vector<8x512xf32>
    %327 = tpu.matmul %326, %42, %cst_69 {dimension_numbers = #tpu.dot_dimension_numbers<[1], [0], [0], [1], [0, 0, 1, 1], [], []>} : vector<8x128xbf16>, vector<128x512xbf16>, vector<8x512xf32> -> vector<8x512xf32>
    %328 = arith.truncf %325 : vector<8x128xf32> to vector<8x128xbf16>
    %cst_70 = arith.constant dense<0.000000e+00> : vector<8x512xf32>
    %329 = tpu.matmul %328, %43, %cst_70 {dimension_numbers = #tpu.dot_dimension_numbers<[1], [0], [0], [1], [0, 0, 1, 1], [], []>} : vector<8x128xbf16>, vector<128x512xbf16>, vector<8x512xf32> -> vector<8x512xf32>
    %c8_i32_71 = arith.constant 8 : i32
    %330 = arith.muli %c7_i32_68, %c8_i32_71 : i32
    %331 = tpu.assume_multiple %330, 8 : i32
    %332 = arith.index_cast %331 : i32 to index
    %c0_72 = arith.constant 0 : index
    %333 = vector.load %arg7[%332, %c0_72] : memref<64x1024xf32, #tpu.memory_space<vmem>>, vector<8x512xf32>
    %334 = arith.addf %333, %327 : vector<8x512xf32>
    %335 = vector.extract_strided_slice %334 {offsets = [0, 0], sizes = [8, 384], strides = [1, 1]} : vector<8x512xf32> to vector<8x384xf32>
    %336 = arith.negf %335 : vector<8x384xf32>
    %337 = math.exp %336 : vector<8x384xf32>
    %cst_73 = arith.constant 1.000000e+00 : f32
    %338 = vector.broadcast %cst_73 : f32 to vector<8x384xf32>
    %339 = arith.addf %338, %337 : vector<8x384xf32>
    %340 = arith.divf %338, %339 : vector<8x384xf32>
    %341 = vector.extract_strided_slice %334 {offsets = [0, 384], sizes = [8, 128], strides = [1, 1]} : vector<8x512xf32> to vector<8x128xf32>
    %342 = math.tanh %341 : vector<8x128xf32>
    %343 = vector.extract_strided_slice %340 {offsets = [0, 0], sizes = [8, 128], strides = [1, 1]} : vector<8x384xf32> to vector<8x128xf32>
    %344 = vector.extract_strided_slice %340 {offsets = [0, 128], sizes = [8, 128], strides = [1, 1]} : vector<8x384xf32> to vector<8x128xf32>
    %345 = vector.extract_strided_slice %340 {offsets = [0, 256], sizes = [8, 128], strides = [1, 1]} : vector<8x384xf32> to vector<8x128xf32>
    %346 = arith.mulf %344, %301 : vector<8x128xf32>
    %347 = arith.mulf %343, %342 : vector<8x128xf32>
    %348 = arith.addf %346, %347 : vector<8x128xf32>
    %349 = math.tanh %348 : vector<8x128xf32>
    %350 = arith.mulf %345, %349 : vector<8x128xf32>
    %c7_i32_74 = arith.constant 7 : i32
    %351 = arith.subi %c7_i32_74, %c7_i32_68 : i32
    %c8_i32_75 = arith.constant 8 : i32
    %352 = arith.muli %351, %c8_i32_75 : i32
    %353 = tpu.assume_multiple %352, 8 : i32
    %354 = arith.index_cast %353 : i32 to index
    %c512_76 = arith.constant 512 : index
    %355 = vector.load %arg7[%354, %c512_76] : memref<64x1024xf32, #tpu.memory_space<vmem>>, vector<8x512xf32>
    %356 = arith.addf %355, %329 : vector<8x512xf32>
    %357 = vector.extract_strided_slice %356 {offsets = [0, 0], sizes = [8, 384], strides = [1, 1]} : vector<8x512xf32> to vector<8x384xf32>
    %358 = arith.negf %357 : vector<8x384xf32>
    %359 = math.exp %358 : vector<8x384xf32>
    %cst_77 = arith.constant 1.000000e+00 : f32
    %360 = vector.broadcast %cst_77 : f32 to vector<8x384xf32>
    %361 = arith.addf %360, %359 : vector<8x384xf32>
    %362 = arith.divf %360, %361 : vector<8x384xf32>
    %363 = vector.extract_strided_slice %356 {offsets = [0, 384], sizes = [8, 128], strides = [1, 1]} : vector<8x512xf32> to vector<8x128xf32>
    %364 = math.tanh %363 : vector<8x128xf32>
    %365 = vector.extract_strided_slice %362 {offsets = [0, 0], sizes = [8, 128], strides = [1, 1]} : vector<8x384xf32> to vector<8x128xf32>
    %366 = vector.extract_strided_slice %362 {offsets = [0, 128], sizes = [8, 128], strides = [1, 1]} : vector<8x384xf32> to vector<8x128xf32>
    %367 = vector.extract_strided_slice %362 {offsets = [0, 256], sizes = [8, 128], strides = [1, 1]} : vector<8x384xf32> to vector<8x128xf32>
    %368 = arith.mulf %366, %323 : vector<8x128xf32>
    %369 = arith.mulf %365, %364 : vector<8x128xf32>
    %370 = arith.addf %368, %369 : vector<8x128xf32>
    %371 = math.tanh %370 : vector<8x128xf32>
    %372 = arith.mulf %367, %371 : vector<8x128xf32>
    %c7_i32_78 = arith.constant 7 : i32
    %c0_79 = arith.constant 0 : index
    %c0_80 = arith.constant 0 : index
    %373 = vector.load %arg6[%c0_79, %c0_80] : memref<8x256xf32, #tpu.memory_space<vmem>>, vector<8x128xf32>
    tpu.vector_store %arg6[%c0_79, %c0_80], %350 {strides = array<i32>} : memref<8x256xf32, #tpu.memory_space<vmem>>, vector<8x128xf32>,
    %c0_81 = arith.constant 0 : index
    %c128 = arith.constant 128 : index
    %374 = vector.load %arg6[%c0_81, %c128] : memref<8x256xf32, #tpu.memory_space<vmem>>, vector<8x128xf32>
    tpu.vector_store %arg6[%c0_81, %c128], %372 {strides = array<i32>} : memref<8x256xf32, #tpu.memory_space<vmem>>, vector<8x128xf32>,
    return
  }
  func.func @transform_0(%arg0: i32) -> (i32, i32) {
    %c0_i32 = arith.constant 0 : i32
    %c0_i32_0 = arith.constant 0 : i32
    %c0_i32_1 = arith.constant 0 : i32
    return %c0_i32, %c0_i32_0 : i32, i32
  }
  func.func @transform_1(%arg0: i32) -> (i32, i32) {
    %c0_i32 = arith.constant 0 : i32
    %c0_i32_0 = arith.constant 0 : i32
    %c0_i32_1 = arith.constant 0 : i32
    return %c0_i32, %c0_i32_0 : i32, i32
  }
  func.func @transform_2(%arg0: i32) -> (i32, i32) {
    %c0_i32 = arith.constant 0 : i32
    %c0_i32_0 = arith.constant 0 : i32
    %c0_i32_1 = arith.constant 0 : i32
    return %c0_i32, %c0_i32_0 : i32, i32
  }
  func.func @transform_3(%arg0: i32) -> (i32, i32) {
    %c0_i32 = arith.constant 0 : i32
    %c0_i32_0 = arith.constant 0 : i32
    %c0_i32_1 = arith.constant 0 : i32
    return %c0_i32, %c0_i32_0 : i32, i32
  }
  func.func @transform_4(%arg0: i32) -> (i32, i32) {
    %c0_i32 = arith.constant 0 : i32
    %c0_i32_0 = arith.constant 0 : i32
    %c0_i32_1 = arith.constant 0 : i32
    return %c0_i32, %c0_i32_0 : i32, i32
  }
  func.func @transform_5(%arg0: i32) -> (i32, i32) {
    %c0_i32 = arith.constant 0 : i32
    %c0_i32_0 = arith.constant 0 : i32
    %c0_i32_1 = arith.constant 0 : i32
    return %c0_i32, %c0_i32_0 : i32, i32
  }
}

</mosaic_0001>

<llo_original>
// kernel: feature_extractor.1
$region0: #{feature_extractor.1}
  #allocation0 [shape = 'u32[]', space=smem, size = 0x4, offset = 0x4, fixed_abs, tag = 'smem constant byte address 0x4 - core index']
  #allocation1 [shape = 'u32[144,128]{1,0:T(1,128)}', space=vmem, size = 0x12000, scoped, tag = 'internal scratch']
  #allocation2 [shape = 'f32[64,1024]{1,0:T(8,128)}', space=vmem, size = 0x40000, scoped, tag = 'scratch operand']
  %s0 = inlined_call_operand.vmem [shape: bf16[64,32], index: 0, kind: input, shape index: {}]
  %s1 = inlined_call_operand.vmem [shape: bf16[32,1024], index: 1, kind: input, shape index: {}]
  %s2 = inlined_call_operand.vmem [shape: bf16[128,512], index: 2, kind: input, shape index: {}]
  %s3 = inlined_call_operand.vmem [shape: bf16[128,512], index: 3, kind: input, shape index: {}]
  %s4 = inlined_call_operand.vmem [shape: f32[1,1024], index: 4, kind: input, shape index: {}]
  %s5 = inlined_call_operand.vmem [shape: f32[8,256], index: 5, kind: output, shape index: {}]
  %s6 = sld [smem:[#allocation0]]
  $region30: #{feature_extractor.1} parent=0
    _
  %s8 = ssub.s32 1, %s6
  %s9 = scalar_select 0, %s8, %s6
  // Predicated region
  $region2: #{feature_extractor.1} parent=0 // pred_check
    _
  $region3: #{feature_extractor.1} parent=0 // pred_check_branch
    %11 = sbr.rel (0) target = $region5
  $region4: #{feature_extractor.1} parent=0 // pred_region
    _
  $region5: #{feature_extractor.1} parent=0 // pred_fallthru
    _
  // Predicated region
  $region6: #{feature_extractor.1} parent=0 // pred_check
    _
  $region7: #{feature_extractor.1} parent=0 // pred_check_branch
    %13 = sbr.rel (0) target = $region9
  $region8: #{feature_extractor.1} parent=0 // pred_region
    _
  $region9: #{feature_extractor.1} parent=0 // pred_fallthru
    _
  // Predicated region
  $region10: #{feature_extractor.1} parent=0 // pred_check
    _
  $region11: #{feature_extractor.1} parent=0 // pred_check_branch
    %15 = sbr.rel (0) target = $region13
  $region12: #{feature_extractor.1} parent=0 // pred_region
    _
  $region13: #{feature_extractor.1} parent=0 // pred_fallthru
    _
  // Predicated region
  $region14: #{feature_extractor.1} parent=0 // pred_check
    _
  $region15: #{feature_extractor.1} parent=0 // pred_check_branch
    %17 = sbr.rel (0) target = $region17
  $region16: #{feature_extractor.1} parent=0 // pred_region
    _
  $region17: #{feature_extractor.1} parent=0 // pred_fallthru
    _
  // Predicated region
  $region18: #{feature_extractor.1} parent=0 // pred_check
    _
  $region19: #{feature_extractor.1} parent=0 // pred_check_branch
    %19 = sbr.rel (0) target = $region21
  $region20: #{feature_extractor.1} parent=0 // pred_region
    _
  $region21: #{feature_extractor.1} parent=0 // pred_fallthru
    _
  %v21 = vld [vmem:[%s0] sm:$0xf]
  %v22 = vld [vmem:[%s0 + $0x4] sm:$0xf]
  %v23 = vld [vmem:[%s0 + $0x8] sm:$0xf]
  %v24 = vld [vmem:[%s0 + $0xc] sm:$0xf]
  %v25 = vld [vmem:[%s0 + $0x10] sm:$0xf]
  %v26 = vld [vmem:[%s0 + $0x14] sm:$0xf]
  %v27 = vld [vmem:[%s0 + $0x18] sm:$0xf]
  %v28 = vld [vmem:[%s0 + $0x1c] sm:$0xf]
  %v29 = vld [vmem:[%s1] sm:$0xff]
  %v30 = vld [vmem:[%s1 + $0x8] sm:$0xff]
  %v31 = vld [vmem:[%s1 + $0x10] sm:$0xff]
  %v32 = vld [vmem:[%s1 + $0x18] sm:$0xff]
  %v33 = vld [vmem:[%s1 + $0x20] sm:$0xff]
  %v34 = vld [vmem:[%s1 + $0x28] sm:$0xff]
  %v35 = vld [vmem:[%s1 + $0x30] sm:$0xff]
  %v36 = vld [vmem:[%s1 + $0x38] sm:$0xff]
  %v37 = vld [vmem:[%s1 + $0x40] sm:$0xff]
  %v38 = vld [vmem:[%s1 + $0x48] sm:$0xff]
  %v39 = vld [vmem:[%s1 + $0x50] sm:$0xff]
  %v40 = vld [vmem:[%s1 + $0x58] sm:$0xff]
  %v41 = vld [vmem:[%s1 + $0x60] sm:$0xff]
  %v42 = vld [vmem:[%s1 + $0x68] sm:$0xff]
  %v43 = vld [vmem:[%s1 + $0x70] sm:$0xff]
  %v44 = vld [vmem:[%s1 + $0x78] sm:$0xff]
  %v45 = vld [vmem:[%s4] sm:$0xff]
  %v47 = vlaneseq
  %v48 = vshrl.u32 %v47, 7
  %v49 = vsub.s32 0, %v48
  %v50 = vrot.slane %v45, %v49
  %v51 = vlaneseq
  %v52 = vshrl.u32 %v51, 7
  %v53 = vsub.s32 1, %v52
  %v54 = vrot.slane %v45, %v53
  %v55 = vlaneseq
  %v56 = vshrl.u32 %v55, 7
  %v57 = vsub.s32 2, %v56
  %v58 = vrot.slane %v45, %v57
  %v59 = vlaneseq
  %v60 = vshrl.u32 %v59, 7
  %v61 = vsub.s32 3, %v60
  %v62 = vrot.slane %v45, %v61
  %v63 = vlaneseq
  %v64 = vshrl.u32 %v63, 7
  %v65 = vsub.s32 4, %v64
  %v66 = vrot.slane %v45, %v65
  %v67 = vlaneseq
  %v68 = vshrl.u32 %v67, 7
  %v69 = vsub.s32 5, %v68
  %v70 = vrot.slane %v45, %v69
  %v71 = vlaneseq
  %v72 = vshrl.u32 %v71, 7
  %v73 = vsub.s32 6, %v72
  %v74 = vrot.slane %v45, %v73
  %v75 = vlaneseq
  %v76 = vshrl.u32 %v75, 7
  %v77 = vsub.s32 7, %v76
  %v78 = vrot.slane %v45, %v77
  %v95 = vunpack.c.l.b16 %v21
  %v96 = vunpack.c.l.b16 %v22
  %v97 = vunpack.c.l.b16 %v23
  %v98 = vunpack.c.l.b16 %v24
  %v99 = vunpack.c.l.b16 %v25
  %v100 = vunpack.c.l.b16 %v26
  %v101 = vunpack.c.l.b16 %v27
  %v102 = vunpack.c.l.b16 %v28
  %v103 = vpack.c.b16 %v96, %v95
  %v104 = vpack.c.b16 %v98, %v97
  %v105 = vpack.c.b16 %v100, %v99
  %v106 = vpack.c.b16 %v102, %v101
  %v123 = vunpack.c.l.b16 %v29
  %v124 = vunpack.c.h.b16 %v29
  %v125 = vunpack.c.l.b16 %v30
  %v126 = vunpack.c.h.b16 %v30
  %v127 = vunpack.c.l.b16 %v31
  %v128 = vunpack.c.h.b16 %v31
  %v129 = vunpack.c.l.b16 %v32
  %v130 = vunpack.c.h.b16 %v32
  %v131 = vunpack.c.l.b16 %v33
  %v132 = vunpack.c.h.b16 %v33
  %v133 = vunpack.c.l.b16 %v34
  %v134 = vunpack.c.h.b16 %v34
  %v135 = vunpack.c.l.b16 %v35
  %v136 = vunpack.c.h.b16 %v35
  %v137 = vunpack.c.l.b16 %v36
  %v138 = vunpack.c.h.b16 %v36
  %v139 = vunpack.c.l.b16 %v37
  %v140 = vunpack.c.h.b16 %v37
  %v141 = vunpack.c.l.b16 %v38
  %v142 = vunpack.c.h.b16 %v38
  %v143 = vunpack.c.l.b16 %v39
  %v144 = vunpack.c.h.b16 %v39
  %v145 = vunpack.c.l.b16 %v40
  %v146 = vunpack.c.h.b16 %v40
  %v147 = vunpack.c.l.b16 %v41
  %v148 = vunpack.c.h.b16 %v41
  %v149 = vunpack.c.l.b16 %v42
  %v150 = vunpack.c.h.b16 %v42
  %v151 = vunpack.c.l.b16 %v43
  %v152 = vunpack.c.h.b16 %v43
  %v153 = vunpack.c.l.b16 %v44
  %v154 = vunpack.c.h.b16 %v44
  %v155 = vpack.c.b16 %v131, %v123
  %v156 = vpack.c.b16 %v132, %v124
  %v157 = vpack.c.b16 %v133, %v125
  %v158 = vpack.c.b16 %v134, %v126
  %v159 = vpack.c.b16 %v135, %v127
  %v160 = vpack.c.b16 %v136, %v128
  %v161 = vpack.c.b16 %v137, %v129
  %v162 = vpack.c.b16 %v138, %v130
  %v163 = vpack.c.b16 %v147, %v139
  %v164 = vpack.c.b16 %v148, %v140
  %v165 = vpack.c.b16 %v149, %v141
  %v166 = vpack.c.b16 %v150, %v142
  %v167 = vpack.c.b16 %v151, %v143
  %v168 = vpack.c.b16 %v152, %v144
  %v169 = vpack.c.b16 %v153, %v145
  %v170 = vpack.c.b16 %v154, %v146
  %vm187 = vcmask 261120
  %v189 = vsel %vm187, %v103, 0
  %v192 = vsel %vm187, %v104, 0
  %v195 = vsel %vm187, %v105, 0
  %v198 = vsel %vm187, %v106, 0
  %200 = vmatprep.subr.bf16.mxu0 %v156
  %201 = vmatpush1.bf16.msra.mxu0 %v155
  %202 = vmatprep.subr.bf16.mxu0 %v164
  %203 = vmatpush1.bf16.msra.mxu0 %v163
  %204 = vmatprep.subr.bf16.mxu0 0
  %205 = vmatpush1.bf16.msra.mxu0 0
  %206 = vmatprep.subr.bf16.mxu0 0
  %207 = vmatpush1.bf16.msra.mxu0 0
  %208 = vmatprep.subr.bf16.mxu0 0
  %209 = vmatpush1.bf16.msra.mxu0 0
  %210 = vmatprep.subr.bf16.mxu0 0
  %211 = vmatpush1.bf16.msra.mxu0 0
  %212 = vmatprep.subr.bf16.mxu0 0
  %213 = vmatpush1.bf16.msra.mxu0 0
  %214 = vmatprep.subr.bf16.mxu0 0
  %215 = vmatpush1.bf16.msra.mxu0 0
  %216 = vmatprep.subr.bf16.mxu0 0
  %217 = vmatpush1.bf16.msra.mxu0 0
  %218 = vmatprep.subr.bf16.mxu0 0
  %219 = vmatpush1.bf16.msra.mxu0 0
  %220 = vmatprep.subr.bf16.mxu0 0
  %221 = vmatpush1.bf16.msra.mxu0 0
  %222 = vmatprep.subr.bf16.mxu0 0
  %223 = vmatpush1.bf16.msra.mxu0 0
  %224 = vmatprep.subr.bf16.mxu0 0
  %225 = vmatpush1.bf16.msra.mxu0 0
  %226 = vmatprep.subr.bf16.mxu0 0
  %227 = vmatpush1.bf16.msra.mxu0 0
  %228 = vmatprep.subr.bf16.mxu0 0
  %229 = vmatpush1.bf16.msra.mxu0 0
  %230 = vmatprep.subr.bf16.mxu0 0
  %231 = vmatpush1.bf16.msra.mxu0 0
  %232 = vmatprep.mubr.bf16.mxu0 0
  %233 = vmatmul.mubr.bf16.gmra.mrb[0].mxu0 %v189
  %v234 = vpop.f32.mrb[0].mxu0
  %v235 = vadd.f32 %v50, %v234
  %v236 = vpop.f32.mrb[0].mxu0
  %v237 = vadd.f32 %v54, %v236
  %v238 = vpop.f32.mrb[0].mxu0
  %v239 = vadd.f32 %v50, %v238
  %v240 = vpop.f32.mrb[0].mxu0
  %v241 = vadd.f32 %v54, %v240
  %242 = vmatprep.mubr.bf16.mxu0 0
  %243 = vmatmul.mubr.bf16.gmra.mrb[0].mxu0 %v192
  %v244 = vpop.f32.mrb[0].mxu0
  %v245 = vadd.f32 %v50, %v244
  %v246 = vpop.f32.mrb[0].mxu0
  %v247 = vadd.f32 %v54, %v246
  %v248 = vpop.f32.mrb[0].mxu0
  %v249 = vadd.f32 %v50, %v248
  %v250 = vpop.f32.mrb[0].mxu0
  %v251 = vadd.f32 %v54, %v250
  %252 = vmatprep.mubr.bf16.mxu0 0
  %253 = vmatmul.mubr.bf16.gmra.mrb[0].mxu0 %v195
  %v254 = vpop.f32.mrb[0].mxu0
  %v255 = vadd.f32 %v50, %v254
  %v256 = vpop.f32.mrb[0].mxu0
  %v257 = vadd.f32 %v54, %v256
  %v258 = vpop.f32.mrb[0].mxu0
  %v259 = vadd.f32 %v50, %v258
  %v260 = vpop.f32.mrb[0].mxu0
  %v261 = vadd.f32 %v54, %v260
  %262 = vmatprep.mubr.bf16.mxu0 0
  %263 = vmatmul.mubr.bf16.gmra.mrb[0].mxu0 %v198
  %v264 = vpop.f32.mrb[0].mxu0
  %v265 = vadd.f32 %v50, %v264
  %v266 = vpop.f32.mrb[0].mxu0
  %v267 = vadd.f32 %v54, %v266
  %v268 = vpop.f32.mrb[0].mxu0
  %v269 = vadd.f32 %v50, %v268
  %v270 = vpop.f32.mrb[0].mxu0
  %v271 = vadd.f32 %v54, %v270
  %272 = vdwg.mxu0
  %273 = vmatprep.subr.bf16.mxu0 %v158
  %274 = vmatpush1.bf16.msra.mxu0 %v157
  %275 = vmatprep.subr.bf16.mxu0 %v166
  %276 = vmatpush1.bf16.msra.mxu0 %v165
  %277 = vmatprep.subr.bf16.mxu0 0
  %278 = vmatpush1.bf16.msra.mxu0 0
  %279 = vmatprep.subr.bf16.mxu0 0
  %280 = vmatpush1.bf16.msra.mxu0 0
  %281 = vmatprep.subr.bf16.mxu0 0
  %282 = vmatpush1.bf16.msra.mxu0 0
  %283 = vmatprep.subr.bf16.mxu0 0
  %284 = vmatpush1.bf16.msra.mxu0 0
  %285 = vmatprep.subr.bf16.mxu0 0
  %286 = vmatpush1.bf16.msra.mxu0 0
  %287 = vmatprep.subr.bf16.mxu0 0
  %288 = vmatpush1.bf16.msra.mxu0 0
  %289 = vmatprep.subr.bf16.mxu0 0
  %290 = vmatpush1.bf16.msra.mxu0 0
  %291 = vmatprep.subr.bf16.mxu0 0
  %292 = vmatpush1.bf16.msra.mxu0 0
  %293 = vmatprep.subr.bf16.mxu0 0
  %294 = vmatpush1.bf16.msra.mxu0 0
  %295 = vmatprep.subr.bf16.mxu0 0
  %296 = vmatpush1.bf16.msra.mxu0 0
  %297 = vmatprep.subr.bf16.mxu0 0
  %298 = vmatpush1.bf16.msra.mxu0 0
  %299 = vmatprep.subr.bf16.mxu0 0
  %300 = vmatpush1.bf16.msra.mxu0 0
  %301 = vmatprep.subr.bf16.mxu0 0
  %302 = vmatpush1.bf16.msra.mxu0 0
  %303 = vmatprep.subr.bf16.mxu0 0
  %304 = vmatpush1.bf16.msra.mxu0 0
  %305 = vmatprep.mubr.bf16.mxu0 0
  %306 = vmatmul.mubr.bf16.gmra.mrb[0].mxu0 %v189
  %v307 = vpop.f32.mrb[0].mxu0
  %v308 = vadd.f32 %v58, %v307
  %v309 = vpop.f32.mrb[0].mxu0
  %v310 = vadd.f32 %v62, %v309
  %v311 = vpop.f32.mrb[0].mxu0
  %v312 = vadd.f32 %v58, %v311
  %v313 = vpop.f32.mrb[0].mxu0
  %v314 = vadd.f32 %v62, %v313
  %315 = vmatprep.mubr.bf16.mxu0 0
  %316 = vmatmul.mubr.bf16.gmra.mrb[0].mxu0 %v192
  %v317 = vpop.f32.mrb[0].mxu0
  %v318 = vadd.f32 %v58, %v317
  %v319 = vpop.f32.mrb[0].mxu0
  %v320 = vadd.f32 %v62, %v319
  %v321 = vpop.f32.mrb[0].mxu0
  %v322 = vadd.f32 %v58, %v321
  %v323 = vpop.f32.mrb[0].mxu0
  %v324 = vadd.f32 %v62, %v323
  %325 = vmatprep.mubr.bf16.mxu0 0
  %326 = vmatmul.mubr.bf16.gmra.mrb[0].mxu0 %v195
  %v327 = vpop.f32.mrb[0].mxu0
  %v328 = vadd.f32 %v58, %v327
  %v329 = vpop.f32.mrb[0].mxu0
  %v330 = vadd.f32 %v62, %v329
  %v331 = vpop.f32.mrb[0].mxu0
  %v332 = vadd.f32 %v58, %v331
  %v333 = vpop.f32.mrb[0].mxu0
  %v334 = vadd.f32 %v62, %v333
  %335 = vmatprep.mubr.bf16.mxu0 0
  %336 = vmatmul.mubr.bf16.gmra.mrb[0].mxu0 %v198
  %v337 = vpop.f32.mrb[0].mxu0
  %v338 = vadd.f32 %v58, %v337
  %v339 = vpop.f32.mrb[0].mxu0
  %v340 = vadd.f32 %v62, %v339
  %v341 = vpop.f32.mrb[0].mxu0
  %v342 = vadd.f32 %v58, %v341
  %v343 = vpop.f32.mrb[0].mxu0
  %v344 = vadd.f32 %v62, %v343
  %345 = vdwg.mxu0
  %346 = vmatprep.subr.bf16.mxu0 %v160
  %347 = vmatpush1.bf16.msra.mxu0 %v159
  %348 = vmatprep.subr.bf16.mxu0 %v168
  %349 = vmatpush1.bf16.msra.mxu0 %v167
  %350 = vmatprep.subr.bf16.mxu0 0
  %351 = vmatpush1.bf16.msra.mxu0 0
  %352 = vmatprep.subr.bf16.mxu0 0
  %353 = vmatpush1.bf16.msra.mxu0 0
  %354 = vmatprep.subr.bf16.mxu0 0
  %355 = vmatpush1.bf16.msra.mxu0 0
  %356 = vmatprep.subr.bf16.mxu0 0
  %357 = vmatpush1.bf16.msra.mxu0 0
  %358 = vmatprep.subr.bf16.mxu0 0
  %359 = vmatpush1.bf16.msra.mxu0 0
  %360 = vmatprep.subr.bf16.mxu0 0
  %361 = vmatpush1.bf16.msra.mxu0 0
  %362 = vmatprep.subr.bf16.mxu0 0
  %363 = vmatpush1.bf16.msra.mxu0 0
  %364 = vmatprep.subr.bf16.mxu0 0
  %365 = vmatpush1.bf16.msra.mxu0 0
  %366 = vmatprep.subr.bf16.mxu0 0
  %367 = vmatpush1.bf16.msra.mxu0 0
  %368 = vmatprep.subr.bf16.mxu0 0
  %369 = vmatpush1.bf16.msra.mxu0 0
  %370 = vmatprep.subr.bf16.mxu0 0
  %371 = vmatpush1.bf16.msra.mxu0 0
  %372 = vmatprep.subr.bf16.mxu0 0
  %373 = vmatpush1.bf16.msra.mxu0 0
  %374 = vmatprep.subr.bf16.mxu0 0
  %375 = vmatpush1.bf16.msra.mxu0 0
  %376 = vmatprep.subr.bf16.mxu0 0
  %377 = vmatpush1.bf16.msra.mxu0 0
  %378 = vmatprep.mubr.bf16.mxu0 0
  %379 = vmatmul.mubr.bf16.gmra.mrb[0].mxu0 %v189
  %v380 = vpop.f32.mrb[0].mxu0
  %v381 = vadd.f32 %v66, %v380
  %v382 = vpop.f32.mrb[0].mxu0
  %v383 = vadd.f32 %v70, %v382
  %v384 = vpop.f32.mrb[0].mxu0
  %v385 = vadd.f32 %v66, %v384
  %v386 = vpop.f32.mrb[0].mxu0
  %v387 = vadd.f32 %v70, %v386
  %388 = vmatprep.mubr.bf16.mxu0 0
  %389 = vmatmul.mubr.bf16.gmra.mrb[0].mxu0 %v192
  %v390 = vpop.f32.mrb[0].mxu0
  %v391 = vadd.f32 %v66, %v390
  %v392 = vpop.f32.mrb[0].mxu0
  %v393 = vadd.f32 %v70, %v392
  %v394 = vpop.f32.mrb[0].mxu0
  %v395 = vadd.f32 %v66, %v394
  %v396 = vpop.f32.mrb[0].mxu0
  %v397 = vadd.f32 %v70, %v396
  %398 = vmatprep.mubr.bf16.mxu0 0
  %399 = vmatmul.mubr.bf16.gmra.mrb[0].mxu0 %v195
  %v400 = vpop.f32.mrb[0].mxu0
  %v401 = vadd.f32 %v66, %v400
  %v402 = vpop.f32.mrb[0].mxu0
  %v403 = vadd.f32 %v70, %v402
  %v404 = vpop.f32.mrb[0].mxu0
  %v405 = vadd.f32 %v66, %v404
  %v406 = vpop.f32.mrb[0].mxu0
  %v407 = vadd.f32 %v70, %v406
  %408 = vmatprep.mubr.bf16.mxu0 0
  %409 = vmatmul.mubr.bf16.gmra.mrb[0].mxu0 %v198
  %v410 = vpop.f32.mrb[0].mxu0
  %v411 = vadd.f32 %v66, %v410
  %v412 = vpop.f32.mrb[0].mxu0
  %v413 = vadd.f32 %v70, %v412
  %v414 = vpop.f32.mrb[0].mxu0
  %v415 = vadd.f32 %v66, %v414
  %v416 = vpop.f32.mrb[0].mxu0
  %v417 = vadd.f32 %v70, %v416
  %418 = vdwg.mxu0
  %419 = vmatprep.subr.bf16.mxu0 %v162
  %420 = vmatpush1.bf16.msra.mxu0 %v161
  %421 = vmatprep.subr.bf16.mxu0 %v170
  %422 = vmatpush1.bf16.msra.mxu0 %v169
  %423 = vmatprep.subr.bf16.mxu0 0
  %424 = vmatpush1.bf16.msra.mxu0 0
  %425 = vmatprep.subr.bf16.mxu0 0
  %426 = vmatpush1.bf16.msra.mxu0 0
  %427 = vmatprep.subr.bf16.mxu0 0
  %428 = vmatpush1.bf16.msra.mxu0 0
  %429 = vmatprep.subr.bf16.mxu0 0
  %430 = vmatpush1.bf16.msra.mxu0 0
  %431 = vmatprep.subr.bf16.mxu0 0
  %432 = vmatpush1.bf16.msra.mxu0 0
  %433 = vmatprep.subr.bf16.mxu0 0
  %434 = vmatpush1.bf16.msra.mxu0 0
  %435 = vmatprep.subr.bf16.mxu0 0
  %436 = vmatpush1.bf16.msra.mxu0 0
  %437 = vmatprep.subr.bf16.mxu0 0
  %438 = vmatpush1.bf16.msra.mxu0 0
  %439 = vmatprep.subr.bf16.mxu0 0
  %440 = vmatpush1.bf16.msra.mxu0 0
  %441 = vmatprep.subr.bf16.mxu0 0
  %442 = vmatpush1.bf16.msra.mxu0 0
  %443 = vmatprep.subr.bf16.mxu0 0
  %444 = vmatpush1.bf16.msra.mxu0 0
  %445 = vmatprep.subr.bf16.mxu0 0
  %446 = vmatpush1.bf16.msra.mxu0 0
  %447 = vmatprep.subr.bf16.mxu0 0
  %448 = vmatpush1.bf16.msra.mxu0 0
  %449 = vmatprep.subr.bf16.mxu0 0
  %450 = vmatpush1.bf16.msra.mxu0 0
  %451 = vmatprep.mubr.bf16.mxu0 0
  %452 = vmatmul.mubr.bf16.gmra.mrb[0].mxu0 %v189
  %v453 = vpop.f32.mrb[0].mxu0
  %v454 = vadd.f32 %v74, %v453
  %v455 = vpop.f32.mrb[0].mxu0
  %v456 = vadd.f32 %v78, %v455
  %v457 = vpop.f32.mrb[0].mxu0
  %v458 = vadd.f32 %v74, %v457
  %v459 = vpop.f32.mrb[0].mxu0
  %v460 = vadd.f32 %v78, %v459
  %461 = vmatprep.mubr.bf16.mxu0 0
  %462 = vmatmul.mubr.bf16.gmra.mrb[0].mxu0 %v192
  %v463 = vpop.f32.mrb[0].mxu0
  %v464 = vadd.f32 %v74, %v463
  %v465 = vpop.f32.mrb[0].mxu0
  %v466 = vadd.f32 %v78, %v465
  %v467 = vpop.f32.mrb[0].mxu0
  %v468 = vadd.f32 %v74, %v467
  %v469 = vpop.f32.mrb[0].mxu0
  %v470 = vadd.f32 %v78, %v469
  %471 = vmatprep.mubr.bf16.mxu0 0
  %472 = vmatmul.mubr.bf16.gmra.mrb[0].mxu0 %v195
  %v473 = vpop.f32.mrb[0].mxu0
  %v474 = vadd.f32 %v74, %v473
  %v475 = vpop.f32.mrb[0].mxu0
  %v476 = vadd.f32 %v78, %v475
  %v477 = vpop.f32.mrb[0].mxu0
  %v478 = vadd.f32 %v74, %v477
  %v479 = vpop.f32.mrb[0].mxu0
  %v480 = vadd.f32 %v78, %v479
  %481 = vmatprep.mubr.bf16.mxu0 0
  %482 = vmatmul.mubr.bf16.gmra.mrb[0].mxu0 %v198
  %v483 = vpop.f32.mrb[0].mxu0
  %v484 = vadd.f32 %v74, %v483
  %v485 = vpop.f32.mrb[0].mxu0
  %v486 = vadd.f32 %v78, %v485
  %v487 = vpop.f32.mrb[0].mxu0
  %v488 = vadd.f32 %v74, %v487
  %v489 = vpop.f32.mrb[0].mxu0
  %v490 = vadd.f32 %v78, %v489
  %491 = vdwg.mxu0
  %492 = vst [vmem:[#allocation2] sm:$0xff] %v235
  %493 = vst [vmem:[#allocation2 + $0x8] sm:$0xff] %v237
  %494 = vst [vmem:[#allocation2 + $0x10] sm:$0xff] %v308
  %495 = vst [vmem:[#allocation2 + $0x18] sm:$0xff] %v310
  %496 = vst [vmem:[#allocation2 + $0x20] sm:$0xff] %v381
  %497 = vst [vmem:[#allocation2 + $0x28] sm:$0xff] %v383
  %498 = vst [vmem:[#allocation2 + $0x30] sm:$0xff] %v454
  %499 = vst [vmem:[#allocation2 + $0x38] sm:$0xff] %v456
  %500 = vst [vmem:[#allocation2 + $0x40] sm:$0xff] %v239
  %501 = vst [vmem:[#allocation2 + $0x48] sm:$0xff] %v241
  %502 = vst [vmem:[#allocation2 + $0x50] sm:$0xff] %v312
  %503 = vst [vmem:[#allocation2 + $0x58] sm:$0xff] %v314
  %504 = vst [vmem:[#allocation2 + $0x60] sm:$0xff] %v385
  %505 = vst [vmem:[#allocation2 + $0x68] sm:$0xff] %v387
  %506 = vst [vmem:[#allocation2 + $0x70] sm:$0xff] %v458
  %507 = vst [vmem:[#allocation2 + $0x78] sm:$0xff] %v460
  %508 = vst [vmem:[#allocation2 + $0x80] sm:$0xff] %v245
  %509 = vst [vmem:[#allocation2 + $0x88] sm:$0xff] %v247
  %510 = vst [vmem:[#allocation2 + $0x90] sm:$0xff] %v318
  %511 = vst [vmem:[#allocation2 + $0x98] sm:$0xff] %v320
  %512 = vst [vmem:[#allocation2 + $0xa0] sm:$0xff] %v391
  %513 = vst [vmem:[#allocation2 + $0xa8] sm:$0xff] %v393
  %514 = vst [vmem:[#allocation2 + $0xb0] sm:$0xff] %v464
  %515 = vst [vmem:[#allocation2 + $0xb8] sm:$0xff] %v466
  %516 = vst [vmem:[#allocation2 + $0xc0] sm:$0xff] %v249
  %517 = vst [vmem:[#allocation2 + $0xc8] sm:$0xff] %v251
  %518 = vst [vmem:[#allocation2 + $0xd0] sm:$0xff] %v322
  %519 = vst [vmem:[#allocation2 + $0xd8] sm:$0xff] %v324
  %520 = vst [vmem:[#allocation2 + $0xe0] sm:$0xff] %v395
  %521 = vst [vmem:[#allocation2 + $0xe8] sm:$0xff] %v397
  %522 = vst [vmem:[#allocation2 + $0xf0] sm:$0xff] %v468
  %523 = vst [vmem:[#allocation2 + $0xf8] sm:$0xff] %v470
  %524 = vst [vmem:[#allocation2 + $0x100] sm:$0xff] %v255
  %525 = vst [vmem:[#allocation2 + $0x108] sm:$0xff] %v257
  %526 = vst [vmem:[#allocation2 + $0x110] sm:$0xff] %v328
  %527 = vst [vmem:[#allocation2 + $0x118] sm:$0xff] %v330
  %528 = vst [vmem:[#allocation2 + $0x120] sm:$0xff] %v401
  %529 = vst [vmem:[#allocation2 + $0x128] sm:$0xff] %v403
  %530 = vst [vmem:[#allocation2 + $0x130] sm:$0xff] %v474
  %531 = vst [vmem:[#allocation2 + $0x138] sm:$0xff] %v476
  %532 = vst [vmem:[#allocation2 + $0x140] sm:$0xff] %v259
  %533 = vst [vmem:[#allocation2 + $0x148] sm:$0xff] %v261
  %534 = vst [vmem:[#allocation2 + $0x150] sm:$0xff] %v332
  %535 = vst [vmem:[#allocation2 + $0x158] sm:$0xff] %v334
  %536 = vst [vmem:[#allocation2 + $0x160] sm:$0xff] %v405
  %537 = vst [vmem:[#allocation2 + $0x168] sm:$0xff] %v407
  %538 = vst [vmem:[#allocation2 + $0x170] sm:$0xff] %v478
  %539 = vst [vmem:[#allocation2 + $0x178] sm:$0xff] %v480
  %540 = vst [vmem:[#allocation2 + $0x180] sm:$0xff] %v265
  %541 = vst [vmem:[#allocation2 + $0x188] sm:$0xff] %v267
  %542 = vst [vmem:[#allocation2 + $0x190] sm:$0xff] %v338
  %543 = vst [vmem:[#allocation2 + $0x198] sm:$0xff] %v340
  %544 = vst [vmem:[#allocation2 + $0x1a0] sm:$0xff] %v411
  %545 = vst [vmem:[#allocation2 + $0x1a8] sm:$0xff] %v413
  %546 = vst [vmem:[#allocation2 + $0x1b0] sm:$0xff] %v484
  %547 = vst [vmem:[#allocation2 + $0x1b8] sm:$0xff] %v486
  %548 = vst [vmem:[#allocation2 + $0x1c0] sm:$0xff] %v269
  %549 = vst [vmem:[#allocation2 + $0x1c8] sm:$0xff] %v271
  %550 = vst [vmem:[#allocation2 + $0x1d0] sm:$0xff] %v342
  %551 = vst [vmem:[#allocation2 + $0x1d8] sm:$0xff] %v344
  %552 = vst [vmem:[#allocation2 + $0x1e0] sm:$0xff] %v415
  %553 = vst [vmem:[#allocation2 + $0x1e8] sm:$0xff] %v417
  %554 = vst [vmem:[#allocation2 + $0x1f0] sm:$0xff] %v488
  %555 = vst [vmem:[#allocation2 + $0x1f8] sm:$0xff] %v490
  %v556 = vld [vmem:[#allocation2] sm:$0xff]
  %v557 = vld [vmem:[#allocation2 + $0x8] sm:$0xff]
  %v558 = vld [vmem:[#allocation2 + $0x10] sm:$0xff]
  %v559 = vld [vmem:[#allocation2 + $0x18] sm:$0xff]
  %v560 = vxor.u32 %v556, 2147483648
  %v561 = vxor.u32 %v557, 2147483648
  %v562 = vxor.u32 %v558, 2147483648
  %v563 = vmul.f32 %v560, 1.442695
  %v564 = vpow.pop %v563
  %v565 = vmul.f32 %v561, 1.442695
  %v566 = vpow.pop %v565
  %v567 = vmul.f32 %v562, 1.442695
  %v568 = vpow.pop %v567
  %v569 = vadd.f32 %v564, 1.0
  %v570 = vadd.f32 %v566, 1.0
  %v571 = vadd.f32 %v568, 1.0
  %v572 = vrcp.pop %v569
  %v573 = vmul.f32 1.0, %v572
  %v574 = vrcp.pop %v570
  %v575 = vmul.f32 1.0, %v574
  %v576 = vrcp.pop %v571
  %v577 = vmul.f32 1.0, %v576
  %v578 = vtanh.pop %v559
  %v579 = vmul.f32 %v575, 0.0
  %v580 = vmul.f32 %v573, %v578
  %v581 = vadd.f32 %v579, %v580
  %v582 = vtanh.pop %v581
  %v583 = vmul.f32 %v577, %v582
  %v584 = vld [vmem:[#allocation2 + $0x1e0] sm:$0xff]
  %v585 = vld [vmem:[#allocation2 + $0x1e8] sm:$0xff]
  %v586 = vld [vmem:[#allocation2 + $0x1f0] sm:$0xff]
  %v587 = vld [vmem:[#allocation2 + $0x1f8] sm:$0xff]
  %v588 = vxor.u32 %v584, 2147483648
  %v589 = vxor.u32 %v585, 2147483648
  %v590 = vxor.u32 %v586, 2147483648
  %v591 = vmul.f32 %v588, 1.442695
  %v592 = vpow.pop %v591
  %v593 = vmul.f32 %v589, 1.442695
  %v594 = vpow.pop %v593
  %v595 = vmul.f32 %v590, 1.442695
  %v596 = vpow.pop %v595
  %v597 = vadd.f32 %v592, 1.0
  %v598 = vadd.f32 %v594, 1.0
  %v599 = vadd.f32 %v596, 1.0
  %v600 = vrcp.pop %v597
  %v601 = vmul.f32 1.0, %v600
  %v602 = vrcp.pop %v598
  %v603 = vmul.f32 1.0, %v602
  %v604 = vrcp.pop %v599
  %v605 = vmul.f32 1.0, %v604
  %v606 = vtanh.pop %v587
  %v607 = vmul.f32 %v603, 0.0
  %v608 = vmul.f32 %v601, %v606
  %v609 = vadd.f32 %v607, %v608
  %v610 = vtanh.pop %v609
  %v611 = vmul.f32 %v605, %v610
  %v612 = vld [vmem:[%s2] sm:$0xff]
  %v613 = vld [vmem:[%s2 + $0x8] sm:$0xff]
  %v614 = vld [vmem:[%s2 + $0x10] sm:$0xff]
  %v615 = vld [vmem:[%s2 + $0x18] sm:$0xff]
  %v616 = vld [vmem:[%s2 + $0x20] sm:$0xff]
  %v617 = vld [vmem:[%s2 + $0x28] sm:$0xff]
  %v618 = vld [vmem:[%s2 + $0x30] sm:$0xff]
  %v619 = vld [vmem:[%s2 + $0x38] sm:$0xff]
  %v620 = vld [vmem:[%s2 + $0x40] sm:$0xff]
  %v621 = vld [vmem:[%s2 + $0x48] sm:$0xff]
  %v622 = vld [vmem:[%s2 + $0x50] sm:$0xff]
  %v623 = vld [vmem:[%s2 + $0x58] sm:$0xff]
  %v624 = vld [vmem:[%s2 + $0x60] sm:$0xff]
  %v625 = vld [vmem:[%s2 + $0x68] sm:$0xff]
  %v626 = vld [vmem:[%s2 + $0x70] sm:$0xff]
  %v627 = vld [vmem:[%s2 + $0x78] sm:$0xff]
  %v628 = vld [vmem:[%s2 + $0x80] sm:$0xff]
  %v629 = vld [vmem:[%s2 + $0x88] sm:$0xff]
  %v630 = vld [vmem:[%s2 + $0x90] sm:$0xff]
  %v631 = vld [vmem:[%s2 + $0x98] sm:$0xff]
  %v632 = vld [vmem:[%s2 + $0xa0] sm:$0xff]
  %v633 = vld [vmem:[%s2 + $0xa8] sm:$0xff]
  %v634 = vld [vmem:[%s2 + $0xb0] sm:$0xff]
  %v635 = vld [vmem:[%s2 + $0xb8] sm:$0xff]
  %v636 = vld [vmem:[%s2 + $0xc0] sm:$0xff]
  %v637 = vld [vmem:[%s2 + $0xc8] sm:$0xff]
  %v638 = vld [vmem:[%s2 + $0xd0] sm:$0xff]
  %v639 = vld [vmem:[%s2 + $0xd8] sm:$0xff]
  %v640 = vld [vmem:[%s2 + $0xe0] sm:$0xff]
  %v641 = vld [vmem:[%s2 + $0xe8] sm:$0xff]
  %v642 = vld [vmem:[%s2 + $0xf0] sm:$0xff]
  %v643 = vld [vmem:[%s2 + $0xf8] sm:$0xff]
  %v644 = vld [vmem:[%s3] sm:$0xff]
  %v645 = vld [vmem:[%s3 + $0x8] sm:$0xff]
  %v646 = vld [vmem:[%s3 + $0x10] sm:$0xff]
  %v647 = vld [vmem:[%s3 + $0x18] sm:$0xff]
  %v648 = vld [vmem:[%s3 + $0x20] sm:$0xff]
  %v649 = vld [vmem:[%s3 + $0x28] sm:$0xff]
  %v650 = vld [vmem:[%s3 + $0x30] sm:$0xff]
  %v651 = vld [vmem:[%s3 + $0x38] sm:$0xff]
  %v652 = vld [vmem:[%s3 + $0x40] sm:$0xff]
  %v653 = vld [vmem:[%s3 + $0x48] sm:$0xff]
  %v654 = vld [vmem:[%s3 + $0x50] sm:$0xff]
  %v655 = vld [vmem:[%s3 + $0x58] sm:$0xff]
  %v656 = vld [vmem:[%s3 + $0x60] sm:$0xff]
  %v657 = vld [vmem:[%s3 + $0x68] sm:$0xff]
  %v658 = vld [vmem:[%s3 + $0x70] sm:$0xff]
  %v659 = vld [vmem:[%s3 + $0x78] sm:$0xff]
  %v660 = vld [vmem:[%s3 + $0x80] sm:$0xff]
  %v661 = vld [vmem:[%s3 + $0x88] sm:$0xff]
  %v662 = vld [vmem:[%s3 + $0x90] sm:$0xff]
  %v663 = vld [vmem:[%s3 + $0x98] sm:$0xff]
  %v664 = vld [vmem:[%s3 + $0xa0] sm:$0xff]
  %v665 = vld [vmem:[%s3 + $0xa8] sm:$0xff]
  %v666 = vld [vmem:[%s3 + $0xb0] sm:$0xff]
  %v667 = vld [vmem:[%s3 + $0xb8] sm:$0xff]
  %v668 = vld [vmem:[%s3 + $0xc0] sm:$0xff]
  %v669 = vld [vmem:[%s3 + $0xc8] sm:$0xff]
  %v670 = vld [vmem:[%s3 + $0xd0] sm:$0xff]
  %v671 = vld [vmem:[%s3 + $0xd8] sm:$0xff]
  %v672 = vld [vmem:[%s3 + $0xe0] sm:$0xff]
  %v673 = vld [vmem:[%s3 + $0xe8] sm:$0xff]
  %v674 = vld [vmem:[%s3 + $0xf0] sm:$0xff]
  %v675 = vld [vmem:[%s3 + $0xf8] sm:$0xff]
  %v676 = vpack.c.bf16 %v583, %v583
  %v709 = vunpack.c.l.b16 %v612
  %v710 = vunpack.c.h.b16 %v612
  %v711 = vunpack.c.l.b16 %v613
  %v712 = vunpack.c.h.b16 %v613
  %v713 = vunpack.c.l.b16 %v614
  %v714 = vunpack.c.h.b16 %v614
  %v715 = vunpack.c.l.b16 %v615
  %v716 = vunpack.c.h.b16 %v615
  %v717 = vunpack.c.l.b16 %v616
  %v718 = vunpack.c.h.b16 %v616
  %v719 = vunpack.c.l.b16 %v617
  %v720 = vunpack.c.h.b16 %v617
  %v721 = vunpack.c.l.b16 %v618
  %v722 = vunpack.c.h.b16 %v618
  %v723 = vunpack.c.l.b16 %v619
  %v724 = vunpack.c.h.b16 %v619
  %v725 = vunpack.c.l.b16 %v620
  %v726 = vunpack.c.h.b16 %v620
  %v727 = vunpack.c.l.b16 %v621
  %v728 = vunpack.c.h.b16 %v621
  %v729 = vunpack.c.l.b16 %v622
  %v730 = vunpack.c.h.b16 %v622
  %v731 = vunpack.c.l.b16 %v623
  %v732 = vunpack.c.h.b16 %v623
  %v733 = vunpack.c.l.b16 %v624
  %v734 = vunpack.c.h.b16 %v624
  %v735 = vunpack.c.l.b16 %v625
  %v736 = vunpack.c.h.b16 %v625
  %v737 = vunpack.c.l.b16 %v626
  %v738 = vunpack.c.h.b16 %v626
  %v739 = vunpack.c.l.b16 %v627
  %v740 = vunpack.c.h.b16 %v627
  %v741 = vunpack.c.l.b16 %v628
  %v742 = vunpack.c.h.b16 %v628
  %v743 = vunpack.c.l.b16 %v629
  %v744 = vunpack.c.h.b16 %v629
  %v745 = vunpack.c.l.b16 %v630
  %v746 = vunpack.c.h.b16 %v630
  %v747 = vunpack.c.l.b16 %v631
  %v748 = vunpack.c.h.b16 %v631
  %v749 = vunpack.c.l.b16 %v632
  %v750 = vunpack.c.h.b16 %v632
  %v751 = vunpack.c.l.b16 %v633
  %v752 = vunpack.c.h.b16 %v633
  %v753 = vunpack.c.l.b16 %v634
  %v754 = vunpack.c.h.b16 %v634
  %v755 = vunpack.c.l.b16 %v635
  %v756 = vunpack.c.h.b16 %v635
  %v757 = vunpack.c.l.b16 %v636
  %v758 = vunpack.c.h.b16 %v636
  %v759 = vunpack.c.l.b16 %v637
  %v760 = vunpack.c.h.b16 %v637
  %v761 = vunpack.c.l.b16 %v638
  %v762 = vunpack.c.h.b16 %v638
  %v763 = vunpack.c.l.b16 %v639
  %v764 = vunpack.c.h.b16 %v639
  %v765 = vunpack.c.l.b16 %v640
  %v766 = vunpack.c.h.b16 %v640
  %v767 = vunpack.c.l.b16 %v641
  %v768 = vunpack.c.h.b16 %v641
  %v769 = vunpack.c.l.b16 %v642
  %v770 = vunpack.c.h.b16 %v642
  %v771 = vunpack.c.l.b16 %v643
  %v772 = vunpack.c.h.b16 %v643
  %v773 = vpack.c.b16 %v713, %v709
  %v774 = vpack.c.b16 %v714, %v710
  %v775 = vpack.c.b16 %v715, %v711
  %v776 = vpack.c.b16 %v716, %v712
  %v777 = vpack.c.b16 %v721, %v717
  %v778 = vpack.c.b16 %v722, %v718
  %v779 = vpack.c.b16 %v723, %v719
  %v780 = vpack.c.b16 %v724, %v720
  %v781 = vpack.c.b16 %v729, %v725
  %v782 = vpack.c.b16 %v730, %v726
  %v783 = vpack.c.b16 %v731, %v727
  %v784 = vpack.c.b16 %v732, %v728
  %v785 = vpack.c.b16 %v737, %v733
  %v786 = vpack.c.b16 %v738, %v734
  %v787 = vpack.c.b16 %v739, %v735
  %v788 = vpack.c.b16 %v740, %v736
  %v789 = vpack.c.b16 %v745, %v741
  %v790 = vpack.c.b16 %v746, %v742
  %v791 = vpack.c.b16 %v747, %v743
  %v792 = vpack.c.b16 %v748, %v744
  %v793 = vpack.c.b16 %v753, %v749
  %v794 = vpack.c.b16 %v754, %v750
  %v795 = vpack.c.b16 %v755, %v751
  %v796 = vpack.c.b16 %v756, %v752
  %v797 = vpack.c.b16 %v761, %v757
  %v798 = vpack.c.b16 %v762, %v758
  %v799 = vpack.c.b16 %v763, %v759
  %v800 = vpack.c.b16 %v764, %v760
  %v801 = vpack.c.b16 %v769, %v765
  %v802 = vpack.c.b16 %v770, %v766
  %v803 = vpack.c.b16 %v771, %v767
  %v804 = vpack.c.b16 %v772, %v768
  %837 = vmatprep.subr.bf16.mxu0 %v774
  %838 = vmatpush1.bf16.msra.mxu0 %v773
  %839 = vmatprep.subr.bf16.mxu0 %v778
  %840 = vmatpush1.bf16.msra.mxu0 %v777
  %841 = vmatprep.subr.bf16.mxu0 %v782
  %842 = vmatpush1.bf16.msra.mxu0 %v781
  %843 = vmatprep.subr.bf16.mxu0 %v786
  %844 = vmatpush1.bf16.msra.mxu0 %v785
  %845 = vmatprep.subr.bf16.mxu0 %v790
  %846 = vmatpush1.bf16.msra.mxu0 %v789
  %847 = vmatprep.subr.bf16.mxu0 %v794
  %848 = vmatpush1.bf16.msra.mxu0 %v793
  %849 = vmatprep.subr.bf16.mxu0 %v798
  %850 = vmatpush1.bf16.msra.mxu0 %v797
  %851 = vmatprep.subr.bf16.mxu0 %v802
  %852 = vmatpush1.bf16.msra.mxu0 %v801
  %853 = vmatprep.subr.bf16.mxu0 0
  %854 = vmatpush1.bf16.msra.mxu0 0
  %855 = vmatprep.subr.bf16.mxu0 0
  %856 = vmatpush1.bf16.msra.mxu0 0
  %857 = vmatprep.subr.bf16.mxu0 0
  %858 = vmatpush1.bf16.msra.mxu0 0
  %859 = vmatprep.subr.bf16.mxu0 0
  %860 = vmatpush1.bf16.msra.mxu0 0
  %861 = vmatprep.subr.bf16.mxu0 0
  %862 = vmatpush1.bf16.msra.mxu0 0
  %863 = vmatprep.subr.bf16.mxu0 0
  %864 = vmatpush1.bf16.msra.mxu0 0
  %865 = vmatprep.subr.bf16.mxu0 0
  %866 = vmatpush1.bf16.msra.mxu0 0
  %867 = vmatprep.subr.bf16.mxu0 0
  %868 = vmatpush1.bf16.msra.mxu0 0
  %869 = vmatprep.mubr.bf16.mxu0 0
  %870 = vmatmul.mubr.bf16.gmra.mrb[0].mxu0 %v676
  %v871 = vpop.f32.mrb[0].mxu0
  %v872 = vadd.f32 0.0, %v871
  %v873 = vpop.f32.mrb[0].mxu0
  %v874 = vadd.f32 0.0, %v873
  %v875 = vpop.f32.mrb[0].mxu0
  %v876 = vpop.f32.mrb[0].mxu0
  %877 = vdwg.mxu0
  %878 = vmatprep.subr.bf16.mxu0 %v776
  %879 = vmatpush1.bf16.msra.mxu0 %v775
  %880 = vmatprep.subr.bf16.mxu0 %v780
  %881 = vmatpush1.bf16.msra.mxu0 %v779
  %882 = vmatprep.subr.bf16.mxu0 %v784
  %883 = vmatpush1.bf16.msra.mxu0 %v783
  %884 = vmatprep.subr.bf16.mxu0 %v788
  %885 = vmatpush1.bf16.msra.mxu0 %v787
  %886 = vmatprep.subr.bf16.mxu0 %v792
  %887 = vmatpush1.bf16.msra.mxu0 %v791
  %888 = vmatprep.subr.bf16.mxu0 %v796
  %889 = vmatpush1.bf16.msra.mxu0 %v795
  %890 = vmatprep.subr.bf16.mxu0 %v800
  %891 = vmatpush1.bf16.msra.mxu0 %v799
  %892 = vmatprep.subr.bf16.mxu0 %v804
  %893 = vmatpush1.bf16.msra.mxu0 %v803
  %894 = vmatprep.subr.bf16.mxu0 0
  %895 = vmatpush1.bf16.msra.mxu0 0
  %896 = vmatprep.subr.bf16.mxu0 0
  %897 = vmatpush1.bf16.msra.mxu0 0
  %898 = vmatprep.subr.bf16.mxu0 0
  %899 = vmatpush1.bf16.msra.mxu0 0
  %900 = vmatprep.subr.bf16.mxu0 0
  %901 = vmatpush1.bf16.msra.mxu0 0
  %902 = vmatprep.subr.bf16.mxu0 0
  %903 = vmatpush1.bf16.msra.mxu0 0
  %904 = vmatprep.subr.bf16.mxu0 0
  %905 = vmatpush1.bf16.msra.mxu0 0
  %906 = vmatprep.subr.bf16.mxu0 0
  %907 = vmatpush1.bf16.msra.mxu0 0
  %908 = vmatprep.subr.bf16.mxu0 0
  %909 = vmatpush1.bf16.msra.mxu0 0
  %910 = vmatprep.mubr.bf16.mxu0 0
  %911 = vmatmul.mubr.bf16.gmra.mrb[0].mxu0 %v676
  %v912 = vpop.f32.mrb[0].mxu0
  %v913 = vadd.f32 0.0, %v912
  %v914 = vpop.f32.mrb[0].mxu0
  %v915 = vadd.f32 0.0, %v914
  %v916 = vpop.f32.mrb[0].mxu0
  %v917 = vpop.f32.mrb[0].mxu0
  %918 = vdwg.mxu0
  %v919 = vpack.c.bf16 %v611, %v611
  %v952 = vunpack.c.l.b16 %v644
  %v953 = vunpack.c.h.b16 %v644
  %v954 = vunpack.c.l.b16 %v645
  %v955 = vunpack.c.h.b16 %v645
  %v956 = vunpack.c.l.b16 %v646
  %v957 = vunpack.c.h.b16 %v646
  %v958 = vunpack.c.l.b16 %v647
  %v959 = vunpack.c.h.b16 %v647
  %v960 = vunpack.c.l.b16 %v648
  %v961 = vunpack.c.h.b16 %v648
  %v962 = vunpack.c.l.b16 %v649
  %v963 = vunpack.c.h.b16 %v649
  %v964 = vunpack.c.l.b16 %v650
  %v965 = vunpack.c.h.b16 %v650
  %v966 = vunpack.c.l.b16 %v651
  %v967 = vunpack.c.h.b16 %v651
  %v968 = vunpack.c.l.b16 %v652
  %v969 = vunpack.c.h.b16 %v652
  %v970 = vunpack.c.l.b16 %v653
  %v971 = vunpack.c.h.b16 %v653
  %v972 = vunpack.c.l.b16 %v654
  %v973 = vunpack.c.h.b16 %v654
  %v974 = vunpack.c.l.b16 %v655
  %v975 = vunpack.c.h.b16 %v655
  %v976 = vunpack.c.l.b16 %v656
  %v977 = vunpack.c.h.b16 %v656
  %v978 = vunpack.c.l.b16 %v657
  %v979 = vunpack.c.h.b16 %v657
  %v980 = vunpack.c.l.b16 %v658
  %v981 = vunpack.c.h.b16 %v658
  %v982 = vunpack.c.l.b16 %v659
  %v983 = vunpack.c.h.b16 %v659
  %v984 = vunpack.c.l.b16 %v660
  %v985 = vunpack.c.h.b16 %v660
  %v986 = vunpack.c.l.b16 %v661
  %v987 = vunpack.c.h.b16 %v661
  %v988 = vunpack.c.l.b16 %v662
  %v989 = vunpack.c.h.b16 %v662
  %v990 = vunpack.c.l.b16 %v663
  %v991 = vunpack.c.h.b16 %v663
  %v992 = vunpack.c.l.b16 %v664
  %v993 = vunpack.c.h.b16 %v664
  %v994 = vunpack.c.l.b16 %v665
  %v995 = vunpack.c.h.b16 %v665
  %v996 = vunpack.c.l.b16 %v666
  %v997 = vunpack.c.h.b16 %v666
  %v998 = vunpack.c.l.b16 %v667
  %v999 = vunpack.c.h.b16 %v667
  %v1000 = vunpack.c.l.b16 %v668
  %v1001 = vunpack.c.h.b16 %v668
  %v1002 = vunpack.c.l.b16 %v669
  %v1003 = vunpack.c.h.b16 %v669
  %v1004 = vunpack.c.l.b16 %v670
  %v1005 = vunpack.c.h.b16 %v670
  %v1006 = vunpack.c.l.b16 %v671
  %v1007 = vunpack.c.h.b16 %v671
  %v1008 = vunpack.c.l.b16 %v672
  %v1009 = vunpack.c.h.b16 %v672
  %v1010 = vunpack.c.l.b16 %v673
  %v1011 = vunpack.c.h.b16 %v673
  %v1012 = vunpack.c.l.b16 %v674
  %v1013 = vunpack.c.h.b16 %v674
  %v1014 = vunpack.c.l.b16 %v675
  %v1015 = vunpack.c.h.b16 %v675
  %v1016 = vpack.c.b16 %v956, %v952
  %v1017 = vpack.c.b16 %v957, %v953
  %v1018 = vpack.c.b16 %v958, %v954
  %v1019 = vpack.c.b16 %v959, %v955
  %v1020 = vpack.c.b16 %v964, %v960
  %v1021 = vpack.c.b16 %v965, %v961
  %v1022 = vpack.c.b16 %v966, %v962
  %v1023 = vpack.c.b16 %v967, %v963
  %v1024 = vpack.c.b16 %v972, %v968
  %v1025 = vpack.c.b16 %v973, %v969
  %v1026 = vpack.c.b16 %v974, %v970
  %v1027 = vpack.c.b16 %v975, %v971
  %v1028 = vpack.c.b16 %v980, %v976
  %v1029 = vpack.c.b16 %v981, %v977
  %v1030 = vpack.c.b16 %v982, %v978
  %v1031 = vpack.c.b16 %v983, %v979
  %v1032 = vpack.c.b16 %v988, %v984
  %v1033 = vpack.c.b16 %v989, %v985
  %v1034 = vpack.c.b16 %v990, %v986
  %v1035 = vpack.c.b16 %v991, %v987
  %v1036 = vpack.c.b16 %v996, %v992
  %v1037 = vpack.c.b16 %v997, %v993
  %v1038 = vpack.c.b16 %v998, %v994
  %v1039 = vpack.c.b16 %v999, %v995
  %v1040 = vpack.c.b16 %v1004, %v1000
  %v1041 = vpack.c.b16 %v1005, %v1001
  %v1042 = vpack.c.b16 %v1006, %v1002
  %v1043 = vpack.c.b16 %v1007, %v1003
  %v1044 = vpack.c.b16 %v1012, %v1008
  %v1045 = vpack.c.b16 %v1013, %v1009
  %v1046 = vpack.c.b16 %v1014, %v1010
  %v1047 = vpack.c.b16 %v1015, %v1011
  %1080 = vmatprep.subr.bf16.mxu0 %v1017
  %1081 = vmatpush1.bf16.msra.mxu0 %v1016
  %1082 = vmatprep.subr.bf16.mxu0 %v1021
  %1083 = vmatpush1.bf16.msra.mxu0 %v1020
  %1084 = vmatprep.subr.bf16.mxu0 %v1025
  %1085 = vmatpush1.bf16.msra.mxu0 %v1024
  %1086 = vmatprep.subr.bf16.mxu0 %v1029
  %1087 = vmatpush1.bf16.msra.mxu0 %v1028
  %1088 = vmatprep.subr.bf16.mxu0 %v1033
  %1089 = vmatpush1.bf16.msra.mxu0 %v1032
  %1090 = vmatprep.subr.bf16.mxu0 %v1037
  %1091 = vmatpush1.bf16.msra.mxu0 %v1036
  %1092 = vmatprep.subr.bf16.mxu0 %v1041
  %1093 = vmatpush1.bf16.msra.mxu0 %v1040
  %1094 = vmatprep.subr.bf16.mxu0 %v1045
  %1095 = vmatpush1.bf16.msra.mxu0 %v1044
  %1096 = vmatprep.subr.bf16.mxu0 0
  %1097 = vmatpush1.bf16.msra.mxu0 0
  %1098 = vmatprep.subr.bf16.mxu0 0
  %1099 = vmatpush1.bf16.msra.mxu0 0
  %1100 = vmatprep.subr.bf16.mxu0 0
  %1101 = vmatpush1.bf16.msra.mxu0 0
  %1102 = vmatprep.subr.bf16.mxu0 0
  %1103 = vmatpush1.bf16.msra.mxu0 0
  %1104 = vmatprep.subr.bf16.mxu0 0
  %1105 = vmatpush1.bf16.msra.mxu0 0
  %1106 = vmatprep.subr.bf16.mxu0 0
  %1107 = vmatpush1.bf16.msra.mxu0 0
  %1108 = vmatprep.subr.bf16.mxu0 0
  %1109 = vmatpush1.bf16.msra.mxu0 0
  %1110 = vmatprep.subr.bf16.mxu0 0
  %1111 = vmatpush1.bf16.msra.mxu0 0
  %1112 = vmatprep.mubr.bf16.mxu0 0
  %1113 = vmatmul.mubr.bf16.gmra.mrb[0].mxu0 %v919
  %v1114 = vpop.f32.mrb[0].mxu0
  %v1115 = vadd.f32 0.0, %v1114
  %v1116 = vpop.f32.mrb[0].mxu0
  %v1117 = vadd.f32 0.0, %v1116
  %v1118 = vpop.f32.mrb[0].mxu0
  %v1119 = vpop.f32.mrb[0].mxu0
  %1120 = vdwg.mxu0
  %1121 = vmatprep.subr.bf16.mxu0 %v1019
  %1122 = vmatpush1.bf16.msra.mxu0 %v1018
  %1123 = vmatprep.subr.bf16.mxu0 %v1023
  %1124 = vmatpush1.bf16.msra.mxu0 %v1022
  %1125 = vmatprep.subr.bf16.mxu0 %v1027
  %1126 = vmatpush1.bf16.msra.mxu0 %v1026
  %1127 = vmatprep.subr.bf16.mxu0 %v1031
  %1128 = vmatpush1.bf16.msra.mxu0 %v1030
  %1129 = vmatprep.subr.bf16.mxu0 %v1035
  %1130 = vmatpush1.bf16.msra.mxu0 %v1034
  %1131 = vmatprep.subr.bf16.mxu0 %v1039
  %1132 = vmatpush1.bf16.msra.mxu0 %v1038
  %1133 = vmatprep.subr.bf16.mxu0 %v1043
  %1134 = vmatpush1.bf16.msra.mxu0 %v1042
  %1135 = vmatprep.subr.bf16.mxu0 %v1047
  %1136 = vmatpush1.bf16.msra.mxu0 %v1046
  %1137 = vmatprep.subr.bf16.mxu0 0
  %1138 = vmatpush1.bf16.msra.mxu0 0
  %1139 = vmatprep.subr.bf16.mxu0 0
  %1140 = vmatpush1.bf16.msra.mxu0 0
  %1141 = vmatprep.subr.bf16.mxu0 0
  %1142 = vmatpush1.bf16.msra.mxu0 0
  %1143 = vmatprep.subr.bf16.mxu0 0
  %1144 = vmatpush1.bf16.msra.mxu0 0
  %1145 = vmatprep.subr.bf16.mxu0 0
  %1146 = vmatpush1.bf16.msra.mxu0 0
  %1147 = vmatprep.subr.bf16.mxu0 0
  %1148 = vmatpush1.bf16.msra.mxu0 0
  %1149 = vmatprep.subr.bf16.mxu0 0
  %1150 = vmatpush1.bf16.msra.mxu0 0
  %1151 = vmatprep.subr.bf16.mxu0 0
  %1152 = vmatpush1.bf16.msra.mxu0 0
  %1153 = vmatprep.mubr.bf16.mxu0 0
  %1154 = vmatmul.mubr.bf16.gmra.mrb[0].mxu0 %v919
  %v1155 = vpop.f32.mrb[0].mxu0
  %v1156 = vadd.f32 0.0, %v1155
  %v1157 = vpop.f32.mrb[0].mxu0
  %v1158 = vadd.f32 0.0, %v1157
  %v1159 = vpop.f32.mrb[0].mxu0
  %v1160 = vpop.f32.mrb[0].mxu0
  %1161 = vdwg.mxu0
  %s1162 = smul.u32 1, 8
  %s1163 = smul.addr %s1162, 8
  %s1164 = scalar_lea.vmem [#allocation2], %s1163
  %v1165 = vld [vmem:[%s1164] sm:$0xff]
  %v1166 = vld [vmem:[%s1164 + $0x8] sm:$0xff]
  %v1167 = vld [vmem:[%s1164 + $0x10] sm:$0xff]
  %v1168 = vld [vmem:[%s1164 + $0x18] sm:$0xff]
  %v1169 = vadd.f32 %v1165, %v872
  %v1170 = vadd.f32 %v1166, %v874
  %v1171 = vadd.f32 %v1167, %v913
  %v1172 = vadd.f32 %v1168, %v915
  %v1173 = vxor.u32 %v1169, 2147483648
  %v1174 = vxor.u32 %v1170, 2147483648
  %v1175 = vxor.u32 %v1171, 2147483648
  %v1176 = vmul.f32 %v1173, 1.442695
  %v1177 = vpow.pop %v1176
  %v1178 = vmul.f32 %v1174, 1.442695
  %v1179 = vpow.pop %v1178
  %v1180 = vmul.f32 %v1175, 1.442695
  %v1181 = vpow.pop %v1180
  %v1182 = vadd.f32 %v1177, 1.0
  %v1183 = vadd.f32 %v1179, 1.0
  %v1184 = vadd.f32 %v1181, 1.0
  %v1185 = vrcp.pop %v1182
  %v1186 = vmul.f32 1.0, %v1185
  %v1187 = vrcp.pop %v1183
  %v1188 = vmul.f32 1.0, %v1187
  %v1189 = vrcp.pop %v1184
  %v1190 = vmul.f32 1.0, %v1189
  %v1191 = vtanh.pop %v1172
  %v1192 = vmul.f32 %v1188, %v581
  %v1193 = vmul.f32 %v1186, %v1191
  %v1194 = vadd.f32 %v1192, %v1193
  %v1195 = vtanh.pop %v1194
  %v1196 = vmul.f32 %v1190, %v1195
  %s1197 = smul.u32 6, 8
  %s1198 = smul.addr %s1197, 8
  %s1199 = scalar_lea.vmem [#allocation2], %s1198
  %v1200 = vld [vmem:[%s1199 + $0x20] sm:$0xff]
  %v1201 = vld [vmem:[%s1199 + $0x28] sm:$0xff]
  %v1202 = vld [vmem:[%s1199 + $0x30] sm:$0xff]
  %v1203 = vld [vmem:[%s1199 + $0x38] sm:$0xff]
  %v1204 = vadd.f32 %v1200, %v1115
  %v1205 = vadd.f32 %v1201, %v1117
  %v1206 = vadd.f32 %v1202, %v1156
  %v1207 = vadd.f32 %v1203, %v1158
  %v1208 = vxor.u32 %v1204, 2147483648
  %v1209 = vxor.u32 %v1205, 2147483648
  %v1210 = vxor.u32 %v1206, 2147483648
  %v1211 = vmul.f32 %v1208, 1.442695
  %v1212 = vpow.pop %v1211
  %v1213 = vmul.f32 %v1209, 1.442695
  %v1214 = vpow.pop %v1213
  %v1215 = vmul.f32 %v1210, 1.442695
  %v1216 = vpow.pop %v1215
  %v1217 = vadd.f32 %v1212, 1.0
  %v1218 = vadd.f32 %v1214, 1.0
  %v1219 = vadd.f32 %v1216, 1.0
  %v1220 = vrcp.pop %v1217
  %v1221 = vmul.f32 1.0, %v1220
  %v1222 = vrcp.pop %v1218
  %v1223 = vmul.f32 1.0, %v1222
  %v1224 = vrcp.pop %v1219
  %v1225 = vmul.f32 1.0, %v1224
  %v1226 = vtanh.pop %v1207
  %v1227 = vmul.f32 %v1223, %v609
  %v1228 = vmul.f32 %v1221, %v1226
  %v1229 = vadd.f32 %v1227, %v1228
  %v1230 = vtanh.pop %v1229
  %v1231 = vmul.f32 %v1225, %v1230
  %v1232 = vpack.c.bf16 %v1196, %v1196
  %1233 = vmatprep.subr.bf16.mxu0 %v774
  %1234 = vmatpush1.bf16.msra.mxu0 %v773
  %1235 = vmatprep.subr.bf16.mxu0 %v778
  %1236 = vmatpush1.bf16.msra.mxu0 %v777
  %1237 = vmatprep.subr.bf16.mxu0 %v782
  %1238 = vmatpush1.bf16.msra.mxu0 %v781
  %1239 = vmatprep.subr.bf16.mxu0 %v786
  %1240 = vmatpush1.bf16.msra.mxu0 %v785
  %1241 = vmatprep.subr.bf16.mxu0 %v790
  %1242 = vmatpush1.bf16.msra.mxu0 %v789
  %1243 = vmatprep.subr.bf16.mxu0 %v794
  %1244 = vmatpush1.bf16.msra.mxu0 %v793
  %1245 = vmatprep.subr.bf16.mxu0 %v798
  %1246 = vmatpush1.bf16.msra.mxu0 %v797
  %1247 = vmatprep.subr.bf16.mxu0 %v802
  %1248 = vmatpush1.bf16.msra.mxu0 %v801
  %1249 = vmatprep.subr.bf16.mxu0 0
  %1250 = vmatpush1.bf16.msra.mxu0 0
  %1251 = vmatprep.subr.bf16.mxu0 0
  %1252 = vmatpush1.bf16.msra.mxu0 0
  %1253 = vmatprep.subr.bf16.mxu0 0
  %1254 = vmatpush1.bf16.msra.mxu0 0
  %1255 = vmatprep.subr.bf16.mxu0 0
  %1256 = vmatpush1.bf16.msra.mxu0 0
  %1257 = vmatprep.subr.bf16.mxu0 0
  %1258 = vmatpush1.bf16.msra.mxu0 0
  %1259 = vmatprep.subr.bf16.mxu0 0
  %1260 = vmatpush1.bf16.msra.mxu0 0
  %1261 = vmatprep.subr.bf16.mxu0 0
  %1262 = vmatpush1.bf16.msra.mxu0 0
  %1263 = vmatprep.subr.bf16.mxu0 0
  %1264 = vmatpush1.bf16.msra.mxu0 0
  %1265 = vmatprep.mubr.bf16.mxu0 0
  %1266 = vmatmul.mubr.bf16.gmra.mrb[0].mxu0 %v1232
  %v1267 = vpop.f32.mrb[0].mxu0
  %v1268 = vadd.f32 0.0, %v1267
  %v1269 = vpop.f32.mrb[0].mxu0
  %v1270 = vadd.f32 0.0, %v1269
  %v1271 = vpop.f32.mrb[0].mxu0
  %v1272 = vpop.f32.mrb[0].mxu0
  %1273 = vdwg.mxu0
  %1274 = vmatprep.subr.bf16.mxu0 %v776
  %1275 = vmatpush1.bf16.msra.mxu0 %v775
  %1276 = vmatprep.subr.bf16.mxu0 %v780
  %1277 = vmatpush1.bf16.msra.mxu0 %v779
  %1278 = vmatprep.subr.bf16.mxu0 %v784
  %1279 = vmatpush1.bf16.msra.mxu0 %v783
  %1280 = vmatprep.subr.bf16.mxu0 %v788
  %1281 = vmatpush1.bf16.msra.mxu0 %v787
  %1282 = vmatprep.subr.bf16.mxu0 %v792
  %1283 = vmatpush1.bf16.msra.mxu0 %v791
  %1284 = vmatprep.subr.bf16.mxu0 %v796
  %1285 = vmatpush1.bf16.msra.mxu0 %v795
  %1286 = vmatprep.subr.bf16.mxu0 %v800
  %1287 = vmatpush1.bf16.msra.mxu0 %v799
  %1288 = vmatprep.subr.bf16.mxu0 %v804
  %1289 = vmatpush1.bf16.msra.mxu0 %v803
  %1290 = vmatprep.subr.bf16.mxu0 0
  %1291 = vmatpush1.bf16.msra.mxu0 0
  %1292 = vmatprep.subr.bf16.mxu0 0
  %1293 = vmatpush1.bf16.msra.mxu0 0
  %1294 = vmatprep.subr.bf16.mxu0 0
  %1295 = vmatpush1.bf16.msra.mxu0 0
  %1296 = vmatprep.subr.bf16.mxu0 0
  %1297 = vmatpush1.bf16.msra.mxu0 0
  %1298 = vmatprep.subr.bf16.mxu0 0
  %1299 = vmatpush1.bf16.msra.mxu0 0
  %1300 = vmatprep.subr.bf16.mxu0 0
  %1301 = vmatpush1.bf16.msra.mxu0 0
  %1302 = vmatprep.subr.bf16.mxu0 0
  %1303 = vmatpush1.bf16.msra.mxu0 0
  %1304 = vmatprep.subr.bf16.mxu0 0
  %1305 = vmatpush1.bf16.msra.mxu0 0
  %1306 = vmatprep.mubr.bf16.mxu0 0
  %1307 = vmatmul.mubr.bf16.gmra.mrb[0].mxu0 %v1232
  %v1308 = vpop.f32.mrb[0].mxu0
  %v1309 = vadd.f32 0.0, %v1308
  %v1310 = vpop.f32.mrb[0].mxu0
  %v1311 = vadd.f32 0.0, %v1310
  %v1312 = vpop.f32.mrb[0].mxu0
  %v1313 = vpop.f32.mrb[0].mxu0
  %1314 = vdwg.mxu0
  %v1315 = vpack.c.bf16 %v1231, %v1231
  %1316 = vmatprep.subr.bf16.mxu0 %v1017
  %1317 = vmatpush1.bf16.msra.mxu0 %v1016
  %1318 = vmatprep.subr.bf16.mxu0 %v1021
  %1319 = vmatpush1.bf16.msra.mxu0 %v1020
  %1320 = vmatprep.subr.bf16.mxu0 %v1025
  %1321 = vmatpush1.bf16.msra.mxu0 %v1024
  %1322 = vmatprep.subr.bf16.mxu0 %v1029
  %1323 = vmatpush1.bf16.msra.mxu0 %v1028
  %1324 = vmatprep.subr.bf16.mxu0 %v1033
  %1325 = vmatpush1.bf16.msra.mxu0 %v1032
  %1326 = vmatprep.subr.bf16.mxu0 %v1037
  %1327 = vmatpush1.bf16.msra.mxu0 %v1036
  %1328 = vmatprep.subr.bf16.mxu0 %v1041
  %1329 = vmatpush1.bf16.msra.mxu0 %v1040
  %1330 = vmatprep.subr.bf16.mxu0 %v1045
  %1331 = vmatpush1.bf16.msra.mxu0 %v1044
  %1332 = vmatprep.subr.bf16.mxu0 0
  %1333 = vmatpush1.bf16.msra.mxu0 0
  %1334 = vmatprep.subr.bf16.mxu0 0
  %1335 = vmatpush1.bf16.msra.mxu0 0
  %1336 = vmatprep.subr.bf16.mxu0 0
  %1337 = vmatpush1.bf16.msra.mxu0 0
  %1338 = vmatprep.subr.bf16.mxu0 0
  %1339 = vmatpush1.bf16.msra.mxu0 0
  %1340 = vmatprep.subr.bf16.mxu0 0
  %1341 = vmatpush1.bf16.msra.mxu0 0
  %1342 = vmatprep.subr.bf16.mxu0 0
  %1343 = vmatpush1.bf16.msra.mxu0 0
  %1344 = vmatprep.subr.bf16.mxu0 0
  %1345 = vmatpush1.bf16.msra.mxu0 0
  %1346 = vmatprep.subr.bf16.mxu0 0
  %1347 = vmatpush1.bf16.msra.mxu0 0
  %1348 = vmatprep.mubr.bf16.mxu0 0
  %1349 = vmatmul.mubr.bf16.gmra.mrb[0].mxu0 %v1315
  %v1350 = vpop.f32.mrb[0].mxu0
  %v1351 = vadd.f32 0.0, %v1350
  %v1352 = vpop.f32.mrb[0].mxu0
  %v1353 = vadd.f32 0.0, %v1352
  %v1354 = vpop.f32.mrb[0].mxu0
  %v1355 = vpop.f32.mrb[0].mxu0
  %1356 = vdwg.mxu0
  %1357 = vmatprep.subr.bf16.mxu0 %v1019
  %1358 = vmatpush1.bf16.msra.mxu0 %v1018
  %1359 = vmatprep.subr.bf16.mxu0 %v1023
  %1360 = vmatpush1.bf16.msra.mxu0 %v1022
  %1361 = vmatprep.subr.bf16.mxu0 %v1027
  %1362 = vmatpush1.bf16.msra.mxu0 %v1026
  %1363 = vmatprep.subr.bf16.mxu0 %v1031
  %1364 = vmatpush1.bf16.msra.mxu0 %v1030
  %1365 = vmatprep.subr.bf16.mxu0 %v1035
  %1366 = vmatpush1.bf16.msra.mxu0 %v1034
  %1367 = vmatprep.subr.bf16.mxu0 %v1039
  %1368 = vmatpush1.bf16.msra.mxu0 %v1038
  %1369 = vmatprep.subr.bf16.mxu0 %v1043
  %1370 = vmatpush1.bf16.msra.mxu0 %v1042
  %1371 = vmatprep.subr.bf16.mxu0 %v1047
  %1372 = vmatpush1.bf16.msra.mxu0 %v1046
  %1373 = vmatprep.subr.bf16.mxu0 0
  %1374 = vmatpush1.bf16.msra.mxu0 0
  %1375 = vmatprep.subr.bf16.mxu0 0
  %1376 = vmatpush1.bf16.msra.mxu0 0
  %1377 = vmatprep.subr.bf16.mxu0 0
  %1378 = vmatpush1.bf16.msra.mxu0 0
  %1379 = vmatprep.subr.bf16.mxu0 0
  %1380 = vmatpush1.bf16.msra.mxu0 0
  %1381 = vmatprep.subr.bf16.mxu0 0
  %1382 = vmatpush1.bf16.msra.mxu0 0
  %1383 = vmatprep.subr.bf16.mxu0 0
  %1384 = vmatpush1.bf16.msra.mxu0 0
  %1385 = vmatprep.subr.bf16.mxu0 0
  %1386 = vmatpush1.bf16.msra.mxu0 0
  %1387 = vmatprep.subr.bf16.mxu0 0
  %1388 = vmatpush1.bf16.msra.mxu0 0
  %1389 = vmatprep.mubr.bf16.mxu0 0
  %1390 = vmatmul.mubr.bf16.gmra.mrb[0].mxu0 %v1315
  %v1391 = vpop.f32.mrb[0].mxu0
  %v1392 = vadd.f32 0.0, %v1391
  %v1393 = vpop.f32.mrb[0].mxu0
  %v1394 = vadd.f32 0.0, %v1393
  %v1395 = vpop.f32.mrb[0].mxu0
  %v1396 = vpop.f32.mrb[0].mxu0
  %1397 = vdwg.mxu0
  %s1398 = smul.u32 2, 8
  %s1399 = smul.addr %s1398, 8
  %s1400 = scalar_lea.vmem [#allocation2], %s1399
  %v1401 = vld [vmem:[%s1400] sm:$0xff]
  %v1402 = vld [vmem:[%s1400 + $0x8] sm:$0xff]
  %v1403 = vld [vmem:[%s1400 + $0x10] sm:$0xff]
  %v1404 = vld [vmem:[%s1400 + $0x18] sm:$0xff]
  %v1405 = vadd.f32 %v1401, %v1268
  %v1406 = vadd.f32 %v1402, %v1270
  %v1407 = vadd.f32 %v1403, %v1309
  %v1408 = vadd.f32 %v1404, %v1311
  %v1409 = vxor.u32 %v1405, 2147483648
  %v1410 = vxor.u32 %v1406, 2147483648
  %v1411 = vxor.u32 %v1407, 2147483648
  %v1412 = vmul.f32 %v1409, 1.442695
  %v1413 = vpow.pop %v1412
  %v1414 = vmul.f32 %v1410, 1.442695
  %v1415 = vpow.pop %v1414
  %v1416 = vmul.f32 %v1411, 1.442695
  %v1417 = vpow.pop %v1416
  %v1418 = vadd.f32 %v1413, 1.0
  %v1419 = vadd.f32 %v1415, 1.0
  %v1420 = vadd.f32 %v1417, 1.0
  %v1421 = vrcp.pop %v1418
  %v1422 = vmul.f32 1.0, %v1421
  %v1423 = vrcp.pop %v1419
  %v1424 = vmul.f32 1.0, %v1423
  %v1425 = vrcp.pop %v1420
  %v1426 = vmul.f32 1.0, %v1425
  %v1427 = vtanh.pop %v1408
  %v1428 = vmul.f32 %v1424, %v1194
  %v1429 = vmul.f32 %v1422, %v1427
  %v1430 = vadd.f32 %v1428, %v1429
  %v1431 = vtanh.pop %v1430
  %v1432 = vmul.f32 %v1426, %v1431
  %s1433 = smul.u32 5, 8
  %s1434 = smul.addr %s1433, 8
  %s1435 = scalar_lea.vmem [#allocation2], %s1434
  %v1436 = vld [vmem:[%s1435 + $0x20] sm:$0xff]
  %v1437 = vld [vmem:[%s1435 + $0x28] sm:$0xff]
  %v1438 = vld [vmem:[%s1435 + $0x30] sm:$0xff]
  %v1439 = vld [vmem:[%s1435 + $0x38] sm:$0xff]
  %v1440 = vadd.f32 %v1436, %v1351
  %v1441 = vadd.f32 %v1437, %v1353
  %v1442 = vadd.f32 %v1438, %v1392
  %v1443 = vadd.f32 %v1439, %v1394
  %v1444 = vxor.u32 %v1440, 2147483648
  %v1445 = vxor.u32 %v1441, 2147483648
  %v1446 = vxor.u32 %v1442, 2147483648
  %v1447 = vmul.f32 %v1444, 1.442695
  %v1448 = vpow.pop %v1447
  %v1449 = vmul.f32 %v1445, 1.442695
  %v1450 = vpow.pop %v1449
  %v1451 = vmul.f32 %v1446, 1.442695
  %v1452 = vpow.pop %v1451
  %v1453 = vadd.f32 %v1448, 1.0
  %v1454 = vadd.f32 %v1450, 1.0
  %v1455 = vadd.f32 %v1452, 1.0
  %v1456 = vrcp.pop %v1453
  %v1457 = vmul.f32 1.0, %v1456
  %v1458 = vrcp.pop %v1454
  %v1459 = vmul.f32 1.0, %v1458
  %v1460 = vrcp.pop %v1455
  %v1461 = vmul.f32 1.0, %v1460
  %v1462 = vtanh.pop %v1443
  %v1463 = vmul.f32 %v1459, %v1229
  %v1464 = vmul.f32 %v1457, %v1462
  %v1465 = vadd.f32 %v1463, %v1464
  %v1466 = vtanh.pop %v1465
  %v1467 = vmul.f32 %v1461, %v1466
  %v1468 = vpack.c.bf16 %v1432, %v1432
  %1469 = vmatprep.subr.bf16.mxu0 %v774
  %1470 = vmatpush1.bf16.msra.mxu0 %v773
  %1471 = vmatprep.subr.bf16.mxu0 %v778
  %1472 = vmatpush1.bf16.msra.mxu0 %v777
  %1473 = vmatprep.subr.bf16.mxu0 %v782
  %1474 = vmatpush1.bf16.msra.mxu0 %v781
  %1475 = vmatprep.subr.bf16.mxu0 %v786
  %1476 = vmatpush1.bf16.msra.mxu0 %v785
  %1477 = vmatprep.subr.bf16.mxu0 %v790
  %1478 = vmatpush1.bf16.msra.mxu0 %v789
  %1479 = vmatprep.subr.bf16.mxu0 %v794
  %1480 = vmatpush1.bf16.msra.mxu0 %v793
  %1481 = vmatprep.subr.bf16.mxu0 %v798
  %1482 = vmatpush1.bf16.msra.mxu0 %v797
  %1483 = vmatprep.subr.bf16.mxu0 %v802
  %1484 = vmatpush1.bf16.msra.mxu0 %v801
  %1485 = vmatprep.subr.bf16.mxu0 0
  %1486 = vmatpush1.bf16.msra.mxu0 0
  %1487 = vmatprep.subr.bf16.mxu0 0
  %1488 = vmatpush1.bf16.msra.mxu0 0
  %1489 = vmatprep.subr.bf16.mxu0 0
  %1490 = vmatpush1.bf16.msra.mxu0 0
  %1491 = vmatprep.subr.bf16.mxu0 0
  %1492 = vmatpush1.bf16.msra.mxu0 0
  %1493 = vmatprep.subr.bf16.mxu0 0
  %1494 = vmatpush1.bf16.msra.mxu0 0
  %1495 = vmatprep.subr.bf16.mxu0 0
  %1496 = vmatpush1.bf16.msra.mxu0 0
  %1497 = vmatprep.subr.bf16.mxu0 0
  %1498 = vmatpush1.bf16.msra.mxu0 0
  %1499 = vmatprep.subr.bf16.mxu0 0
  %1500 = vmatpush1.bf16.msra.mxu0 0
  %1501 = vmatprep.mubr.bf16.mxu0 0
  %1502 = vmatmul.mubr.bf16.gmra.mrb[0].mxu0 %v1468
  %v1503 = vpop.f32.mrb[0].mxu0
  %v1504 = vadd.f32 0.0, %v1503
  %v1505 = vpop.f32.mrb[0].mxu0
  %v1506 = vadd.f32 0.0, %v1505
  %v1507 = vpop.f32.mrb[0].mxu0
  %v1508 = vpop.f32.mrb[0].mxu0
  %1509 = vdwg.mxu0
  %1510 = vmatprep.subr.bf16.mxu0 %v776
  %1511 = vmatpush1.bf16.msra.mxu0 %v775
  %1512 = vmatprep.subr.bf16.mxu0 %v780
  %1513 = vmatpush1.bf16.msra.mxu0 %v779
  %1514 = vmatprep.subr.bf16.mxu0 %v784
  %1515 = vmatpush1.bf16.msra.mxu0 %v783
  %1516 = vmatprep.subr.bf16.mxu0 %v788
  %1517 = vmatpush1.bf16.msra.mxu0 %v787
  %1518 = vmatprep.subr.bf16.mxu0 %v792
  %1519 = vmatpush1.bf16.msra.mxu0 %v791
  %1520 = vmatprep.subr.bf16.mxu0 %v796
  %1521 = vmatpush1.bf16.msra.mxu0 %v795
  %1522 = vmatprep.subr.bf16.mxu0 %v800
  %1523 = vmatpush1.bf16.msra.mxu0 %v799
  %1524 = vmatprep.subr.bf16.mxu0 %v804
  %1525 = vmatpush1.bf16.msra.mxu0 %v803
  %1526 = vmatprep.subr.bf16.mxu0 0
  %1527 = vmatpush1.bf16.msra.mxu0 0
  %1528 = vmatprep.subr.bf16.mxu0 0
  %1529 = vmatpush1.bf16.msra.mxu0 0
  %1530 = vmatprep.subr.bf16.mxu0 0
  %1531 = vmatpush1.bf16.msra.mxu0 0
  %1532 = vmatprep.subr.bf16.mxu0 0
  %1533 = vmatpush1.bf16.msra.mxu0 0
  %1534 = vmatprep.subr.bf16.mxu0 0
  %1535 = vmatpush1.bf16.msra.mxu0 0
  %1536 = vmatprep.subr.bf16.mxu0 0
  %1537 = vmatpush1.bf16.msra.mxu0 0
  %1538 = vmatprep.subr.bf16.mxu0 0
  %1539 = vmatpush1.bf16.msra.mxu0 0
  %1540 = vmatprep.subr.bf16.mxu0 0
  %1541 = vmatpush1.bf16.msra.mxu0 0
  %1542 = vmatprep.mubr.bf16.mxu0 0
  %1543 = vmatmul.mubr.bf16.gmra.mrb[0].mxu0 %v1468
  %v1544 = vpop.f32.mrb[0].mxu0
  %v1545 = vadd.f32 0.0, %v1544
  %v1546 = vpop.f32.mrb[0].mxu0
  %v1547 = vadd.f32 0.0, %v1546
  %v1548 = vpop.f32.mrb[0].mxu0
  %v1549 = vpop.f32.mrb[0].mxu0
  %1550 = vdwg.mxu0
  %v1551 = vpack.c.bf16 %v1467, %v1467
  %1552 = vmatprep.subr.bf16.mxu0 %v1017
  %1553 = vmatpush1.bf16.msra.mxu0 %v1016
  %1554 = vmatprep.subr.bf16.mxu0 %v1021
  %1555 = vmatpush1.bf16.msra.mxu0 %v1020
  %1556 = vmatprep.subr.bf16.mxu0 %v1025
  %1557 = vmatpush1.bf16.msra.mxu0 %v1024
  %1558 = vmatprep.subr.bf16.mxu0 %v1029
  %1559 = vmatpush1.bf16.msra.mxu0 %v1028
  %1560 = vmatprep.subr.bf16.mxu0 %v1033
  %1561 = vmatpush1.bf16.msra.mxu0 %v1032
  %1562 = vmatprep.subr.bf16.mxu0 %v1037
  %1563 = vmatpush1.bf16.msra.mxu0 %v1036
  %1564 = vmatprep.subr.bf16.mxu0 %v1041
  %1565 = vmatpush1.bf16.msra.mxu0 %v1040
  %1566 = vmatprep.subr.bf16.mxu0 %v1045
  %1567 = vmatpush1.bf16.msra.mxu0 %v1044
  %1568 = vmatprep.subr.bf16.mxu0 0
  %1569 = vmatpush1.bf16.msra.mxu0 0
  %1570 = vmatprep.subr.bf16.mxu0 0
  %1571 = vmatpush1.bf16.msra.mxu0 0
  %1572 = vmatprep.subr.bf16.mxu0 0
  %1573 = vmatpush1.bf16.msra.mxu0 0
  %1574 = vmatprep.subr.bf16.mxu0 0
  %1575 = vmatpush1.bf16.msra.mxu0 0
  %1576 = vmatprep.subr.bf16.mxu0 0
  %1577 = vmatpush1.bf16.msra.mxu0 0
  %1578 = vmatprep.subr.bf16.mxu0 0
  %1579 = vmatpush1.bf16.msra.mxu0 0
  %1580 = vmatprep.subr.bf16.mxu0 0
  %1581 = vmatpush1.bf16.msra.mxu0 0
  %1582 = vmatprep.subr.bf16.mxu0 0
  %1583 = vmatpush1.bf16.msra.mxu0 0
  %1584 = vmatprep.mubr.bf16.mxu0 0
  %1585 = vmatmul.mubr.bf16.gmra.mrb[0].mxu0 %v1551
  %v1586 = vpop.f32.mrb[0].mxu0
  %v1587 = vadd.f32 0.0, %v1586
  %v1588 = vpop.f32.mrb[0].mxu0
  %v1589 = vadd.f32 0.0, %v1588
  %v1590 = vpop.f32.mrb[0].mxu0
  %v1591 = vpop.f32.mrb[0].mxu0
  %1592 = vdwg.mxu0
  %1593 = vmatprep.subr.bf16.mxu0 %v1019
  %1594 = vmatpush1.bf16.msra.mxu0 %v1018
  %1595 = vmatprep.subr.bf16.mxu0 %v1023
  %1596 = vmatpush1.bf16.msra.mxu0 %v1022
  %1597 = vmatprep.subr.bf16.mxu0 %v1027
  %1598 = vmatpush1.bf16.msra.mxu0 %v1026
  %1599 = vmatprep.subr.bf16.mxu0 %v1031
  %1600 = vmatpush1.bf16.msra.mxu0 %v1030
  %1601 = vmatprep.subr.bf16.mxu0 %v1035
  %1602 = vmatpush1.bf16.msra.mxu0 %v1034
  %1603 = vmatprep.subr.bf16.mxu0 %v1039
  %1604 = vmatpush1.bf16.msra.mxu0 %v1038
  %1605 = vmatprep.subr.bf16.mxu0 %v1043
  %1606 = vmatpush1.bf16.msra.mxu0 %v1042
  %1607 = vmatprep.subr.bf16.mxu0 %v1047
  %1608 = vmatpush1.bf16.msra.mxu0 %v1046
  %1609 = vmatprep.subr.bf16.mxu0 0
  %1610 = vmatpush1.bf16.msra.mxu0 0
  %1611 = vmatprep.subr.bf16.mxu0 0
  %1612 = vmatpush1.bf16.msra.mxu0 0
  %1613 = vmatprep.subr.bf16.mxu0 0
  %1614 = vmatpush1.bf16.msra.mxu0 0
  %1615 = vmatprep.subr.bf16.mxu0 0
  %1616 = vmatpush1.bf16.msra.mxu0 0
  %1617 = vmatprep.subr.bf16.mxu0 0
  %1618 = vmatpush1.bf16.msra.mxu0 0
  %1619 = vmatprep.subr.bf16.mxu0 0
  %1620 = vmatpush1.bf16.msra.mxu0 0
  %1621 = vmatprep.subr.bf16.mxu0 0
  %1622 = vmatpush1.bf16.msra.mxu0 0
  %1623 = vmatprep.subr.bf16.mxu0 0
  %1624 = vmatpush1.bf16.msra.mxu0 0
  %1625 = vmatprep.mubr.bf16.mxu0 0
  %1626 = vmatmul.mubr.bf16.gmra.mrb[0].mxu0 %v1551
  %v1627 = vpop.f32.mrb[0].mxu0
  %v1628 = vadd.f32 0.0, %v1627
  %v1629 = vpop.f32.mrb[0].mxu0
  %v1630 = vadd.f32 0.0, %v1629
  %v1631 = vpop.f32.mrb[0].mxu0
  %v1632 = vpop.f32.mrb[0].mxu0
  %1633 = vdwg.mxu0
  %s1634 = smul.u32 3, 8
  %s1635 = smul.addr %s1634, 8
  %s1636 = scalar_lea.vmem [#allocation2], %s1635
  %v1637 = vld [vmem:[%s1636] sm:$0xff]
  %v1638 = vld [vmem:[%s1636 + $0x8] sm:$0xff]
  %v1639 = vld [vmem:[%s1636 + $0x10] sm:$0xff]
  %v1640 = vld [vmem:[%s1636 + $0x18] sm:$0xff]
  %v1641 = vadd.f32 %v1637, %v1504
  %v1642 = vadd.f32 %v1638, %v1506
  %v1643 = vadd.f32 %v1639, %v1545
  %v1644 = vadd.f32 %v1640, %v1547
  %v1645 = vxor.u32 %v1641, 2147483648
  %v1646 = vxor.u32 %v1642, 2147483648
  %v1647 = vxor.u32 %v1643, 2147483648
  %v1648 = vmul.f32 %v1645, 1.442695
  %v1649 = vpow.pop %v1648
  %v1650 = vmul.f32 %v1646, 1.442695
  %v1651 = vpow.pop %v1650
  %v1652 = vmul.f32 %v1647, 1.442695
  %v1653 = vpow.pop %v1652
  %v1654 = vadd.f32 %v1649, 1.0
  %v1655 = vadd.f32 %v1651, 1.0
  %v1656 = vadd.f32 %v1653, 1.0
  %v1657 = vrcp.pop %v1654
  %v1658 = vmul.f32 1.0, %v1657
  %v1659 = vrcp.pop %v1655
  %v1660 = vmul.f32 1.0, %v1659
  %v1661 = vrcp.pop %v1656
  %v1662 = vmul.f32 1.0, %v1661
  %v1663 = vtanh.pop %v1644
  %v1664 = vmul.f32 %v1660, %v1430
  %v1665 = vmul.f32 %v1658, %v1663
  %v1666 = vadd.f32 %v1664, %v1665
  %v1667 = vtanh.pop %v1666
  %v1668 = vmul.f32 %v1662, %v1667
  %s1669 = smul.u32 4, 8
  %s1670 = smul.addr %s1669, 8
  %s1671 = scalar_lea.vmem [#allocation2], %s1670
  %v1672 = vld [vmem:[%s1671 + $0x20] sm:$0xff]
  %v1673 = vld [vmem:[%s1671 + $0x28] sm:$0xff]
  %v1674 = vld [vmem:[%s1671 + $0x30] sm:$0xff]
  %v1675 = vld [vmem:[%s1671 + $0x38] sm:$0xff]
  %v1676 = vadd.f32 %v1672, %v1587
  %v1677 = vadd.f32 %v1673, %v1589
  %v1678 = vadd.f32 %v1674, %v1628
  %v1679 = vadd.f32 %v1675, %v1630
  %v1680 = vxor.u32 %v1676, 2147483648
  %v1681 = vxor.u32 %v1677, 2147483648
  %v1682 = vxor.u32 %v1678, 2147483648
  %v1683 = vmul.f32 %v1680, 1.442695
  %v1684 = vpow.pop %v1683
  %v1685 = vmul.f32 %v1681, 1.442695
  %v1686 = vpow.pop %v1685
  %v1687 = vmul.f32 %v1682, 1.442695
  %v1688 = vpow.pop %v1687
  %v1689 = vadd.f32 %v1684, 1.0
  %v1690 = vadd.f32 %v1686, 1.0
  %v1691 = vadd.f32 %v1688, 1.0
  %v1692 = vrcp.pop %v1689
  %v1693 = vmul.f32 1.0, %v1692
  %v1694 = vrcp.pop %v1690
  %v1695 = vmul.f32 1.0, %v1694
  %v1696 = vrcp.pop %v1691
  %v1697 = vmul.f32 1.0, %v1696
  %v1698 = vtanh.pop %v1679
  %v1699 = vmul.f32 %v1695, %v1465
  %v1700 = vmul.f32 %v1693, %v1698
  %v1701 = vadd.f32 %v1699, %v1700
  %v1702 = vtanh.pop %v1701
  %v1703 = vmul.f32 %v1697, %v1702
  %v1704 = vpack.c.bf16 %v1668, %v1668
  %1705 = vmatprep.subr.bf16.mxu0 %v774
  %1706 = vmatpush1.bf16.msra.mxu0 %v773
  %1707 = vmatprep.subr.bf16.mxu0 %v778
  %1708 = vmatpush1.bf16.msra.mxu0 %v777
  %1709 = vmatprep.subr.bf16.mxu0 %v782
  %1710 = vmatpush1.bf16.msra.mxu0 %v781
  %1711 = vmatprep.subr.bf16.mxu0 %v786
  %1712 = vmatpush1.bf16.msra.mxu0 %v785
  %1713 = vmatprep.subr.bf16.mxu0 %v790
  %1714 = vmatpush1.bf16.msra.mxu0 %v789
  %1715 = vmatprep.subr.bf16.mxu0 %v794
  %1716 = vmatpush1.bf16.msra.mxu0 %v793
  %1717 = vmatprep.subr.bf16.mxu0 %v798
  %1718 = vmatpush1.bf16.msra.mxu0 %v797
  %1719 = vmatprep.subr.bf16.mxu0 %v802
  %1720 = vmatpush1.bf16.msra.mxu0 %v801
  %1721 = vmatprep.subr.bf16.mxu0 0
  %1722 = vmatpush1.bf16.msra.mxu0 0
  %1723 = vmatprep.subr.bf16.mxu0 0
  %1724 = vmatpush1.bf16.msra.mxu0 0
  %1725 = vmatprep.subr.bf16.mxu0 0
  %1726 = vmatpush1.bf16.msra.mxu0 0
  %1727 = vmatprep.subr.bf16.mxu0 0
  %1728 = vmatpush1.bf16.msra.mxu0 0
  %1729 = vmatprep.subr.bf16.mxu0 0
  %1730 = vmatpush1.bf16.msra.mxu0 0
  %1731 = vmatprep.subr.bf16.mxu0 0
  %1732 = vmatpush1.bf16.msra.mxu0 0
  %1733 = vmatprep.subr.bf16.mxu0 0
  %1734 = vmatpush1.bf16.msra.mxu0 0
  %1735 = vmatprep.subr.bf16.mxu0 0
  %1736 = vmatpush1.bf16.msra.mxu0 0
  %1737 = vmatprep.mubr.bf16.mxu0 0
  %1738 = vmatmul.mubr.bf16.gmra.mrb[0].mxu0 %v1704
  %v1739 = vpop.f32.mrb[0].mxu0
  %v1740 = vadd.f32 0.0, %v1739
  %v1741 = vpop.f32.mrb[0].mxu0
  %v1742 = vadd.f32 0.0, %v1741
  %v1743 = vpop.f32.mrb[0].mxu0
  %v1744 = vpop.f32.mrb[0].mxu0
  %1745 = vdwg.mxu0
  %1746 = vmatprep.subr.bf16.mxu0 %v776
  %1747 = vmatpush1.bf16.msra.mxu0 %v775
  %1748 = vmatprep.subr.bf16.mxu0 %v780
  %1749 = vmatpush1.bf16.msra.mxu0 %v779
  %1750 = vmatprep.subr.bf16.mxu0 %v784
  %1751 = vmatpush1.bf16.msra.mxu0 %v783
  %1752 = vmatprep.subr.bf16.mxu0 %v788
  %1753 = vmatpush1.bf16.msra.mxu0 %v787
  %1754 = vmatprep.subr.bf16.mxu0 %v792
  %1755 = vmatpush1.bf16.msra.mxu0 %v791
  %1756 = vmatprep.subr.bf16.mxu0 %v796
  %1757 = vmatpush1.bf16.msra.mxu0 %v795
  %1758 = vmatprep.subr.bf16.mxu0 %v800
  %1759 = vmatpush1.bf16.msra.mxu0 %v799
  %1760 = vmatprep.subr.bf16.mxu0 %v804
  %1761 = vmatpush1.bf16.msra.mxu0 %v803
  %1762 = vmatprep.subr.bf16.mxu0 0
  %1763 = vmatpush1.bf16.msra.mxu0 0
  %1764 = vmatprep.subr.bf16.mxu0 0
  %1765 = vmatpush1.bf16.msra.mxu0 0
  %1766 = vmatprep.subr.bf16.mxu0 0
  %1767 = vmatpush1.bf16.msra.mxu0 0
  %1768 = vmatprep.subr.bf16.mxu0 0
  %1769 = vmatpush1.bf16.msra.mxu0 0
  %1770 = vmatprep.subr.bf16.mxu0 0
  %1771 = vmatpush1.bf16.msra.mxu0 0
  %1772 = vmatprep.subr.bf16.mxu0 0
  %1773 = vmatpush1.bf16.msra.mxu0 0
  %1774 = vmatprep.subr.bf16.mxu0 0
  %1775 = vmatpush1.bf16.msra.mxu0 0
  %1776 = vmatprep.subr.bf16.mxu0 0
  %1777 = vmatpush1.bf16.msra.mxu0 0
  %1778 = vmatprep.mubr.bf16.mxu0 0
  %1779 = vmatmul.mubr.bf16.gmra.mrb[0].mxu0 %v1704
  %v1780 = vpop.f32.mrb[0].mxu0
  %v1781 = vadd.f32 0.0, %v1780
  %v1782 = vpop.f32.mrb[0].mxu0
  %v1783 = vadd.f32 0.0, %v1782
  %v1784 = vpop.f32.mrb[0].mxu0
  %v1785 = vpop.f32.mrb[0].mxu0
  %1786 = vdwg.mxu0
  %v1787 = vpack.c.bf16 %v1703, %v1703
  %1788 = vmatprep.subr.bf16.mxu0 %v1017
  %1789 = vmatpush1.bf16.msra.mxu0 %v1016
  %1790 = vmatprep.subr.bf16.mxu0 %v1021
  %1791 = vmatpush1.bf16.msra.mxu0 %v1020
  %1792 = vmatprep.subr.bf16.mxu0 %v1025
  %1793 = vmatpush1.bf16.msra.mxu0 %v1024
  %1794 = vmatprep.subr.bf16.mxu0 %v1029
  %1795 = vmatpush1.bf16.msra.mxu0 %v1028
  %1796 = vmatprep.subr.bf16.mxu0 %v1033
  %1797 = vmatpush1.bf16.msra.mxu0 %v1032
  %1798 = vmatprep.subr.bf16.mxu0 %v1037
  %1799 = vmatpush1.bf16.msra.mxu0 %v1036
  %1800 = vmatprep.subr.bf16.mxu0 %v1041
  %1801 = vmatpush1.bf16.msra.mxu0 %v1040
  %1802 = vmatprep.subr.bf16.mxu0 %v1045
  %1803 = vmatpush1.bf16.msra.mxu0 %v1044
  %1804 = vmatprep.subr.bf16.mxu0 0
  %1805 = vmatpush1.bf16.msra.mxu0 0
  %1806 = vmatprep.subr.bf16.mxu0 0
  %1807 = vmatpush1.bf16.msra.mxu0 0
  %1808 = vmatprep.subr.bf16.mxu0 0
  %1809 = vmatpush1.bf16.msra.mxu0 0
  %1810 = vmatprep.subr.bf16.mxu0 0
  %1811 = vmatpush1.bf16.msra.mxu0 0
  %1812 = vmatprep.subr.bf16.mxu0 0
  %1813 = vmatpush1.bf16.msra.mxu0 0
  %1814 = vmatprep.subr.bf16.mxu0 0
  %1815 = vmatpush1.bf16.msra.mxu0 0
  %1816 = vmatprep.subr.bf16.mxu0 0
  %1817 = vmatpush1.bf16.msra.mxu0 0
  %1818 = vmatprep.subr.bf16.mxu0 0
  %1819 = vmatpush1.bf16.msra.mxu0 0
  %1820 = vmatprep.mubr.bf16.mxu0 0
  %1821 = vmatmul.mubr.bf16.gmra.mrb[0].mxu0 %v1787
  %v1822 = vpop.f32.mrb[0].mxu0
  %v1823 = vadd.f32 0.0, %v1822
  %v1824 = vpop.f32.mrb[0].mxu0
  %v1825 = vadd.f32 0.0, %v1824
  %v1826 = vpop.f32.mrb[0].mxu0
  %v1827 = vpop.f32.mrb[0].mxu0
  %1828 = vdwg.mxu0
  %1829 = vmatprep.subr.bf16.mxu0 %v1019
  %1830 = vmatpush1.bf16.msra.mxu0 %v1018
  %1831 = vmatprep.subr.bf16.mxu0 %v1023
  %1832 = vmatpush1.bf16.msra.mxu0 %v1022
  %1833 = vmatprep.subr.bf16.mxu0 %v1027
  %1834 = vmatpush1.bf16.msra.mxu0 %v1026
  %1835 = vmatprep.subr.bf16.mxu0 %v1031
  %1836 = vmatpush1.bf16.msra.mxu0 %v1030
  %1837 = vmatprep.subr.bf16.mxu0 %v1035
  %1838 = vmatpush1.bf16.msra.mxu0 %v1034
  %1839 = vmatprep.subr.bf16.mxu0 %v1039
  %1840 = vmatpush1.bf16.msra.mxu0 %v1038
  %1841 = vmatprep.subr.bf16.mxu0 %v1043
  %1842 = vmatpush1.bf16.msra.mxu0 %v1042
  %1843 = vmatprep.subr.bf16.mxu0 %v1047
  %1844 = vmatpush1.bf16.msra.mxu0 %v1046
  %1845 = vmatprep.subr.bf16.mxu0 0
  %1846 = vmatpush1.bf16.msra.mxu0 0
  %1847 = vmatprep.subr.bf16.mxu0 0
  %1848 = vmatpush1.bf16.msra.mxu0 0
  %1849 = vmatprep.subr.bf16.mxu0 0
  %1850 = vmatpush1.bf16.msra.mxu0 0
  %1851 = vmatprep.subr.bf16.mxu0 0
  %1852 = vmatpush1.bf16.msra.mxu0 0
  %1853 = vmatprep.subr.bf16.mxu0 0
  %1854 = vmatpush1.bf16.msra.mxu0 0
  %1855 = vmatprep.subr.bf16.mxu0 0
  %1856 = vmatpush1.bf16.msra.mxu0 0
  %1857 = vmatprep.subr.bf16.mxu0 0
  %1858 = vmatpush1.bf16.msra.mxu0 0
  %1859 = vmatprep.subr.bf16.mxu0 0
  %1860 = vmatpush1.bf16.msra.mxu0 0
  %1861 = vmatprep.mubr.bf16.mxu0 0
  %1862 = vmatmul.mubr.bf16.gmra.mrb[0].mxu0 %v1787
  %v1863 = vpop.f32.mrb[0].mxu0
  %v1864 = vadd.f32 0.0, %v1863
  %v1865 = vpop.f32.mrb[0].mxu0
  %v1866 = vadd.f32 0.0, %v1865
  %v1867 = vpop.f32.mrb[0].mxu0
  %v1868 = vpop.f32.mrb[0].mxu0
  %1869 = vdwg.mxu0
  %v1870 = vld [vmem:[%s1671] sm:$0xff]
  %v1871 = vld [vmem:[%s1671 + $0x8] sm:$0xff]
  %v1872 = vld [vmem:[%s1671 + $0x10] sm:$0xff]
  %v1873 = vld [vmem:[%s1671 + $0x18] sm:$0xff]
  %v1874 = vadd.f32 %v1870, %v1740
  %v1875 = vadd.f32 %v1871, %v1742
  %v1876 = vadd.f32 %v1872, %v1781
  %v1877 = vadd.f32 %v1873, %v1783
  %v1878 = vxor.u32 %v1874, 2147483648
  %v1879 = vxor.u32 %v1875, 2147483648
  %v1880 = vxor.u32 %v1876, 2147483648
  %v1881 = vmul.f32 %v1878, 1.442695
  %v1882 = vpow.pop %v1881
  %v1883 = vmul.f32 %v1879, 1.442695
  %v1884 = vpow.pop %v1883
  %v1885 = vmul.f32 %v1880, 1.442695
  %v1886 = vpow.pop %v1885
  %v1887 = vadd.f32 %v1882, 1.0
  %v1888 = vadd.f32 %v1884, 1.0
  %v1889 = vadd.f32 %v1886, 1.0
  %v1890 = vrcp.pop %v1887
  %v1891 = vmul.f32 1.0, %v1890
  %v1892 = vrcp.pop %v1888
  %v1893 = vmul.f32 1.0, %v1892
  %v1894 = vrcp.pop %v1889
  %v1895 = vmul.f32 1.0, %v1894
  %v1896 = vtanh.pop %v1877
  %v1897 = vmul.f32 %v1893, %v1666
  %v1898 = vmul.f32 %v1891, %v1896
  %v1899 = vadd.f32 %v1897, %v1898
  %v1900 = vtanh.pop %v1899
  %v1901 = vmul.f32 %v1895, %v1900
  %v1902 = vld [vmem:[%s1636 + $0x20] sm:$0xff]
  %v1903 = vld [vmem:[%s1636 + $0x28] sm:$0xff]
  %v1904 = vld [vmem:[%s1636 + $0x30] sm:$0xff]
  %v1905 = vld [vmem:[%s1636 + $0x38] sm:$0xff]
  %v1906 = vadd.f32 %v1902, %v1823
  %v1907 = vadd.f32 %v1903, %v1825
  %v1908 = vadd.f32 %v1904, %v1864
  %v1909 = vadd.f32 %v1905, %v1866
  %v1910 = vxor.u32 %v1906, 2147483648
  %v1911 = vxor.u32 %v1907, 2147483648
  %v1912 = vxor.u32 %v1908, 2147483648
  %v1913 = vmul.f32 %v1910, 1.442695
  %v1914 = vpow.pop %v1913
  %v1915 = vmul.f32 %v1911, 1.442695
  %v1916 = vpow.pop %v1915
  %v1917 = vmul.f32 %v1912, 1.442695
  %v1918 = vpow.pop %v1917
  %v1919 = vadd.f32 %v1914, 1.0
  %v1920 = vadd.f32 %v1916, 1.0
  %v1921 = vadd.f32 %v1918, 1.0
  %v1922 = vrcp.pop %v1919
  %v1923 = vmul.f32 1.0, %v1922
  %v1924 = vrcp.pop %v1920
  %v1925 = vmul.f32 1.0, %v1924
  %v1926 = vrcp.pop %v1921
  %v1927 = vmul.f32 1.0, %v1926
  %v1928 = vtanh.pop %v1909
  %v1929 = vmul.f32 %v1925, %v1701
  %v1930 = vmul.f32 %v1923, %v1928
  %v1931 = vadd.f32 %v1929, %v1930
  %v1932 = vtanh.pop %v1931
  %v1933 = vmul.f32 %v1927, %v1932
  %v1934 = vpack.c.bf16 %v1901, %v1901
  %1935 = vmatprep.subr.bf16.mxu0 %v774
  %1936 = vmatpush1.bf16.msra.mxu0 %v773
  %1937 = vmatprep.subr.bf16.mxu0 %v778
  %1938 = vmatpush1.bf16.msra.mxu0 %v777
  %1939 = vmatprep.subr.bf16.mxu0 %v782
  %1940 = vmatpush1.bf16.msra.mxu0 %v781
  %1941 = vmatprep.subr.bf16.mxu0 %v786
  %1942 = vmatpush1.bf16.msra.mxu0 %v785
  %1943 = vmatprep.subr.bf16.mxu0 %v790
  %1944 = vmatpush1.bf16.msra.mxu0 %v789
  %1945 = vmatprep.subr.bf16.mxu0 %v794
  %1946 = vmatpush1.bf16.msra.mxu0 %v793
  %1947 = vmatprep.subr.bf16.mxu0 %v798
  %1948 = vmatpush1.bf16.msra.mxu0 %v797
  %1949 = vmatprep.subr.bf16.mxu0 %v802
  %1950 = vmatpush1.bf16.msra.mxu0 %v801
  %1951 = vmatprep.subr.bf16.mxu0 0
  %1952 = vmatpush1.bf16.msra.mxu0 0
  %1953 = vmatprep.subr.bf16.mxu0 0
  %1954 = vmatpush1.bf16.msra.mxu0 0
  %1955 = vmatprep.subr.bf16.mxu0 0
  %1956 = vmatpush1.bf16.msra.mxu0 0
  %1957 = vmatprep.subr.bf16.mxu0 0
  %1958 = vmatpush1.bf16.msra.mxu0 0
  %1959 = vmatprep.subr.bf16.mxu0 0
  %1960 = vmatpush1.bf16.msra.mxu0 0
  %1961 = vmatprep.subr.bf16.mxu0 0
  %1962 = vmatpush1.bf16.msra.mxu0 0
  %1963 = vmatprep.subr.bf16.mxu0 0
  %1964 = vmatpush1.bf16.msra.mxu0 0
  %1965 = vmatprep.subr.bf16.mxu0 0
  %1966 = vmatpush1.bf16.msra.mxu0 0
  %1967 = vmatprep.mubr.bf16.mxu0 0
  %1968 = vmatmul.mubr.bf16.gmra.mrb[0].mxu0 %v1934
  %v1969 = vpop.f32.mrb[0].mxu0
  %v1970 = vadd.f32 0.0, %v1969
  %v1971 = vpop.f32.mrb[0].mxu0
  %v1972 = vadd.f32 0.0, %v1971
  %v1973 = vpop.f32.mrb[0].mxu0
  %v1974 = vpop.f32.mrb[0].mxu0
  %1975 = vdwg.mxu0
  %1976 = vmatprep.subr.bf16.mxu0 %v776
  %1977 = vmatpush1.bf16.msra.mxu0 %v775
  %1978 = vmatprep.subr.bf16.mxu0 %v780
  %1979 = vmatpush1.bf16.msra.mxu0 %v779
  %1980 = vmatprep.subr.bf16.mxu0 %v784
  %1981 = vmatpush1.bf16.msra.mxu0 %v783
  %1982 = vmatprep.subr.bf16.mxu0 %v788
  %1983 = vmatpush1.bf16.msra.mxu0 %v787
  %1984 = vmatprep.subr.bf16.mxu0 %v792
  %1985 = vmatpush1.bf16.msra.mxu0 %v791
  %1986 = vmatprep.subr.bf16.mxu0 %v796
  %1987 = vmatpush1.bf16.msra.mxu0 %v795
  %1988 = vmatprep.subr.bf16.mxu0 %v800
  %1989 = vmatpush1.bf16.msra.mxu0 %v799
  %1990 = vmatprep.subr.bf16.mxu0 %v804
  %1991 = vmatpush1.bf16.msra.mxu0 %v803
  %1992 = vmatprep.subr.bf16.mxu0 0
  %1993 = vmatpush1.bf16.msra.mxu0 0
  %1994 = vmatprep.subr.bf16.mxu0 0
  %1995 = vmatpush1.bf16.msra.mxu0 0
  %1996 = vmatprep.subr.bf16.mxu0 0
  %1997 = vmatpush1.bf16.msra.mxu0 0
  %1998 = vmatprep.subr.bf16.mxu0 0
  %1999 = vmatpush1.bf16.msra.mxu0 0
  %2000 = vmatprep.subr.bf16.mxu0 0
  %2001 = vmatpush1.bf16.msra.mxu0 0
  %2002 = vmatprep.subr.bf16.mxu0 0
  %2003 = vmatpush1.bf16.msra.mxu0 0
  %2004 = vmatprep.subr.bf16.mxu0 0
  %2005 = vmatpush1.bf16.msra.mxu0 0
  %2006 = vmatprep.subr.bf16.mxu0 0
  %2007 = vmatpush1.bf16.msra.mxu0 0
  %2008 = vmatprep.mubr.bf16.mxu0 0
  %2009 = vmatmul.mubr.bf16.gmra.mrb[0].mxu0 %v1934
  %v2010 = vpop.f32.mrb[0].mxu0
  %v2011 = vadd.f32 0.0, %v2010
  %v2012 = vpop.f32.mrb[0].mxu0
  %v2013 = vadd.f32 0.0, %v2012
  %v2014 = vpop.f32.mrb[0].mxu0
  %v2015 = vpop.f32.mrb[0].mxu0
  %2016 = vdwg.mxu0
  %v2017 = vpack.c.bf16 %v1933, %v1933
  %2018 = vmatprep.subr.bf16.mxu0 %v1017
  %2019 = vmatpush1.bf16.msra.mxu0 %v1016
  %2020 = vmatprep.subr.bf16.mxu0 %v1021
  %2021 = vmatpush1.bf16.msra.mxu0 %v1020
  %2022 = vmatprep.subr.bf16.mxu0 %v1025
  %2023 = vmatpush1.bf16.msra.mxu0 %v1024
  %2024 = vmatprep.subr.bf16.mxu0 %v1029
  %2025 = vmatpush1.bf16.msra.mxu0 %v1028
  %2026 = vmatprep.subr.bf16.mxu0 %v1033
  %2027 = vmatpush1.bf16.msra.mxu0 %v1032
  %2028 = vmatprep.subr.bf16.mxu0 %v1037
  %2029 = vmatpush1.bf16.msra.mxu0 %v1036
  %2030 = vmatprep.subr.bf16.mxu0 %v1041
  %2031 = vmatpush1.bf16.msra.mxu0 %v1040
  %2032 = vmatprep.subr.bf16.mxu0 %v1045
  %2033 = vmatpush1.bf16.msra.mxu0 %v1044
  %2034 = vmatprep.subr.bf16.mxu0 0
  %2035 = vmatpush1.bf16.msra.mxu0 0
  %2036 = vmatprep.subr.bf16.mxu0 0
  %2037 = vmatpush1.bf16.msra.mxu0 0
  %2038 = vmatprep.subr.bf16.mxu0 0
  %2039 = vmatpush1.bf16.msra.mxu0 0
  %2040 = vmatprep.subr.bf16.mxu0 0
  %2041 = vmatpush1.bf16.msra.mxu0 0
  %2042 = vmatprep.subr.bf16.mxu0 0
  %2043 = vmatpush1.bf16.msra.mxu0 0
  %2044 = vmatprep.subr.bf16.mxu0 0
  %2045 = vmatpush1.bf16.msra.mxu0 0
  %2046 = vmatprep.subr.bf16.mxu0 0
  %2047 = vmatpush1.bf16.msra.mxu0 0
  %2048 = vmatprep.subr.bf16.mxu0 0
  %2049 = vmatpush1.bf16.msra.mxu0 0
  %2050 = vmatprep.mubr.bf16.mxu0 0
  %2051 = vmatmul.mubr.bf16.gmra.mrb[0].mxu0 %v2017
  %v2052 = vpop.f32.mrb[0].mxu0
  %v2053 = vadd.f32 0.0, %v2052
  %v2054 = vpop.f32.mrb[0].mxu0
  %v2055 = vadd.f32 0.0, %v2054
  %v2056 = vpop.f32.mrb[0].mxu0
  %v2057 = vpop.f32.mrb[0].mxu0
  %2058 = vdwg.mxu0
  %2059 = vmatprep.subr.bf16.mxu0 %v1019
  %2060 = vmatpush1.bf16.msra.mxu0 %v1018
  %2061 = vmatprep.subr.bf16.mxu0 %v1023
  %2062 = vmatpush1.bf16.msra.mxu0 %v1022
  %2063 = vmatprep.subr.bf16.mxu0 %v1027
  %2064 = vmatpush1.bf16.msra.mxu0 %v1026
  %2065 = vmatprep.subr.bf16.mxu0 %v1031
  %2066 = vmatpush1.bf16.msra.mxu0 %v1030
  %2067 = vmatprep.subr.bf16.mxu0 %v1035
  %2068 = vmatpush1.bf16.msra.mxu0 %v1034
  %2069 = vmatprep.subr.bf16.mxu0 %v1039
  %2070 = vmatpush1.bf16.msra.mxu0 %v1038
  %2071 = vmatprep.subr.bf16.mxu0 %v1043
  %2072 = vmatpush1.bf16.msra.mxu0 %v1042
  %2073 = vmatprep.subr.bf16.mxu0 %v1047
  %2074 = vmatpush1.bf16.msra.mxu0 %v1046
  %2075 = vmatprep.subr.bf16.mxu0 0
  %2076 = vmatpush1.bf16.msra.mxu0 0
  %2077 = vmatprep.subr.bf16.mxu0 0
  %2078 = vmatpush1.bf16.msra.mxu0 0
  %2079 = vmatprep.subr.bf16.mxu0 0
  %2080 = vmatpush1.bf16.msra.mxu0 0
  %2081 = vmatprep.subr.bf16.mxu0 0
  %2082 = vmatpush1.bf16.msra.mxu0 0
  %2083 = vmatprep.subr.bf16.mxu0 0
  %2084 = vmatpush1.bf16.msra.mxu0 0
  %2085 = vmatprep.subr.bf16.mxu0 0
  %2086 = vmatpush1.bf16.msra.mxu0 0
  %2087 = vmatprep.subr.bf16.mxu0 0
  %2088 = vmatpush1.bf16.msra.mxu0 0
  %2089 = vmatprep.subr.bf16.mxu0 0
  %2090 = vmatpush1.bf16.msra.mxu0 0
  %2091 = vmatprep.mubr.bf16.mxu0 0
  %2092 = vmatmul.mubr.bf16.gmra.mrb[0].mxu0 %v2017
  %v2093 = vpop.f32.mrb[0].mxu0
  %v2094 = vadd.f32 0.0, %v2093
  %v2095 = vpop.f32.mrb[0].mxu0
  %v2096 = vadd.f32 0.0, %v2095
  %v2097 = vpop.f32.mrb[0].mxu0
  %v2098 = vpop.f32.mrb[0].mxu0
  %2099 = vdwg.mxu0
  %v2100 = vld [vmem:[%s1435] sm:$0xff]
  %v2101 = vld [vmem:[%s1435 + $0x8] sm:$0xff]
  %v2102 = vld [vmem:[%s1435 + $0x10] sm:$0xff]
  %v2103 = vld [vmem:[%s1435 + $0x18] sm:$0xff]
  %v2104 = vadd.f32 %v2100, %v1970
  %v2105 = vadd.f32 %v2101, %v1972
  %v2106 = vadd.f32 %v2102, %v2011
  %v2107 = vadd.f32 %v2103, %v2013
  %v2108 = vxor.u32 %v2104, 2147483648
  %v2109 = vxor.u32 %v2105, 2147483648
  %v2110 = vxor.u32 %v2106, 2147483648
  %v2111 = vmul.f32 %v2108, 1.442695
  %v2112 = vpow.pop %v2111
  %v2113 = vmul.f32 %v2109, 1.442695
  %v2114 = vpow.pop %v2113
  %v2115 = vmul.f32 %v2110, 1.442695
  %v2116 = vpow.pop %v2115
  %v2117 = vadd.f32 %v2112, 1.0
  %v2118 = vadd.f32 %v2114, 1.0
  %v2119 = vadd.f32 %v2116, 1.0
  %v2120 = vrcp.pop %v2117
  %v2121 = vmul.f32 1.0, %v2120
  %v2122 = vrcp.pop %v2118
  %v2123 = vmul.f32 1.0, %v2122
  %v2124 = vrcp.pop %v2119
  %v2125 = vmul.f32 1.0, %v2124
  %v2126 = vtanh.pop %v2107
  %v2127 = vmul.f32 %v2123, %v1899
  %v2128 = vmul.f32 %v2121, %v2126
  %v2129 = vadd.f32 %v2127, %v2128
  %v2130 = vtanh.pop %v2129
  %v2131 = vmul.f32 %v2125, %v2130
  %v2132 = vld [vmem:[%s1400 + $0x20] sm:$0xff]
  %v2133 = vld [vmem:[%s1400 + $0x28] sm:$0xff]
  %v2134 = vld [vmem:[%s1400 + $0x30] sm:$0xff]
  %v2135 = vld [vmem:[%s1400 + $0x38] sm:$0xff]
  %v2136 = vadd.f32 %v2132, %v2053
  %v2137 = vadd.f32 %v2133, %v2055
  %v2138 = vadd.f32 %v2134, %v2094
  %v2139 = vadd.f32 %v2135, %v2096
  %v2140 = vxor.u32 %v2136, 2147483648
  %v2141 = vxor.u32 %v2137, 2147483648
  %v2142 = vxor.u32 %v2138, 2147483648
  %v2143 = vmul.f32 %v2140, 1.442695
  %v2144 = vpow.pop %v2143
  %v2145 = vmul.f32 %v2141, 1.442695
  %v2146 = vpow.pop %v2145
  %v2147 = vmul.f32 %v2142, 1.442695
  %v2148 = vpow.pop %v2147
  %v2149 = vadd.f32 %v2144, 1.0
  %v2150 = vadd.f32 %v2146, 1.0
  %v2151 = vadd.f32 %v2148, 1.0
  %v2152 = vrcp.pop %v2149
  %v2153 = vmul.f32 1.0, %v2152
  %v2154 = vrcp.pop %v2150
  %v2155 = vmul.f32 1.0, %v2154
  %v2156 = vrcp.pop %v2151
  %v2157 = vmul.f32 1.0, %v2156
  %v2158 = vtanh.pop %v2139
  %v2159 = vmul.f32 %v2155, %v1931
  %v2160 = vmul.f32 %v2153, %v2158
  %v2161 = vadd.f32 %v2159, %v2160
  %v2162 = vtanh.pop %v2161
  %v2163 = vmul.f32 %v2157, %v2162
  %v2164 = vpack.c.bf16 %v2131, %v2131
  %2165 = vmatprep.subr.bf16.mxu0 %v774
  %2166 = vmatpush1.bf16.msra.mxu0 %v773
  %2167 = vmatprep.subr.bf16.mxu0 %v778
  %2168 = vmatpush1.bf16.msra.mxu0 %v777
  %2169 = vmatprep.subr.bf16.mxu0 %v782
  %2170 = vmatpush1.bf16.msra.mxu0 %v781
  %2171 = vmatprep.subr.bf16.mxu0 %v786
  %2172 = vmatpush1.bf16.msra.mxu0 %v785
  %2173 = vmatprep.subr.bf16.mxu0 %v790
  %2174 = vmatpush1.bf16.msra.mxu0 %v789
  %2175 = vmatprep.subr.bf16.mxu0 %v794
  %2176 = vmatpush1.bf16.msra.mxu0 %v793
  %2177 = vmatprep.subr.bf16.mxu0 %v798
  %2178 = vmatpush1.bf16.msra.mxu0 %v797
  %2179 = vmatprep.subr.bf16.mxu0 %v802
  %2180 = vmatpush1.bf16.msra.mxu0 %v801
  %2181 = vmatprep.subr.bf16.mxu0 0
  %2182 = vmatpush1.bf16.msra.mxu0 0
  %2183 = vmatprep.subr.bf16.mxu0 0
  %2184 = vmatpush1.bf16.msra.mxu0 0
  %2185 = vmatprep.subr.bf16.mxu0 0
  %2186 = vmatpush1.bf16.msra.mxu0 0
  %2187 = vmatprep.subr.bf16.mxu0 0
  %2188 = vmatpush1.bf16.msra.mxu0 0
  %2189 = vmatprep.subr.bf16.mxu0 0
  %2190 = vmatpush1.bf16.msra.mxu0 0
  %2191 = vmatprep.subr.bf16.mxu0 0
  %2192 = vmatpush1.bf16.msra.mxu0 0
  %2193 = vmatprep.subr.bf16.mxu0 0
  %2194 = vmatpush1.bf16.msra.mxu0 0
  %2195 = vmatprep.subr.bf16.mxu0 0
  %2196 = vmatpush1.bf16.msra.mxu0 0
  %2197 = vmatprep.mubr.bf16.mxu0 0
  %2198 = vmatmul.mubr.bf16.gmra.mrb[0].mxu0 %v2164
  %v2199 = vpop.f32.mrb[0].mxu0
  %v2200 = vadd.f32 0.0, %v2199
  %v2201 = vpop.f32.mrb[0].mxu0
  %v2202 = vadd.f32 0.0, %v2201
  %v2203 = vpop.f32.mrb[0].mxu0
  %v2204 = vpop.f32.mrb[0].mxu0
  %2205 = vdwg.mxu0
  %2206 = vmatprep.subr.bf16.mxu0 %v776
  %2207 = vmatpush1.bf16.msra.mxu0 %v775
  %2208 = vmatprep.subr.bf16.mxu0 %v780
  %2209 = vmatpush1.bf16.msra.mxu0 %v779
  %2210 = vmatprep.subr.bf16.mxu0 %v784
  %2211 = vmatpush1.bf16.msra.mxu0 %v783
  %2212 = vmatprep.subr.bf16.mxu0 %v788
  %2213 = vmatpush1.bf16.msra.mxu0 %v787
  %2214 = vmatprep.subr.bf16.mxu0 %v792
  %2215 = vmatpush1.bf16.msra.mxu0 %v791
  %2216 = vmatprep.subr.bf16.mxu0 %v796
  %2217 = vmatpush1.bf16.msra.mxu0 %v795
  %2218 = vmatprep.subr.bf16.mxu0 %v800
  %2219 = vmatpush1.bf16.msra.mxu0 %v799
  %2220 = vmatprep.subr.bf16.mxu0 %v804
  %2221 = vmatpush1.bf16.msra.mxu0 %v803
  %2222 = vmatprep.subr.bf16.mxu0 0
  %2223 = vmatpush1.bf16.msra.mxu0 0
  %2224 = vmatprep.subr.bf16.mxu0 0
  %2225 = vmatpush1.bf16.msra.mxu0 0
  %2226 = vmatprep.subr.bf16.mxu0 0
  %2227 = vmatpush1.bf16.msra.mxu0 0
  %2228 = vmatprep.subr.bf16.mxu0 0
  %2229 = vmatpush1.bf16.msra.mxu0 0
  %2230 = vmatprep.subr.bf16.mxu0 0
  %2231 = vmatpush1.bf16.msra.mxu0 0
  %2232 = vmatprep.subr.bf16.mxu0 0
  %2233 = vmatpush1.bf16.msra.mxu0 0
  %2234 = vmatprep.subr.bf16.mxu0 0
  %2235 = vmatpush1.bf16.msra.mxu0 0
  %2236 = vmatprep.subr.bf16.mxu0 0
  %2237 = vmatpush1.bf16.msra.mxu0 0
  %2238 = vmatprep.mubr.bf16.mxu0 0
  %2239 = vmatmul.mubr.bf16.gmra.mrb[0].mxu0 %v2164
  %v2240 = vpop.f32.mrb[0].mxu0
  %v2241 = vadd.f32 0.0, %v2240
  %v2242 = vpop.f32.mrb[0].mxu0
  %v2243 = vadd.f32 0.0, %v2242
  %v2244 = vpop.f32.mrb[0].mxu0
  %v2245 = vpop.f32.mrb[0].mxu0
  %2246 = vdwg.mxu0
  %v2247 = vpack.c.bf16 %v2163, %v2163
  %2248 = vmatprep.subr.bf16.mxu0 %v1017
  %2249 = vmatpush1.bf16.msra.mxu0 %v1016
  %2250 = vmatprep.subr.bf16.mxu0 %v1021
  %2251 = vmatpush1.bf16.msra.mxu0 %v1020
  %2252 = vmatprep.subr.bf16.mxu0 %v1025
  %2253 = vmatpush1.bf16.msra.mxu0 %v1024
  %2254 = vmatprep.subr.bf16.mxu0 %v1029
  %2255 = vmatpush1.bf16.msra.mxu0 %v1028
  %2256 = vmatprep.subr.bf16.mxu0 %v1033
  %2257 = vmatpush1.bf16.msra.mxu0 %v1032
  %2258 = vmatprep.subr.bf16.mxu0 %v1037
  %2259 = vmatpush1.bf16.msra.mxu0 %v1036
  %2260 = vmatprep.subr.bf16.mxu0 %v1041
  %2261 = vmatpush1.bf16.msra.mxu0 %v1040
  %2262 = vmatprep.subr.bf16.mxu0 %v1045
  %2263 = vmatpush1.bf16.msra.mxu0 %v1044
  %2264 = vmatprep.subr.bf16.mxu0 0
  %2265 = vmatpush1.bf16.msra.mxu0 0
  %2266 = vmatprep.subr.bf16.mxu0 0
  %2267 = vmatpush1.bf16.msra.mxu0 0
  %2268 = vmatprep.subr.bf16.mxu0 0
  %2269 = vmatpush1.bf16.msra.mxu0 0
  %2270 = vmatprep.subr.bf16.mxu0 0
  %2271 = vmatpush1.bf16.msra.mxu0 0
  %2272 = vmatprep.subr.bf16.mxu0 0
  %2273 = vmatpush1.bf16.msra.mxu0 0
  %2274 = vmatprep.subr.bf16.mxu0 0
  %2275 = vmatpush1.bf16.msra.mxu0 0
  %2276 = vmatprep.subr.bf16.mxu0 0
  %2277 = vmatpush1.bf16.msra.mxu0 0
  %2278 = vmatprep.subr.bf16.mxu0 0
  %2279 = vmatpush1.bf16.msra.mxu0 0
  %2280 = vmatprep.mubr.bf16.mxu0 0
  %2281 = vmatmul.mubr.bf16.gmra.mrb[0].mxu0 %v2247
  %v2282 = vpop.f32.mrb[0].mxu0
  %v2283 = vadd.f32 0.0, %v2282
  %v2284 = vpop.f32.mrb[0].mxu0
  %v2285 = vadd.f32 0.0, %v2284
  %v2286 = vpop.f32.mrb[0].mxu0
  %v2287 = vpop.f32.mrb[0].mxu0
  %2288 = vdwg.mxu0
  %2289 = vmatprep.subr.bf16.mxu0 %v1019
  %2290 = vmatpush1.bf16.msra.mxu0 %v1018
  %2291 = vmatprep.subr.bf16.mxu0 %v1023
  %2292 = vmatpush1.bf16.msra.mxu0 %v1022
  %2293 = vmatprep.subr.bf16.mxu0 %v1027
  %2294 = vmatpush1.bf16.msra.mxu0 %v1026
  %2295 = vmatprep.subr.bf16.mxu0 %v1031
  %2296 = vmatpush1.bf16.msra.mxu0 %v1030
  %2297 = vmatprep.subr.bf16.mxu0 %v1035
  %2298 = vmatpush1.bf16.msra.mxu0 %v1034
  %2299 = vmatprep.subr.bf16.mxu0 %v1039
  %2300 = vmatpush1.bf16.msra.mxu0 %v1038
  %2301 = vmatprep.subr.bf16.mxu0 %v1043
  %2302 = vmatpush1.bf16.msra.mxu0 %v1042
  %2303 = vmatprep.subr.bf16.mxu0 %v1047
  %2304 = vmatpush1.bf16.msra.mxu0 %v1046
  %2305 = vmatprep.subr.bf16.mxu0 0
  %2306 = vmatpush1.bf16.msra.mxu0 0
  %2307 = vmatprep.subr.bf16.mxu0 0
  %2308 = vmatpush1.bf16.msra.mxu0 0
  %2309 = vmatprep.subr.bf16.mxu0 0
  %2310 = vmatpush1.bf16.msra.mxu0 0
  %2311 = vmatprep.subr.bf16.mxu0 0
  %2312 = vmatpush1.bf16.msra.mxu0 0
  %2313 = vmatprep.subr.bf16.mxu0 0
  %2314 = vmatpush1.bf16.msra.mxu0 0
  %2315 = vmatprep.subr.bf16.mxu0 0
  %2316 = vmatpush1.bf16.msra.mxu0 0
  %2317 = vmatprep.subr.bf16.mxu0 0
  %2318 = vmatpush1.bf16.msra.mxu0 0
  %2319 = vmatprep.subr.bf16.mxu0 0
  %2320 = vmatpush1.bf16.msra.mxu0 0
  %2321 = vmatprep.mubr.bf16.mxu0 0
  %2322 = vmatmul.mubr.bf16.gmra.mrb[0].mxu0 %v2247
  %v2323 = vpop.f32.mrb[0].mxu0
  %v2324 = vadd.f32 0.0, %v2323
  %v2325 = vpop.f32.mrb[0].mxu0
  %v2326 = vadd.f32 0.0, %v2325
  %v2327 = vpop.f32.mrb[0].mxu0
  %v2328 = vpop.f32.mrb[0].mxu0
  %2329 = vdwg.mxu0
  %v2330 = vld [vmem:[%s1199] sm:$0xff]
  %v2331 = vld [vmem:[%s1199 + $0x8] sm:$0xff]
  %v2332 = vld [vmem:[%s1199 + $0x10] sm:$0xff]
  %v2333 = vld [vmem:[%s1199 + $0x18] sm:$0xff]
  %v2334 = vadd.f32 %v2330, %v2200
  %v2335 = vadd.f32 %v2331, %v2202
  %v2336 = vadd.f32 %v2332, %v2241
  %v2337 = vadd.f32 %v2333, %v2243
  %v2338 = vxor.u32 %v2334, 2147483648
  %v2339 = vxor.u32 %v2335, 2147483648
  %v2340 = vxor.u32 %v2336, 2147483648
  %v2341 = vmul.f32 %v2338, 1.442695
  %v2342 = vpow.pop %v2341
  %v2343 = vmul.f32 %v2339, 1.442695
  %v2344 = vpow.pop %v2343
  %v2345 = vmul.f32 %v2340, 1.442695
  %v2346 = vpow.pop %v2345
  %v2347 = vadd.f32 %v2342, 1.0
  %v2348 = vadd.f32 %v2344, 1.0
  %v2349 = vadd.f32 %v2346, 1.0
  %v2350 = vrcp.pop %v2347
  %v2351 = vmul.f32 1.0, %v2350
  %v2352 = vrcp.pop %v2348
  %v2353 = vmul.f32 1.0, %v2352
  %v2354 = vrcp.pop %v2349
  %v2355 = vmul.f32 1.0, %v2354
  %v2356 = vtanh.pop %v2337
  %v2357 = vmul.f32 %v2353, %v2129
  %v2358 = vmul.f32 %v2351, %v2356
  %v2359 = vadd.f32 %v2357, %v2358
  %v2360 = vtanh.pop %v2359
  %v2361 = vmul.f32 %v2355, %v2360
  %v2362 = vld [vmem:[%s1164 + $0x20] sm:$0xff]
  %v2363 = vld [vmem:[%s1164 + $0x28] sm:$0xff]
  %v2364 = vld [vmem:[%s1164 + $0x30] sm:$0xff]
  %v2365 = vld [vmem:[%s1164 + $0x38] sm:$0xff]
  %v2366 = vadd.f32 %v2362, %v2283
  %v2367 = vadd.f32 %v2363, %v2285
  %v2368 = vadd.f32 %v2364, %v2324
  %v2369 = vadd.f32 %v2365, %v2326
  %v2370 = vxor.u32 %v2366, 2147483648
  %v2371 = vxor.u32 %v2367, 2147483648
  %v2372 = vxor.u32 %v2368, 2147483648
  %v2373 = vmul.f32 %v2370, 1.442695
  %v2374 = vpow.pop %v2373
  %v2375 = vmul.f32 %v2371, 1.442695
  %v2376 = vpow.pop %v2375
  %v2377 = vmul.f32 %v2372, 1.442695
  %v2378 = vpow.pop %v2377
  %v2379 = vadd.f32 %v2374, 1.0
  %v2380 = vadd.f32 %v2376, 1.0
  %v2381 = vadd.f32 %v2378, 1.0
  %v2382 = vrcp.pop %v2379
  %v2383 = vmul.f32 1.0, %v2382
  %v2384 = vrcp.pop %v2380
  %v2385 = vmul.f32 1.0, %v2384
  %v2386 = vrcp.pop %v2381
  %v2387 = vmul.f32 1.0, %v2386
  %v2388 = vtanh.pop %v2369
  %v2389 = vmul.f32 %v2385, %v2161
  %v2390 = vmul.f32 %v2383, %v2388
  %v2391 = vadd.f32 %v2389, %v2390
  %v2392 = vtanh.pop %v2391
  %v2393 = vmul.f32 %v2387, %v2392
  %v2394 = vpack.c.bf16 %v2361, %v2361
  %2395 = vmatprep.subr.bf16.mxu0 %v774
  %2396 = vmatpush1.bf16.msra.mxu0 %v773
  %2397 = vmatprep.subr.bf16.mxu0 %v778
  %2398 = vmatpush1.bf16.msra.mxu0 %v777
  %2399 = vmatprep.subr.bf16.mxu0 %v782
  %2400 = vmatpush1.bf16.msra.mxu0 %v781
  %2401 = vmatprep.subr.bf16.mxu0 %v786
  %2402 = vmatpush1.bf16.msra.mxu0 %v785
  %2403 = vmatprep.subr.bf16.mxu0 %v790
  %2404 = vmatpush1.bf16.msra.mxu0 %v789
  %2405 = vmatprep.subr.bf16.mxu0 %v794
  %2406 = vmatpush1.bf16.msra.mxu0 %v793
  %2407 = vmatprep.subr.bf16.mxu0 %v798
  %2408 = vmatpush1.bf16.msra.mxu0 %v797
  %2409 = vmatprep.subr.bf16.mxu0 %v802
  %2410 = vmatpush1.bf16.msra.mxu0 %v801
  %2411 = vmatprep.subr.bf16.mxu0 0
  %2412 = vmatpush1.bf16.msra.mxu0 0
  %2413 = vmatprep.subr.bf16.mxu0 0
  %2414 = vmatpush1.bf16.msra.mxu0 0
  %2415 = vmatprep.subr.bf16.mxu0 0
  %2416 = vmatpush1.bf16.msra.mxu0 0
  %2417 = vmatprep.subr.bf16.mxu0 0
  %2418 = vmatpush1.bf16.msra.mxu0 0
  %2419 = vmatprep.subr.bf16.mxu0 0
  %2420 = vmatpush1.bf16.msra.mxu0 0
  %2421 = vmatprep.subr.bf16.mxu0 0
  %2422 = vmatpush1.bf16.msra.mxu0 0
  %2423 = vmatprep.subr.bf16.mxu0 0
  %2424 = vmatpush1.bf16.msra.mxu0 0
  %2425 = vmatprep.subr.bf16.mxu0 0
  %2426 = vmatpush1.bf16.msra.mxu0 0
  %2427 = vmatprep.mubr.bf16.mxu0 0
  %2428 = vmatmul.mubr.bf16.gmra.mrb[0].mxu0 %v2394
  %v2429 = vpop.f32.mrb[0].mxu0
  %v2430 = vadd.f32 0.0, %v2429
  %v2431 = vpop.f32.mrb[0].mxu0
  %v2432 = vadd.f32 0.0, %v2431
  %v2433 = vpop.f32.mrb[0].mxu0
  %v2434 = vpop.f32.mrb[0].mxu0
  %2435 = vdwg.mxu0
  %2436 = vmatprep.subr.bf16.mxu0 %v776
  %2437 = vmatpush1.bf16.msra.mxu0 %v775
  %2438 = vmatprep.subr.bf16.mxu0 %v780
  %2439 = vmatpush1.bf16.msra.mxu0 %v779
  %2440 = vmatprep.subr.bf16.mxu0 %v784
  %2441 = vmatpush1.bf16.msra.mxu0 %v783
  %2442 = vmatprep.subr.bf16.mxu0 %v788
  %2443 = vmatpush1.bf16.msra.mxu0 %v787
  %2444 = vmatprep.subr.bf16.mxu0 %v792
  %2445 = vmatpush1.bf16.msra.mxu0 %v791
  %2446 = vmatprep.subr.bf16.mxu0 %v796
  %2447 = vmatpush1.bf16.msra.mxu0 %v795
  %2448 = vmatprep.subr.bf16.mxu0 %v800
  %2449 = vmatpush1.bf16.msra.mxu0 %v799
  %2450 = vmatprep.subr.bf16.mxu0 %v804
  %2451 = vmatpush1.bf16.msra.mxu0 %v803
  %2452 = vmatprep.subr.bf16.mxu0 0
  %2453 = vmatpush1.bf16.msra.mxu0 0
  %2454 = vmatprep.subr.bf16.mxu0 0
  %2455 = vmatpush1.bf16.msra.mxu0 0
  %2456 = vmatprep.subr.bf16.mxu0 0
  %2457 = vmatpush1.bf16.msra.mxu0 0
  %2458 = vmatprep.subr.bf16.mxu0 0
  %2459 = vmatpush1.bf16.msra.mxu0 0
  %2460 = vmatprep.subr.bf16.mxu0 0
  %2461 = vmatpush1.bf16.msra.mxu0 0
  %2462 = vmatprep.subr.bf16.mxu0 0
  %2463 = vmatpush1.bf16.msra.mxu0 0
  %2464 = vmatprep.subr.bf16.mxu0 0
  %2465 = vmatpush1.bf16.msra.mxu0 0
  %2466 = vmatprep.subr.bf16.mxu0 0
  %2467 = vmatpush1.bf16.msra.mxu0 0
  %2468 = vmatprep.mubr.bf16.mxu0 0
  %2469 = vmatmul.mubr.bf16.gmra.mrb[0].mxu0 %v2394
  %v2470 = vpop.f32.mrb[0].mxu0
  %v2471 = vadd.f32 0.0, %v2470
  %v2472 = vpop.f32.mrb[0].mxu0
  %v2473 = vadd.f32 0.0, %v2472
  %v2474 = vpop.f32.mrb[0].mxu0
  %v2475 = vpop.f32.mrb[0].mxu0
  %2476 = vdwg.mxu0
  %v2477 = vpack.c.bf16 %v2393, %v2393
  %2478 = vmatprep.subr.bf16.mxu0 %v1017
  %2479 = vmatpush1.bf16.msra.mxu0 %v1016
  %2480 = vmatprep.subr.bf16.mxu0 %v1021
  %2481 = vmatpush1.bf16.msra.mxu0 %v1020
  %2482 = vmatprep.subr.bf16.mxu0 %v1025
  %2483 = vmatpush1.bf16.msra.mxu0 %v1024
  %2484 = vmatprep.subr.bf16.mxu0 %v1029
  %2485 = vmatpush1.bf16.msra.mxu0 %v1028
  %2486 = vmatprep.subr.bf16.mxu0 %v1033
  %2487 = vmatpush1.bf16.msra.mxu0 %v1032
  %2488 = vmatprep.subr.bf16.mxu0 %v1037
  %2489 = vmatpush1.bf16.msra.mxu0 %v1036
  %2490 = vmatprep.subr.bf16.mxu0 %v1041
  %2491 = vmatpush1.bf16.msra.mxu0 %v1040
  %2492 = vmatprep.subr.bf16.mxu0 %v1045
  %2493 = vmatpush1.bf16.msra.mxu0 %v1044
  %2494 = vmatprep.subr.bf16.mxu0 0
  %2495 = vmatpush1.bf16.msra.mxu0 0
  %2496 = vmatprep.subr.bf16.mxu0 0
  %2497 = vmatpush1.bf16.msra.mxu0 0
  %2498 = vmatprep.subr.bf16.mxu0 0
  %2499 = vmatpush1.bf16.msra.mxu0 0
  %2500 = vmatprep.subr.bf16.mxu0 0
  %2501 = vmatpush1.bf16.msra.mxu0 0
  %2502 = vmatprep.subr.bf16.mxu0 0
  %2503 = vmatpush1.bf16.msra.mxu0 0
  %2504 = vmatprep.subr.bf16.mxu0 0
  %2505 = vmatpush1.bf16.msra.mxu0 0
  %2506 = vmatprep.subr.bf16.mxu0 0
  %2507 = vmatpush1.bf16.msra.mxu0 0
  %2508 = vmatprep.subr.bf16.mxu0 0
  %2509 = vmatpush1.bf16.msra.mxu0 0
  %2510 = vmatprep.mubr.bf16.mxu0 0
  %2511 = vmatmul.mubr.bf16.gmra.mrb[0].mxu0 %v2477
  %v2512 = vpop.f32.mrb[0].mxu0
  %v2513 = vadd.f32 0.0, %v2512
  %v2514 = vpop.f32.mrb[0].mxu0
  %v2515 = vadd.f32 0.0, %v2514
  %v2516 = vpop.f32.mrb[0].mxu0
  %v2517 = vpop.f32.mrb[0].mxu0
  %2518 = vdwg.mxu0
  %2519 = vmatprep.subr.bf16.mxu0 %v1019
  %2520 = vmatpush1.bf16.msra.mxu0 %v1018
  %2521 = vmatprep.subr.bf16.mxu0 %v1023
  %2522 = vmatpush1.bf16.msra.mxu0 %v1022
  %2523 = vmatprep.subr.bf16.mxu0 %v1027
  %2524 = vmatpush1.bf16.msra.mxu0 %v1026
  %2525 = vmatprep.subr.bf16.mxu0 %v1031
  %2526 = vmatpush1.bf16.msra.mxu0 %v1030
  %2527 = vmatprep.subr.bf16.mxu0 %v1035
  %2528 = vmatpush1.bf16.msra.mxu0 %v1034
  %2529 = vmatprep.subr.bf16.mxu0 %v1039
  %2530 = vmatpush1.bf16.msra.mxu0 %v1038
  %2531 = vmatprep.subr.bf16.mxu0 %v1043
  %2532 = vmatpush1.bf16.msra.mxu0 %v1042
  %2533 = vmatprep.subr.bf16.mxu0 %v1047
  %2534 = vmatpush1.bf16.msra.mxu0 %v1046
  %2535 = vmatprep.subr.bf16.mxu0 0
  %2536 = vmatpush1.bf16.msra.mxu0 0
  %2537 = vmatprep.subr.bf16.mxu0 0
  %2538 = vmatpush1.bf16.msra.mxu0 0
  %2539 = vmatprep.subr.bf16.mxu0 0
  %2540 = vmatpush1.bf16.msra.mxu0 0
  %2541 = vmatprep.subr.bf16.mxu0 0
  %2542 = vmatpush1.bf16.msra.mxu0 0
  %2543 = vmatprep.subr.bf16.mxu0 0
  %2544 = vmatpush1.bf16.msra.mxu0 0
  %2545 = vmatprep.subr.bf16.mxu0 0
  %2546 = vmatpush1.bf16.msra.mxu0 0
  %2547 = vmatprep.subr.bf16.mxu0 0
  %2548 = vmatpush1.bf16.msra.mxu0 0
  %2549 = vmatprep.subr.bf16.mxu0 0
  %2550 = vmatpush1.bf16.msra.mxu0 0
  %2551 = vmatprep.mubr.bf16.mxu0 0
  %2552 = vmatmul.mubr.bf16.gmra.mrb[0].mxu0 %v2477
  %v2553 = vpop.f32.mrb[0].mxu0
  %v2554 = vadd.f32 0.0, %v2553
  %v2555 = vpop.f32.mrb[0].mxu0
  %v2556 = vadd.f32 0.0, %v2555
  %v2557 = vpop.f32.mrb[0].mxu0
  %v2558 = vpop.f32.mrb[0].mxu0
  %2559 = vdwg.mxu0
  %s2560 = smul.u32 7, 8
  %s2561 = smul.addr %s2560, 8
  %s2562 = scalar_lea.vmem [#allocation2], %s2561
  %v2563 = vld [vmem:[%s2562] sm:$0xff]
  %v2564 = vld [vmem:[%s2562 + $0x8] sm:$0xff]
  %v2565 = vld [vmem:[%s2562 + $0x10] sm:$0xff]
  %v2566 = vld [vmem:[%s2562 + $0x18] sm:$0xff]
  %v2567 = vadd.f32 %v2563, %v2430
  %v2568 = vadd.f32 %v2564, %v2432
  %v2569 = vadd.f32 %v2565, %v2471
  %v2570 = vadd.f32 %v2566, %v2473
  %v2571 = vxor.u32 %v2567, 2147483648
  %v2572 = vxor.u32 %v2568, 2147483648
  %v2573 = vxor.u32 %v2569, 2147483648
  %v2574 = vmul.f32 %v2571, 1.442695
  %v2575 = vpow.pop %v2574
  %v2576 = vmul.f32 %v2572, 1.442695
  %v2577 = vpow.pop %v2576
  %v2578 = vmul.f32 %v2573, 1.442695
  %v2579 = vpow.pop %v2578
  %v2580 = vadd.f32 %v2575, 1.0
  %v2581 = vadd.f32 %v2577, 1.0
  %v2582 = vadd.f32 %v2579, 1.0
  %v2583 = vrcp.pop %v2580
  %v2584 = vmul.f32 1.0, %v2583
  %v2585 = vrcp.pop %v2581
  %v2586 = vmul.f32 1.0, %v2585
  %v2587 = vrcp.pop %v2582
  %v2588 = vmul.f32 1.0, %v2587
  %v2589 = vtanh.pop %v2570
  %v2590 = vmul.f32 %v2586, %v2359
  %v2591 = vmul.f32 %v2584, %v2589
  %v2592 = vadd.f32 %v2590, %v2591
  %v2593 = vtanh.pop %v2592
  %v2594 = vmul.f32 %v2588, %v2593
  %s2595 = smul.u32 0, 8
  %s2596 = smul.addr %s2595, 8
  %s2597 = scalar_lea.vmem [#allocation2], %s2596
  %v2598 = vld [vmem:[%s2597 + $0x20] sm:$0xff]
  %v2599 = vld [vmem:[%s2597 + $0x28] sm:$0xff]
  %v2600 = vld [vmem:[%s2597 + $0x30] sm:$0xff]
  %v2601 = vld [vmem:[%s2597 + $0x38] sm:$0xff]
  %v2602 = vadd.f32 %v2598, %v2513
  %v2603 = vadd.f32 %v2599, %v2515
  %v2604 = vadd.f32 %v2600, %v2554
  %v2605 = vadd.f32 %v2601, %v2556
  %v2606 = vxor.u32 %v2602, 2147483648
  %v2607 = vxor.u32 %v2603, 2147483648
  %v2608 = vxor.u32 %v2604, 2147483648
  %v2609 = vmul.f32 %v2606, 1.442695
  %v2610 = vpow.pop %v2609
  %v2611 = vmul.f32 %v2607, 1.442695
  %v2612 = vpow.pop %v2611
  %v2613 = vmul.f32 %v2608, 1.442695
  %v2614 = vpow.pop %v2613
  %v2615 = vadd.f32 %v2610, 1.0
  %v2616 = vadd.f32 %v2612, 1.0
  %v2617 = vadd.f32 %v2614, 1.0
  %v2618 = vrcp.pop %v2615
  %v2619 = vmul.f32 1.0, %v2618
  %v2620 = vrcp.pop %v2616
  %v2621 = vmul.f32 1.0, %v2620
  %v2622 = vrcp.pop %v2617
  %v2623 = vmul.f32 1.0, %v2622
  %v2624 = vtanh.pop %v2605
  %v2625 = vmul.f32 %v2621, %v2391
  %v2626 = vmul.f32 %v2619, %v2624
  %v2627 = vadd.f32 %v2625, %v2626
  %v2628 = vtanh.pop %v2627
  %v2629 = vmul.f32 %v2623, %v2628
  %2630 = vst [vmem:[%s5] sm:$0xff] %v2594
  %2631 = vst [vmem:[%s5 + $0x8] sm:$0xff] %v2629
  // Predicated region
  $region22: #{feature_extractor.1} parent=0 // pred_check
    _
  $region23: #{feature_extractor.1} parent=0 // pred_check_branch
    %2633 = sbr.rel (0) target = $region25
  $region24: #{feature_extractor.1} parent=0 // pred_region
    _
  $region25: #{feature_extractor.1} parent=0 // pred_fallthru
    _
  // Predicated region
  $region26: #{feature_extractor.1} parent=0 // pred_check
    _
  $region27: #{feature_extractor.1} parent=0 // pred_check_branch
    %2635 = sbr.rel (0) target = $region29
  $region28: #{feature_extractor.1} parent=0 // pred_region
    _
  $region29: #{feature_extractor.1} parent=0 // pred_fallthru
    _

</llo_original>
